<compile_context>
chip_gen: v6e
topology: v6e:2x2x1
jax: 0.10.0
libtpu: 0.0.40
codegen_flags: <defaults>
</compile_context>

<pallas_src>
import functools

import jax
import jax.numpy as jnp
from jax.experimental import pallas as pl
from jax.experimental.pallas import tpu as pltpu

_VMEM_LIMIT = 32 * 1024 * 1024


def _compiler_params():
    return pltpu.CompilerParams(dimension_semantics=("parallel",),
                                vmem_limit_bytes=_VMEM_LIMIT)


# ----------------------------------------------------------------------------
# Pallas kernels
# ----------------------------------------------------------------------------
def _conv_taps_kernel(x_ref, w_ref, b_ref, o_ref, *, taps, relu):
    """Tap-reduction conv on spatially-flattened rows.

    x_ref: (1, rows_in, Ci)  bf16, spatially pre-padded (+ s2d for stride-2)
    w_ref: (KT, Ci, Co)      bf16 tap-stacked weights
    b_ref: (1, Co)           f32
    o_ref: (1, rows_out, Co) "wide" rows (Ho * padded_W); the wrapper trims
                             the (kw-1) garbage columns per output row.
    """
    rows_out = o_ref.shape[1]
    acc = jnp.dot(x_ref[0, pl.ds(taps[0], rows_out), :], w_ref[0],
                  preferred_element_type=jnp.float32)
    for t in range(1, len(taps)):
        acc = acc + jnp.dot(x_ref[0, pl.ds(taps[t], rows_out), :], w_ref[t],
                            preferred_element_type=jnp.float32)
    acc = acc + b_ref[...]
    if relu:
        acc = jnp.maximum(acc, 0.0)
    o_ref[0] = acc.astype(o_ref.dtype)


def _rpn_fused_kernel(x_ref, w_ref, b_ref, hw_ref, hb_ref, o_ref, *, taps):
    """3x3 stride-1 conv + ReLU fused with the 1x1 [objectness|bbox] head."""
    rows_out = o_ref.shape[1]
    acc = jnp.dot(x_ref[0, pl.ds(taps[0], rows_out), :], w_ref[0],
                  preferred_element_type=jnp.float32)
    for t in range(1, len(taps)):
        acc = acc + jnp.dot(x_ref[0, pl.ds(taps[t], rows_out), :], w_ref[t],
                            preferred_element_type=jnp.float32)
    t_act = jnp.maximum(acc + b_ref[...], 0.0).astype(jnp.bfloat16)
    o_ref[0] = (jnp.dot(t_act, hw_ref[...], preferred_element_type=jnp.float32)
                + hb_ref[...]).astype(o_ref.dtype)


def _det_head_kernel(x_ref, w1_ref, b1_ref, w2_ref, b2_ref, w3_ref, b3_ref, o_ref):
    """Fused detector box head: relu(relu(x@w1+b1)@w2+b2)@w3+b3, all in VMEM."""
    h = jnp.dot(x_ref[...], w1_ref[...], preferred_element_type=jnp.float32) + b1_ref[...]
    h = jnp.maximum(h, 0.0).astype(jnp.bfloat16)
    h = jnp.dot(h, w2_ref[...], preferred_element_type=jnp.float32) + b2_ref[...]
    h = jnp.maximum(h, 0.0).astype(jnp.bfloat16)
    o_ref[...] = (jnp.dot(h, w3_ref[...], preferred_element_type=jnp.float32)
                  + b3_ref[...]).astype(o_ref.dtype)


# ----------------------------------------------------------------------------
# Kernel wrappers
# ----------------------------------------------------------------------------
def pallas_conv3x3_s2(x_nhwc, w_taps, b, *, relu=True):
    """3x3 / stride-2 / pad-1 conv, bf16 NHWC output (N, H//2, W//2, Cout).

    Space-to-depth turns it into a stride-1, 2x2-tap conv whose taps are
    contiguous row windows of the flattened (spatial, 4*Cin) tensor.
    """
    N, H, W, C = x_nhwc.shape
    assert H % 2 == 0 and W % 2 == 0
    Ho, Wo = H // 2, W // 2
    # pad: 1 left/top (the conv pad); extra zero rows at the bottom so every
    # tap reads a full rows_out-long window without going out of bounds.
    xp = jnp.pad(x_nhwc, ((0, 0), (1, 3), (1, 1), (0, 0)))
    Hs, Ws = (H + 4) // 2, (W + 2) // 2                    # Ho + 2, Wo + 1
    xs = (xp.reshape(N, Hs, 2, Ws, 2, C)
            .transpose(0, 1, 3, 2, 4, 5)
            .reshape(N, Hs * Ws, 4 * C)
            .astype(jnp.bfloat16))
    taps = (0, 1, Ws, Ws + 1)                              # (i_off, j_off) in {0,1}^2
    rows_out = Ho * Ws
    Co = w_taps.shape[-1]
    # TODO(synk): for large images, additionally tile the output rows (manual
    # DMA of overlapping row windows); here one image per grid step fits VMEM.
    out = pl.pallas_call(
        functools.partial(_conv_taps_kernel, taps=taps, relu=relu),
        out_shape=jax.ShapeDtypeStruct((N, rows_out, Co), jnp.bfloat16),
        grid=(N,),
        in_specs=[
            pl.BlockSpec((1, Hs * Ws, 4 * C), lambda n: (n, 0, 0)),
            pl.BlockSpec((4, 4 * C, Co), lambda n: (0, 0, 0)),
            pl.BlockSpec((1, Co), lambda n: (0, 0)),
        ],
        out_specs=pl.BlockSpec((1, rows_out, Co), lambda n: (n, 0, 0)),
        compiler_params=_compiler_params(),
    )(xs, w_taps, b)
    # trim the single garbage column per output row; this tiny slice fuses
    # with the next layer's pad/s2d in XLA.
    return out.reshape(N, Ho, Ws, Co)[:, :, :Wo, :]


def pallas_rpn_head(feat_nhwc, w_taps, b, head_w, head_b):
    """Fused RPN: 3x3/s1/p1 conv + ReLU + 1x1 [cls(A) | bbox(4A)] head."""
    N, H, W, C = feat_nhwc.shape
    xp = jnp.pad(feat_nhwc, ((0, 0), (1, 2), (1, 1), (0, 0))).astype(jnp.bfloat16)
    Hp, Wp = H + 3, W + 2
    x = xp.reshape(N, Hp * Wp, C)
    taps = tuple(di * Wp + dj for di in range(3) for dj in range(3))
    rows_out = H * Wp
    NH = head_w.shape[-1]
    out = pl.pallas_call(
        functools.partial(_rpn_fused_kernel, taps=taps),
        out_shape=jax.ShapeDtypeStruct((N, rows_out, NH), jnp.float32),
        grid=(N,),
        in_specs=[
            pl.BlockSpec((1, Hp * Wp, C), lambda n: (n, 0, 0)),
            pl.BlockSpec((9, C, C), lambda n: (0, 0, 0)),
            pl.BlockSpec((1, C), lambda n: (0, 0)),
            pl.BlockSpec((C, NH), lambda n: (0, 0)),
            pl.BlockSpec((1, NH), lambda n: (0, 0)),
        ],
        out_specs=pl.BlockSpec((1, rows_out, NH), lambda n: (n, 0, 0)),
        compiler_params=_compiler_params(),
    )(x, w_taps, b, head_w, head_b)
    return out.reshape(N, H, Wp, NH)[:, :, :W, :]


def pallas_det_head(x, w1, b1, w2, b2, w3, b3):
    """Fused detector box head; 8-row tiles give >=2 parallel grid steps."""
    R, K = x.shape
    F = w1.shape[1]
    NH = w3.shape[1]
    tile_r = 8 if R % 8 == 0 else R
    return pl.pallas_call(
        _det_head_kernel,
        out_shape=jax.ShapeDtypeStruct((R, NH), jnp.float32),
        grid=(R // tile_r,),
        in_specs=[
            pl.BlockSpec((tile_r, K), lambda i: (i, 0)),
            pl.BlockSpec((K, F), lambda i: (0, 0)),
            pl.BlockSpec((1, F), lambda i: (0, 0)),
            pl.BlockSpec((F, F), lambda i: (0, 0)),
            pl.BlockSpec((1, F), lambda i: (0, 0)),
            pl.BlockSpec((F, NH), lambda i: (0, 0)),
            pl.BlockSpec((1, NH), lambda i: (0, 0)),
        ],
        out_specs=pl.BlockSpec((tile_r, NH), lambda i: (i, 0)),
        compiler_params=_compiler_params(),
    )(x, w1, b1, w2, b2, w3, b3)


# ----------------------------------------------------------------------------
# Box utilities (plain-JAX glue)
# ----------------------------------------------------------------------------
def make_anchors(feat_h, feat_w, stride, sizes):
    ys = (jnp.arange(feat_h, dtype=jnp.float32) + 0.5) * stride
    xs = (jnp.arange(feat_w, dtype=jnp.float32) + 0.5) * stride
    cy, cx = jnp.meshgrid(ys, xs, indexing="ij")
    centers = jnp.stack([cx, cy], axis=-1).reshape(-1, 2)            # (HW, 2)
    per_size = []
    for s in sizes:
        half = s / 2.0
        per_size.append(jnp.concatenate([centers - half, centers + half], axis=-1))
    return jnp.stack(per_size, axis=1).reshape(-1, 4)                # (HW*A, 4)


def decode_boxes(anchors, deltas):
    wa = anchors[..., 2] - anchors[..., 0]
    ha = anchors[..., 3] - anchors[..., 1]
    cxa = anchors[..., 0] + 0.5 * wa
    cya = anchors[..., 1] + 0.5 * ha
    dx, dy, dw, dh = (deltas[..., 0], deltas[..., 1], deltas[..., 2], deltas[..., 3])
    cx = dx * wa + cxa
    cy = dy * ha + cya
    w = jnp.exp(jnp.clip(dw, -4.0, 4.0)) * wa
    h = jnp.exp(jnp.clip(dh, -4.0, 4.0)) * ha
    return jnp.stack([cx - 0.5 * w, cy - 0.5 * h, cx + 0.5 * w, cy + 0.5 * h], axis=-1)


def clip_boxes(boxes, h, w):
    x1 = jnp.clip(boxes[..., 0], 0.0, w)
    y1 = jnp.clip(boxes[..., 1], 0.0, h)
    x2 = jnp.clip(boxes[..., 2], 0.0, w)
    y2 = jnp.clip(boxes[..., 3], 0.0, h)
    return jnp.stack([x1, y1, x2, y2], axis=-1)


def roi_pool_nhwc(feat, boxes, stride, P):
    """Nearest-neighbor RoI pooling.  feat:(Hf,Wf,C) boxes:(R,4) -> (R,P,P,C)."""
    # TODO(synk): RoIAlign's bilinear gather has no rectangular-BlockSpec Pallas
    # equivalent at this size; nearest-neighbor gather is done in plain JAX.
    Hf, Wf, C = feat.shape
    x1, y1, x2, y2 = (boxes[:, i] / stride for i in range(4))
    t = (jnp.arange(P, dtype=jnp.float32) + 0.5) / P
    xs = x1[:, None] + t[None, :] * (x2 - x1)[:, None]               # (R, P)
    ys = y1[:, None] + t[None, :] * (y2 - y1)[:, None]
    xi = jnp.clip(jnp.floor(xs), 0, Wf - 1).astype(jnp.int32)
    yi = jnp.clip(jnp.floor(ys), 0, Hf - 1).astype(jnp.int32)
    return feat[yi[:, :, None], xi[:, None, :], :]                   # (R, P, P, C)


# ----------------------------------------------------------------------------
# Parameters
# ----------------------------------------------------------------------------
CFG = dict(
    in_channels=3,
    backbone_channels=(16, 32),   # two stride-2 conv stages -> total stride 4
    stride=4,
    anchor_sizes=(16.0, 32.0, 64.0),
    num_anchors=3,
    num_classes=4,                # foreground classes; +1 background (last)
    roi_size=4,
    fc_dim=64,
    pre_nms_topk=8,
    detections_per_image=5,
)


def init_params(key, cfg):
    def nrm(k, shape, std=0.05):
        return jax.random.normal(k, shape, jnp.float32) * std

    keys = jax.random.split(key, 16)
    c1, c2 = cfg["backbone_channels"]
    cin = cfg["in_channels"]
    A = cfg["num_anchors"]
    nc = cfg["num_classes"]
    P = cfg["roi_size"]
    fd = cfg["fc_dim"]
    return {
        # Backbone
        "bb_conv1_w": nrm(keys[0], (c1, cin, 3, 3)),
        "bb_conv1_b": jnp.zeros((c1,), jnp.float32),
        "bb_conv2_w": nrm(keys[1], (c2, c1, 3, 3)),
        "bb_conv2_b": jnp.zeros((c2,), jnp.float32),
        # RPN
        "rpn_conv_w": nrm(keys[2], (c2, c2, 3, 3)),
        "rpn_conv_b": jnp.zeros((c2,), jnp.float32),
        "rpn_cls_w": nrm(keys[3], (A, c2, 1, 1), 0.01),
        "rpn_cls_b": jnp.zeros((A,), jnp.float32),
        "rpn_bbox_w": nrm(keys[4], (4 * A, c2, 1, 1), 0.01),
        "rpn_bbox_b": jnp.zeros((4 * A,), jnp.float32),
        # Detector (box head + predictors incl. sigma head); fc1 consumes
        # NHWC-flattened RoI features (P*P*C ordering).
        "det_fc1_w": nrm(keys[5], (P * P * c2, fd), 0.02),
        "det_fc1_b": jnp.zeros((fd,), jnp.float32),
        "det_fc2_w": nrm(keys[6], (fd, fd), 0.02),
        "det_fc2_b": jnp.zeros((fd,), jnp.float32),
        "det_cls_w": nrm(keys[7], (fd, nc + 1), 0.01),
        "det_cls_b": jnp.zeros((nc + 1,), jnp.float32),
        "det_bbox_w": nrm(keys[8], (fd, 4 * nc), 0.001),
        "det_bbox_b": jnp.zeros((4 * nc,), jnp.float32),
        "det_sigma_w": nrm(keys[9], (fd, 4 * nc), 0.001),
        "det_sigma_b": jnp.zeros((4 * nc,), jnp.float32),
    }


def _s1_taps(w):
    """(Co, Ci, 3, 3) -> (9, Ci, Co), tap index = di*3 + dj."""
    co, ci, _, _ = w.shape
    return w.transpose(2, 3, 1, 0).reshape(9, ci, co)


def _s2d_taps(w):
    """3x3 stride-2 conv weights -> 2x2 taps over the space-to-depth input.

    (Co, Ci, 3, 3) -> (4, 4*Ci, Co); tap = i_off*2 + j_off, channel layout
    (p*2 + q)*Ci + c matching the wrapper's space-to-depth.
    """
    co, ci, kh, kw = w.shape
    out = jnp.zeros((2, 2, 2, 2, ci, co), w.dtype)
    for di in range(kh):
        for dj in range(kw):
            i_off, p = di // 2, di % 2
            j_off, q = dj // 2, dj % 2
            out = out.at[i_off, j_off, p, q].set(w[:, :, di, dj].T)
    return out.reshape(4, 4 * ci, co)


def prepare_params(p, cfg):
    """One-time inference prep: tap-stack / s2d-rearrange conv weights, fuse
    heads, cast matmul operands to bf16.  Keeps per-call XLA glue out of the
    forward pass."""
    A = cfg["num_anchors"]
    C = p["rpn_conv_w"].shape[0]
    q = {
        "bb1_w": _s2d_taps(p["bb_conv1_w"]).astype(jnp.bfloat16),
        "bb1_b": p["bb_conv1_b"].reshape(1, -1),
        "bb2_w": _s2d_taps(p["bb_conv2_w"]).astype(jnp.bfloat16),
        "bb2_b": p["bb_conv2_b"].reshape(1, -1),
        "rpn_w": _s1_taps(p["rpn_conv_w"]).astype(jnp.bfloat16),
        "rpn_b": p["rpn_conv_b"].reshape(1, -1),
        "rpn_head_w": jnp.concatenate(
            [p["rpn_cls_w"].reshape(A, C), p["rpn_bbox_w"].reshape(4 * A, C)],
            axis=0).T.astype(jnp.bfloat16),                           # (C, 5A)
        "rpn_head_b": jnp.concatenate(
            [p["rpn_cls_b"], p["rpn_bbox_b"]]).reshape(1, -1),
        "det_fc1_w": p["det_fc1_w"].astype(jnp.bfloat16),
        "det_fc1_b": p["det_fc1_b"].reshape(1, -1),
        "det_fc2_w": p["det_fc2_w"].astype(jnp.bfloat16),
        "det_fc2_b": p["det_fc2_b"].reshape(1, -1),
        "det_head_w": jnp.concatenate(
            [p["det_cls_w"], p["det_bbox_w"], p["det_sigma_w"]],
            axis=1).astype(jnp.bfloat16),                             # (fd, nc+1+8nc)
        "det_head_b": jnp.concatenate(
            [p["det_cls_b"], p["det_bbox_b"], p["det_sigma_b"]]).reshape(1, -1),
    }
    return q


# ----------------------------------------------------------------------------
# Forward
# ----------------------------------------------------------------------------
def backbone_forward(q, image):
    # Accept NCHW (PyTorch conv convention); transpose ONCE to NHWC.
    x = image.transpose(0, 2, 3, 1)
    x = pallas_conv3x3_s2(x, q["bb1_w"], q["bb1_b"], relu=True)       # (N,H/2,W/2,c1) bf16
    x = pallas_conv3x3_s2(x, q["bb2_w"], q["bb2_b"], relu=True)       # (N,H/4,W/4,c2) bf16
    return x


def rpn_forward(q, feat, image_size, cfg):
    N, Hf, Wf, C = feat.shape
    A = cfg["num_anchors"]
    H, W = image_size

    head = pallas_rpn_head(feat, q["rpn_w"], q["rpn_b"],
                           q["rpn_head_w"], q["rpn_head_b"])          # (N,Hf,Wf,5A) f32

    obj = head[..., :A].reshape(N, Hf * Wf * A)
    deltas = head[..., A:].reshape(N, Hf * Wf * A, 4)                 # anchor-major, 4-minor

    anchors = make_anchors(Hf, Wf, cfg["stride"], cfg["anchor_sizes"])
    boxes = clip_boxes(decode_boxes(anchors[None], deltas), float(H), float(W))

    # TODO(synk): NMS has no clean Pallas equivalent; proposals are selected by
    # batched top-k objectness only.
    k = cfg["pre_nms_topk"]
    top_scores, top_idx = jax.lax.top_k(obj, k)
    top_boxes = jnp.take_along_axis(boxes, top_idx[..., None], axis=1)

    proposals = [{"proposal_boxes": top_boxes[n], "objectness_logits": top_scores[n]}
                 for n in range(N)]
    return proposals, {}                                              # inference: no losses


def detector_forward(q, feat, proposals, image_size, cfg):
    N, Hf, Wf, C = feat.shape
    P = cfg["roi_size"]
    nc = cfg["num_classes"]
    H, W = image_size
    k_img = cfg["pre_nms_topk"]

    boxes_b = jnp.stack([pr["proposal_boxes"] for pr in proposals], axis=0)   # (N,k,4)
    roi_feats = jax.vmap(
        lambda f, bx: roi_pool_nhwc(f, bx, cfg["stride"], P))(feat, boxes_b)  # (N,k,P,P,C) bf16
    R = N * k_img
    x = roi_feats.reshape(R, P * P * C)                                       # bf16
    all_boxes = boxes_b.reshape(R, 4)

    head_out = pallas_det_head(x, q["det_fc1_w"], q["det_fc1_b"],
                               q["det_fc2_w"], q["det_fc2_b"],
                               q["det_head_w"], q["det_head_b"])              # (R, nc+1+8nc) f32

    cls_logits = head_out[:, :nc + 1]
    bbox_pred = head_out[:, nc + 1:nc + 1 + 4 * nc].reshape(R, nc, 4)
    sigma_pred = head_out[:, nc + 1 + 4 * nc:].reshape(R, nc, 4)

    probs = jax.nn.softmax(cls_logits, axis=-1)[:, :nc]               # drop background (last)
    pred_classes = jnp.argmax(probs, axis=-1)
    scores = jnp.max(probs, axis=-1)

    sel = pred_classes[:, None, None]
    cls_deltas = jnp.take_along_axis(bbox_pred, sel, axis=1)[:, 0, :]
    cls_sigma = jnp.take_along_axis(sigma_pred, sel, axis=1)[:, 0, :]

    pred_boxes = clip_boxes(decode_boxes(all_boxes, cls_deltas), float(H), float(W))

    # Per-image top-k detections, batched (NMS omitted, see TODO above).
    k_det = cfg["detections_per_image"]
    scores_b = scores.reshape(N, k_img)
    boxes_rb = pred_boxes.reshape(N, k_img, 4)
    sigma_rb = cls_sigma.reshape(N, k_img, 4)
    classes_rb = pred_classes.reshape(N, k_img)
    top_s, top_i = jax.lax.top_k(scores_b, k_det)
    top_boxes = jnp.take_along_axis(boxes_rb, top_i[..., None], axis=1)
    top_sigma = jnp.take_along_axis(sigma_rb, top_i[..., None], axis=1)
    top_classes = jnp.take_along_axis(classes_rb, top_i, axis=1)

    detections = [{
        "pred_boxes": top_boxes[n],
        "scores": top_s[n],
        "pred_sigma": top_sigma[n],
        "pred_classes": top_classes[n],
    } for n in range(N)]
    return detections, {}                                             # inference: no losses


def faster_rcnn_forward(prepared_params, image, gt_target=None, is_training=False):
    """Mirrors FasterRCNN.forward: returns
    (rpn_proposals, detections, rpn_losses, detection_loss)."""
    image_size = image.shape[-2:]
    feature_map = backbone_forward(prepared_params, image)
    rpn_proposals, rpn_losses = rpn_forward(prepared_params, feature_map, image_size, CFG)
    detections, detection_loss = detector_forward(
        prepared_params, feature_map, rpn_proposals, image_size, CFG)
    return rpn_proposals, detections, rpn_losses, detection_loss


# ----------------------------------------------------------------------------
if __name__ == "__main__":
    key = jax.random.PRNGKey(0)
    k_param, k_img = jax.random.split(key)
    params = init_params(k_param, CFG)
    prepped = prepare_params(params, CFG)     # one-time weight prep (no per-call glue)

    # small deterministic input: N=2, C=3, H=W=32 (NCHW at the boundary)
    image = jax.random.normal(k_img, (2, 3, 32, 32), jnp.float32)

    fwd = jax.jit(lambda pr, img: faster_rcnn_forward(pr, img))
    rpn_proposals, detections, rpn_losses, detection_loss = fwd(prepped, image)

    jax.tree_util.tree_map(jax.block_until_ready, (rpn_proposals, detections))

    # sanity checks on output structure
    assert len(rpn_proposals) == 2 and len(detections) == 2
    assert rpn_proposals[0]["proposal_boxes"].shape == (CFG["pre_nms_topk"], 4)
    assert detections[0]["pred_boxes"].shape == (CFG["detections_per_image"], 4)
    assert detections[0]["pred_sigma"].shape == (CFG["detections_per_image"], 4)
    assert isinstance(rpn_losses, dict) and isinstance(detection_loss, dict)

    print("KERNEL_OK")
</pallas_src>

<mosaic_0001>
module attributes {stable_mosaic.version = 11 : i64} {
  func.func @_conv_taps_kernel(%arg0: i32, %arg1: memref<1x306x12xbf16, #tpu.memory_space<vmem>>, %arg2: memref<4x12x16xbf16, #tpu.memory_space<vmem>>, %arg3: memref<1x16xf32, #tpu.memory_space<vmem>>, %arg4: memref<1x272x16xbf16, #tpu.memory_space<vmem>>) attributes {dimension_semantics = [#tpu.dimension_semantics<parallel>], iteration_bounds = array<i64: 2>, scalar_prefetch = 0 : i64, scratch_operands = 0 : i64, tpu.core_type = #tpu.core_type<tc>, window_params = [{transform_indices = @transform_0, window_bounds = array<i64: 1, 306, 12>}, {pipeline_mode = #tpu.pipeline_mode<synchronous>, transform_indices = @transform_1, window_bounds = array<i64: 4, 12, 16>}, {pipeline_mode = #tpu.pipeline_mode<synchronous>, transform_indices = @transform_2, window_bounds = array<i64: 1, 16>}, {transform_indices = @transform_3, window_bounds = array<i64: 1, 272, 16>}]} {
    %c0 = arith.constant 0 : index
    %c0_0 = arith.constant 0 : index
    %c0_1 = arith.constant 0 : index
    %0 = vector.load %arg1[%c0, %c0_0, %c0_1] : memref<1x306x12xbf16, #tpu.memory_space<vmem>>, vector<1x272x12xbf16>
    %1 = vector.shape_cast %0 : vector<1x272x12xbf16> to vector<272x12xbf16>
    %c0_2 = arith.constant 0 : index
    %c0_3 = arith.constant 0 : index
    %c0_4 = arith.constant 0 : index
    %2 = vector.load %arg2[%c0_2, %c0_3, %c0_4] : memref<4x12x16xbf16, #tpu.memory_space<vmem>>, vector<1x12x16xbf16>
    %3 = vector.shape_cast %2 : vector<1x12x16xbf16> to vector<12x16xbf16>
    %cst = arith.constant dense<0.000000e+00> : vector<272x16xf32>
    %4 = tpu.matmul %1, %3, %cst {dimension_numbers = #tpu.dot_dimension_numbers<[1], [0], [0], [1], [0, 0, 1, 1], [], []>} : vector<272x12xbf16>, vector<12x16xbf16>, vector<272x16xf32> -> vector<272x16xf32>
    %c0_5 = arith.constant 0 : index
    %c1 = arith.constant 1 : index
    %c0_6 = arith.constant 0 : index
    %5 = vector.load %arg1[%c0_5, %c1, %c0_6] : memref<1x306x12xbf16, #tpu.memory_space<vmem>>, vector<1x272x12xbf16>
    %6 = vector.shape_cast %5 : vector<1x272x12xbf16> to vector<272x12xbf16>
    %c1_7 = arith.constant 1 : index
    %c0_8 = arith.constant 0 : index
    %c0_9 = arith.constant 0 : index
    %7 = vector.load %arg2[%c1_7, %c0_8, %c0_9] : memref<4x12x16xbf16, #tpu.memory_space<vmem>>, vector<1x12x16xbf16>
    %8 = vector.shape_cast %7 : vector<1x12x16xbf16> to vector<12x16xbf16>
    %cst_10 = arith.constant dense<0.000000e+00> : vector<272x16xf32>
    %9 = tpu.matmul %6, %8, %cst_10 {dimension_numbers = #tpu.dot_dimension_numbers<[1], [0], [0], [1], [0, 0, 1, 1], [], []>} : vector<272x12xbf16>, vector<12x16xbf16>, vector<272x16xf32> -> vector<272x16xf32>
    %10 = arith.addf %4, %9 : vector<272x16xf32>
    %c0_11 = arith.constant 0 : index
    %c17 = arith.constant 17 : index
    %c0_12 = arith.constant 0 : index
    %11 = vector.load %arg1[%c0_11, %c17, %c0_12] : memref<1x306x12xbf16, #tpu.memory_space<vmem>>, vector<1x272x12xbf16>
    %12 = vector.shape_cast %11 : vector<1x272x12xbf16> to vector<272x12xbf16>
    %c2 = arith.constant 2 : index
    %c0_13 = arith.constant 0 : index
    %c0_14 = arith.constant 0 : index
    %13 = vector.load %arg2[%c2, %c0_13, %c0_14] : memref<4x12x16xbf16, #tpu.memory_space<vmem>>, vector<1x12x16xbf16>
    %14 = vector.shape_cast %13 : vector<1x12x16xbf16> to vector<12x16xbf16>
    %cst_15 = arith.constant dense<0.000000e+00> : vector<272x16xf32>
    %15 = tpu.matmul %12, %14, %cst_15 {dimension_numbers = #tpu.dot_dimension_numbers<[1], [0], [0], [1], [0, 0, 1, 1], [], []>} : vector<272x12xbf16>, vector<12x16xbf16>, vector<272x16xf32> -> vector<272x16xf32>
    %16 = arith.addf %10, %15 : vector<272x16xf32>
    %c0_16 = arith.constant 0 : index
    %c18 = arith.constant 18 : index
    %c0_17 = arith.constant 0 : index
    %17 = vector.load %arg1[%c0_16, %c18, %c0_17] : memref<1x306x12xbf16, #tpu.memory_space<vmem>>, vector<1x272x12xbf16>
    %18 = vector.shape_cast %17 : vector<1x272x12xbf16> to vector<272x12xbf16>
    %c3 = arith.constant 3 : index
    %c0_18 = arith.constant 0 : index
    %c0_19 = arith.constant 0 : index
    %19 = vector.load %arg2[%c3, %c0_18, %c0_19] : memref<4x12x16xbf16, #tpu.memory_space<vmem>>, vector<1x12x16xbf16>
    %20 = vector.shape_cast %19 : vector<1x12x16xbf16> to vector<12x16xbf16>
    %cst_20 = arith.constant dense<0.000000e+00> : vector<272x16xf32>
    %21 = tpu.matmul %18, %20, %cst_20 {dimension_numbers = #tpu.dot_dimension_numbers<[1], [0], [0], [1], [0, 0, 1, 1], [], []>} : vector<272x12xbf16>, vector<12x16xbf16>, vector<272x16xf32> -> vector<272x16xf32>
    %22 = arith.addf %16, %21 : vector<272x16xf32>
    %c0_21 = arith.constant 0 : index
    %c0_22 = arith.constant 0 : index
    %23 = vector.load %arg3[%c0_21, %c0_22] : memref<1x16xf32, #tpu.memory_space<vmem>>, vector<1x16xf32>
    %24 = vector.broadcast %23 : vector<1x16xf32> to vector<272x16xf32>
    %25 = arith.addf %22, %24 : vector<272x16xf32>
    %cst_23 = arith.constant 0.000000e+00 : f32
    %26 = vector.broadcast %cst_23 : f32 to vector<272x16xf32>
    %27 = arith.maximumf %25, %26 : vector<272x16xf32>
    %28 = arith.truncf %27 : vector<272x16xf32> to vector<272x16xbf16>
    %c0_24 = arith.constant 0 : index
    %c0_25 = arith.constant 0 : index
    %c0_26 = arith.constant 0 : index
    %29 = vector.load %arg4[%c0_24, %c0_25, %c0_26] : memref<1x272x16xbf16, #tpu.memory_space<vmem>>, vector<1x272x16xbf16>
    %30 = vector.shape_cast %29 : vector<1x272x16xbf16> to vector<272x16xbf16>
    %31 = vector.shape_cast %28 : vector<272x16xbf16> to vector<1x272x16xbf16>
    tpu.vector_store %arg4[%c0_24, %c0_25, %c0_26], %31 {strides = array<i32>} : memref<1x272x16xbf16, #tpu.memory_space<vmem>>, vector<1x272x16xbf16>,
    return
  }
  func.func @transform_0(%arg0: i32) -> (i32, i32, i32) {
    %c0_i32 = arith.constant 0 : i32
    %c0_i32_0 = arith.constant 0 : i32
    %c0_i32_1 = arith.constant 0 : i32
    return %arg0, %c0_i32, %c0_i32_0 : i32, i32, i32
  }
  func.func @transform_1(%arg0: i32) -> (i32, i32, i32) {
    %c0_i32 = arith.constant 0 : i32
    %c0_i32_0 = arith.constant 0 : i32
    %c0_i32_1 = arith.constant 0 : i32
    %c0_i32_2 = arith.constant 0 : i32
    return %c0_i32, %c0_i32_0, %c0_i32_1 : i32, i32, i32
  }
  func.func @transform_2(%arg0: i32) -> (i32, i32) {
    %c0_i32 = arith.constant 0 : i32
    %c0_i32_0 = arith.constant 0 : i32
    %c0_i32_1 = arith.constant 0 : i32
    return %c0_i32, %c0_i32_0 : i32, i32
  }
  func.func @transform_3(%arg0: i32) -> (i32, i32, i32) {
    %c0_i32 = arith.constant 0 : i32
    %c0_i32_0 = arith.constant 0 : i32
    %c0_i32_1 = arith.constant 0 : i32
    return %arg0, %c0_i32, %c0_i32_0 : i32, i32, i32
  }
}

module attributes {stable_mosaic.version = 11 : i64} {
  func.func @_conv_taps_kernel(%arg0: i32, %arg1: memref<1x90x64xbf16, #tpu.memory_space<vmem>>, %arg2: memref<4x64x32xbf16, #tpu.memory_space<vmem>>, %arg3: memref<1x32xf32, #tpu.memory_space<vmem>>, %arg4: memref<1x72x32xbf16, #tpu.memory_space<vmem>>) attributes {dimension_semantics = [#tpu.dimension_semantics<parallel>], iteration_bounds = array<i64: 2>, scalar_prefetch = 0 : i64, scratch_operands = 0 : i64, tpu.core_type = #tpu.core_type<tc>, window_params = [{transform_indices = @transform_0, window_bounds = array<i64: 1, 90, 64>}, {pipeline_mode = #tpu.pipeline_mode<synchronous>, transform_indices = @transform_1, window_bounds = array<i64: 4, 64, 32>}, {pipeline_mode = #tpu.pipeline_mode<synchronous>, transform_indices = @transform_2, window_bounds = array<i64: 1, 32>}, {transform_indices = @transform_3, window_bounds = array<i64: 1, 72, 32>}]} {
    %c0 = arith.constant 0 : index
    %c0_0 = arith.constant 0 : index
    %c0_1 = arith.constant 0 : index
    %0 = vector.load %arg1[%c0, %c0_0, %c0_1] : memref<1x90x64xbf16, #tpu.memory_space<vmem>>, vector<1x72x64xbf16>
    %1 = vector.shape_cast %0 : vector<1x72x64xbf16> to vector<72x64xbf16>
    %c0_2 = arith.constant 0 : index
    %c0_3 = arith.constant 0 : index
    %c0_4 = arith.constant 0 : index
    %2 = vector.load %arg2[%c0_2, %c0_3, %c0_4] : memref<4x64x32xbf16, #tpu.memory_space<vmem>>, vector<1x64x32xbf16>
    %3 = vector.shape_cast %2 : vector<1x64x32xbf16> to vector<64x32xbf16>
    %cst = arith.constant dense<0.000000e+00> : vector<72x32xf32>
    %4 = tpu.matmul %1, %3, %cst {dimension_numbers = #tpu.dot_dimension_numbers<[1], [0], [0], [1], [0, 0, 1, 1], [], []>} : vector<72x64xbf16>, vector<64x32xbf16>, vector<72x32xf32> -> vector<72x32xf32>
    %c0_5 = arith.constant 0 : index
    %c1 = arith.constant 1 : index
    %c0_6 = arith.constant 0 : index
    %5 = vector.load %arg1[%c0_5, %c1, %c0_6] : memref<1x90x64xbf16, #tpu.memory_space<vmem>>, vector<1x72x64xbf16>
    %6 = vector.shape_cast %5 : vector<1x72x64xbf16> to vector<72x64xbf16>
    %c1_7 = arith.constant 1 : index
    %c0_8 = arith.constant 0 : index
    %c0_9 = arith.constant 0 : index
    %7 = vector.load %arg2[%c1_7, %c0_8, %c0_9] : memref<4x64x32xbf16, #tpu.memory_space<vmem>>, vector<1x64x32xbf16>
    %8 = vector.shape_cast %7 : vector<1x64x32xbf16> to vector<64x32xbf16>
    %cst_10 = arith.constant dense<0.000000e+00> : vector<72x32xf32>
    %9 = tpu.matmul %6, %8, %cst_10 {dimension_numbers = #tpu.dot_dimension_numbers<[1], [0], [0], [1], [0, 0, 1, 1], [], []>} : vector<72x64xbf16>, vector<64x32xbf16>, vector<72x32xf32> -> vector<72x32xf32>
    %10 = arith.addf %4, %9 : vector<72x32xf32>
    %c0_11 = arith.constant 0 : index
    %c9 = arith.constant 9 : index
    %c0_12 = arith.constant 0 : index
    %11 = vector.load %arg1[%c0_11, %c9, %c0_12] : memref<1x90x64xbf16, #tpu.memory_space<vmem>>, vector<1x72x64xbf16>
    %12 = vector.shape_cast %11 : vector<1x72x64xbf16> to vector<72x64xbf16>
    %c2 = arith.constant 2 : index
    %c0_13 = arith.constant 0 : index
    %c0_14 = arith.constant 0 : index
    %13 = vector.load %arg2[%c2, %c0_13, %c0_14] : memref<4x64x32xbf16, #tpu.memory_space<vmem>>, vector<1x64x32xbf16>
    %14 = vector.shape_cast %13 : vector<1x64x32xbf16> to vector<64x32xbf16>
    %cst_15 = arith.constant dense<0.000000e+00> : vector<72x32xf32>
    %15 = tpu.matmul %12, %14, %cst_15 {dimension_numbers = #tpu.dot_dimension_numbers<[1], [0], [0], [1], [0, 0, 1, 1], [], []>} : vector<72x64xbf16>, vector<64x32xbf16>, vector<72x32xf32> -> vector<72x32xf32>
    %16 = arith.addf %10, %15 : vector<72x32xf32>
    %c0_16 = arith.constant 0 : index
    %c10 = arith.constant 10 : index
    %c0_17 = arith.constant 0 : index
    %17 = vector.load %arg1[%c0_16, %c10, %c0_17] : memref<1x90x64xbf16, #tpu.memory_space<vmem>>, vector<1x72x64xbf16>
    %18 = vector.shape_cast %17 : vector<1x72x64xbf16> to vector<72x64xbf16>
    %c3 = arith.constant 3 : index
    %c0_18 = arith.constant 0 : index
    %c0_19 = arith.constant 0 : index
    %19 = vector.load %arg2[%c3, %c0_18, %c0_19] : memref<4x64x32xbf16, #tpu.memory_space<vmem>>, vector<1x64x32xbf16>
    %20 = vector.shape_cast %19 : vector<1x64x32xbf16> to vector<64x32xbf16>
    %cst_20 = arith.constant dense<0.000000e+00> : vector<72x32xf32>
    %21 = tpu.matmul %18, %20, %cst_20 {dimension_numbers = #tpu.dot_dimension_numbers<[1], [0], [0], [1], [0, 0, 1, 1], [], []>} : vector<72x64xbf16>, vector<64x32xbf16>, vector<72x32xf32> -> vector<72x32xf32>
    %22 = arith.addf %16, %21 : vector<72x32xf32>
    %c0_21 = arith.constant 0 : index
    %c0_22 = arith.constant 0 : index
    %23 = vector.load %arg3[%c0_21, %c0_22] : memref<1x32xf32, #tpu.memory_space<vmem>>, vector<1x32xf32>
    %24 = vector.broadcast %23 : vector<1x32xf32> to vector<72x32xf32>
    %25 = arith.addf %22, %24 : vector<72x32xf32>
    %cst_23 = arith.constant 0.000000e+00 : f32
    %26 = vector.broadcast %cst_23 : f32 to vector<72x32xf32>
    %27 = arith.maximumf %25, %26 : vector<72x32xf32>
    %28 = arith.truncf %27 : vector<72x32xf32> to vector<72x32xbf16>
    %c0_24 = arith.constant 0 : index
    %c0_25 = arith.constant 0 : index
    %c0_26 = arith.constant 0 : index
    %29 = vector.load %arg4[%c0_24, %c0_25, %c0_26] : memref<1x72x32xbf16, #tpu.memory_space<vmem>>, vector<1x72x32xbf16>
    %30 = vector.shape_cast %29 : vector<1x72x32xbf16> to vector<72x32xbf16>
    %31 = vector.shape_cast %28 : vector<72x32xbf16> to vector<1x72x32xbf16>
    tpu.vector_store %arg4[%c0_24, %c0_25, %c0_26], %31 {strides = array<i32>} : memref<1x72x32xbf16, #tpu.memory_space<vmem>>, vector<1x72x32xbf16>,
    return
  }
  func.func @transform_0(%arg0: i32) -> (i32, i32, i32) {
    %c0_i32 = arith.constant 0 : i32
    %c0_i32_0 = arith.constant 0 : i32
    %c0_i32_1 = arith.constant 0 : i32
    return %arg0, %c0_i32, %c0_i32_0 : i32, i32, i32
  }
  func.func @transform_1(%arg0: i32) -> (i32, i32, i32) {
    %c0_i32 = arith.constant 0 : i32
    %c0_i32_0 = arith.constant 0 : i32
    %c0_i32_1 = arith.constant 0 : i32
    %c0_i32_2 = arith.constant 0 : i32
    return %c0_i32, %c0_i32_0, %c0_i32_1 : i32, i32, i32
  }
  func.func @transform_2(%arg0: i32) -> (i32, i32) {
    %c0_i32 = arith.constant 0 : i32
    %c0_i32_0 = arith.constant 0 : i32
    %c0_i32_1 = arith.constant 0 : i32
    return %c0_i32, %c0_i32_0 : i32, i32
  }
  func.func @transform_3(%arg0: i32) -> (i32, i32, i32) {
    %c0_i32 = arith.constant 0 : i32
    %c0_i32_0 = arith.constant 0 : i32
    %c0_i32_1 = arith.constant 0 : i32
    return %arg0, %c0_i32, %c0_i32_0 : i32, i32, i32
  }
}

module attributes {stable_mosaic.version = 11 : i64} {
  func.func @_rpn_fused_kernel(%arg0: i32, %arg1: memref<1x110x32xbf16, #tpu.memory_space<vmem>>, %arg2: memref<9x32x32xbf16, #tpu.memory_space<vmem>>, %arg3: memref<1x32xf32, #tpu.memory_space<vmem>>, %arg4: memref<32x15xbf16, #tpu.memory_space<vmem>>, %arg5: memref<1x15xf32, #tpu.memory_space<vmem>>, %arg6: memref<1x80x15xf32, #tpu.memory_space<vmem>>) attributes {dimension_semantics = [#tpu.dimension_semantics<parallel>], iteration_bounds = array<i64: 2>, scalar_prefetch = 0 : i64, scratch_operands = 0 : i64, tpu.core_type = #tpu.core_type<tc>, window_params = [{transform_indices = @transform_0, window_bounds = array<i64: 1, 110, 32>}, {pipeline_mode = #tpu.pipeline_mode<synchronous>, transform_indices = @transform_1, window_bounds = array<i64: 9, 32, 32>}, {pipeline_mode = #tpu.pipeline_mode<synchronous>, transform_indices = @transform_2, window_bounds = array<i64: 1, 32>}, {pipeline_mode = #tpu.pipeline_mode<synchronous>, transform_indices = @transform_3, window_bounds = array<i64: 32, 15>}, {pipeline_mode = #tpu.pipeline_mode<synchronous>, transform_indices = @transform_4, window_bounds = array<i64: 1, 15>}, {transform_indices = @transform_5, window_bounds = array<i64: 1, 80, 15>}]} {
    %c0 = arith.constant 0 : index
    %c0_0 = arith.constant 0 : index
    %c0_1 = arith.constant 0 : index
    %0 = vector.load %arg1[%c0, %c0_0, %c0_1] : memref<1x110x32xbf16, #tpu.memory_space<vmem>>, vector<1x80x32xbf16>
    %1 = vector.shape_cast %0 : vector<1x80x32xbf16> to vector<80x32xbf16>
    %c0_2 = arith.constant 0 : index
    %c0_3 = arith.constant 0 : index
    %c0_4 = arith.constant 0 : index
    %2 = vector.load %arg2[%c0_2, %c0_3, %c0_4] : memref<9x32x32xbf16, #tpu.memory_space<vmem>>, vector<1x32x32xbf16>
    %3 = vector.shape_cast %2 : vector<1x32x32xbf16> to vector<32x32xbf16>
    %cst = arith.constant dense<0.000000e+00> : vector<80x32xf32>
    %4 = tpu.matmul %1, %3, %cst {dimension_numbers = #tpu.dot_dimension_numbers<[1], [0], [0], [1], [0, 0, 1, 1], [], []>} : vector<80x32xbf16>, vector<32x32xbf16>, vector<80x32xf32> -> vector<80x32xf32>
    %c0_5 = arith.constant 0 : index
    %c1 = arith.constant 1 : index
    %c0_6 = arith.constant 0 : index
    %5 = vector.load %arg1[%c0_5, %c1, %c0_6] : memref<1x110x32xbf16, #tpu.memory_space<vmem>>, vector<1x80x32xbf16>
    %6 = vector.shape_cast %5 : vector<1x80x32xbf16> to vector<80x32xbf16>
    %c1_7 = arith.constant 1 : index
    %c0_8 = arith.constant 0 : index
    %c0_9 = arith.constant 0 : index
    %7 = vector.load %arg2[%c1_7, %c0_8, %c0_9] : memref<9x32x32xbf16, #tpu.memory_space<vmem>>, vector<1x32x32xbf16>
    %8 = vector.shape_cast %7 : vector<1x32x32xbf16> to vector<32x32xbf16>
    %cst_10 = arith.constant dense<0.000000e+00> : vector<80x32xf32>
    %9 = tpu.matmul %6, %8, %cst_10 {dimension_numbers = #tpu.dot_dimension_numbers<[1], [0], [0], [1], [0, 0, 1, 1], [], []>} : vector<80x32xbf16>, vector<32x32xbf16>, vector<80x32xf32> -> vector<80x32xf32>
    %10 = arith.addf %4, %9 : vector<80x32xf32>
    %c0_11 = arith.constant 0 : index
    %c2 = arith.constant 2 : index
    %c0_12 = arith.constant 0 : index
    %11 = vector.load %arg1[%c0_11, %c2, %c0_12] : memref<1x110x32xbf16, #tpu.memory_space<vmem>>, vector<1x80x32xbf16>
    %12 = vector.shape_cast %11 : vector<1x80x32xbf16> to vector<80x32xbf16>
    %c2_13 = arith.constant 2 : index
    %c0_14 = arith.constant 0 : index
    %c0_15 = arith.constant 0 : index
    %13 = vector.load %arg2[%c2_13, %c0_14, %c0_15] : memref<9x32x32xbf16, #tpu.memory_space<vmem>>, vector<1x32x32xbf16>
    %14 = vector.shape_cast %13 : vector<1x32x32xbf16> to vector<32x32xbf16>
    %cst_16 = arith.constant dense<0.000000e+00> : vector<80x32xf32>
    %15 = tpu.matmul %12, %14, %cst_16 {dimension_numbers = #tpu.dot_dimension_numbers<[1], [0], [0], [1], [0, 0, 1, 1], [], []>} : vector<80x32xbf16>, vector<32x32xbf16>, vector<80x32xf32> -> vector<80x32xf32>
    %16 = arith.addf %10, %15 : vector<80x32xf32>
    %c0_17 = arith.constant 0 : index
    %c10 = arith.constant 10 : index
    %c0_18 = arith.constant 0 : index
    %17 = vector.load %arg1[%c0_17, %c10, %c0_18] : memref<1x110x32xbf16, #tpu.memory_space<vmem>>, vector<1x80x32xbf16>
    %18 = vector.shape_cast %17 : vector<1x80x32xbf16> to vector<80x32xbf16>
    %c3 = arith.constant 3 : index
    %c0_19 = arith.constant 0 : index
    %c0_20 = arith.constant 0 : index
    %19 = vector.load %arg2[%c3, %c0_19, %c0_20] : memref<9x32x32xbf16, #tpu.memory_space<vmem>>, vector<1x32x32xbf16>
    %20 = vector.shape_cast %19 : vector<1x32x32xbf16> to vector<32x32xbf16>
    %cst_21 = arith.constant dense<0.000000e+00> : vector<80x32xf32>
    %21 = tpu.matmul %18, %20, %cst_21 {dimension_numbers = #tpu.dot_dimension_numbers<[1], [0], [0], [1], [0, 0, 1, 1], [], []>} : vector<80x32xbf16>, vector<32x32xbf16>, vector<80x32xf32> -> vector<80x32xf32>
    %22 = arith.addf %16, %21 : vector<80x32xf32>
    %c0_22 = arith.constant 0 : index
    %c11 = arith.constant 11 : index
    %c0_23 = arith.constant 0 : index
    %23 = vector.load %arg1[%c0_22, %c11, %c0_23] : memref<1x110x32xbf16, #tpu.memory_space<vmem>>, vector<1x80x32xbf16>
    %24 = vector.shape_cast %23 : vector<1x80x32xbf16> to vector<80x32xbf16>
    %c4 = arith.constant 4 : index
    %c0_24 = arith.constant 0 : index
    %c0_25 = arith.constant 0 : index
    %25 = vector.load %arg2[%c4, %c0_24, %c0_25] : memref<9x32x32xbf16, #tpu.memory_space<vmem>>, vector<1x32x32xbf16>
    %26 = vector.shape_cast %25 : vector<1x32x32xbf16> to vector<32x32xbf16>
    %cst_26 = arith.constant dense<0.000000e+00> : vector<80x32xf32>
    %27 = tpu.matmul %24, %26, %cst_26 {dimension_numbers = #tpu.dot_dimension_numbers<[1], [0], [0], [1], [0, 0, 1, 1], [], []>} : vector<80x32xbf16>, vector<32x32xbf16>, vector<80x32xf32> -> vector<80x32xf32>
    %28 = arith.addf %22, %27 : vector<80x32xf32>
    %c0_27 = arith.constant 0 : index
    %c12 = arith.constant 12 : index
    %c0_28 = arith.constant 0 : index
    %29 = vector.load %arg1[%c0_27, %c12, %c0_28] : memref<1x110x32xbf16, #tpu.memory_space<vmem>>, vector<1x80x32xbf16>
    %30 = vector.shape_cast %29 : vector<1x80x32xbf16> to vector<80x32xbf16>
    %c5 = arith.constant 5 : index
    %c0_29 = arith.constant 0 : index
    %c0_30 = arith.constant 0 : index
    %31 = vector.load %arg2[%c5, %c0_29, %c0_30] : memref<9x32x32xbf16, #tpu.memory_space<vmem>>, vector<1x32x32xbf16>
    %32 = vector.shape_cast %31 : vector<1x32x32xbf16> to vector<32x32xbf16>
    %cst_31 = arith.constant dense<0.000000e+00> : vector<80x32xf32>
    %33 = tpu.matmul %30, %32, %cst_31 {dimension_numbers = #tpu.dot_dimension_numbers<[1], [0], [0], [1], [0, 0, 1, 1], [], []>} : vector<80x32xbf16>, vector<32x32xbf16>, vector<80x32xf32> -> vector<80x32xf32>
    %34 = arith.addf %28, %33 : vector<80x32xf32>
    %c0_32 = arith.constant 0 : index
    %c20 = arith.constant 20 : index
    %c0_33 = arith.constant 0 : index
    %35 = vector.load %arg1[%c0_32, %c20, %c0_33] : memref<1x110x32xbf16, #tpu.memory_space<vmem>>, vector<1x80x32xbf16>
    %36 = vector.shape_cast %35 : vector<1x80x32xbf16> to vector<80x32xbf16>
    %c6 = arith.constant 6 : index
    %c0_34 = arith.constant 0 : index
    %c0_35 = arith.constant 0 : index
    %37 = vector.load %arg2[%c6, %c0_34, %c0_35] : memref<9x32x32xbf16, #tpu.memory_space<vmem>>, vector<1x32x32xbf16>
    %38 = vector.shape_cast %37 : vector<1x32x32xbf16> to vector<32x32xbf16>
    %cst_36 = arith.constant dense<0.000000e+00> : vector<80x32xf32>
    %39 = tpu.matmul %36, %38, %cst_36 {dimension_numbers = #tpu.dot_dimension_numbers<[1], [0], [0], [1], [0, 0, 1, 1], [], []>} : vector<80x32xbf16>, vector<32x32xbf16>, vector<80x32xf32> -> vector<80x32xf32>
    %40 = arith.addf %34, %39 : vector<80x32xf32>
    %c0_37 = arith.constant 0 : index
    %c21 = arith.constant 21 : index
    %c0_38 = arith.constant 0 : index
    %41 = vector.load %arg1[%c0_37, %c21, %c0_38] : memref<1x110x32xbf16, #tpu.memory_space<vmem>>, vector<1x80x32xbf16>
    %42 = vector.shape_cast %41 : vector<1x80x32xbf16> to vector<80x32xbf16>
    %c7 = arith.constant 7 : index
    %c0_39 = arith.constant 0 : index
    %c0_40 = arith.constant 0 : index
    %43 = vector.load %arg2[%c7, %c0_39, %c0_40] : memref<9x32x32xbf16, #tpu.memory_space<vmem>>, vector<1x32x32xbf16>
    %44 = vector.shape_cast %43 : vector<1x32x32xbf16> to vector<32x32xbf16>
    %cst_41 = arith.constant dense<0.000000e+00> : vector<80x32xf32>
    %45 = tpu.matmul %42, %44, %cst_41 {dimension_numbers = #tpu.dot_dimension_numbers<[1], [0], [0], [1], [0, 0, 1, 1], [], []>} : vector<80x32xbf16>, vector<32x32xbf16>, vector<80x32xf32> -> vector<80x32xf32>
    %46 = arith.addf %40, %45 : vector<80x32xf32>
    %c0_42 = arith.constant 0 : index
    %c22 = arith.constant 22 : index
    %c0_43 = arith.constant 0 : index
    %47 = vector.load %arg1[%c0_42, %c22, %c0_43] : memref<1x110x32xbf16, #tpu.memory_space<vmem>>, vector<1x80x32xbf16>
    %48 = vector.shape_cast %47 : vector<1x80x32xbf16> to vector<80x32xbf16>
    %c8 = arith.constant 8 : index
    %c0_44 = arith.constant 0 : index
    %c0_45 = arith.constant 0 : index
    %49 = vector.load %arg2[%c8, %c0_44, %c0_45] : memref<9x32x32xbf16, #tpu.memory_space<vmem>>, vector<1x32x32xbf16>
    %50 = vector.shape_cast %49 : vector<1x32x32xbf16> to vector<32x32xbf16>
    %cst_46 = arith.constant dense<0.000000e+00> : vector<80x32xf32>
    %51 = tpu.matmul %48, %50, %cst_46 {dimension_numbers = #tpu.dot_dimension_numbers<[1], [0], [0], [1], [0, 0, 1, 1], [], []>} : vector<80x32xbf16>, vector<32x32xbf16>, vector<80x32xf32> -> vector<80x32xf32>
    %52 = arith.addf %46, %51 : vector<80x32xf32>
    %c0_47 = arith.constant 0 : index
    %c0_48 = arith.constant 0 : index
    %53 = vector.load %arg3[%c0_47, %c0_48] : memref<1x32xf32, #tpu.memory_space<vmem>>, vector<1x32xf32>
    %54 = vector.broadcast %53 : vector<1x32xf32> to vector<80x32xf32>
    %55 = arith.addf %52, %54 : vector<80x32xf32>
    %cst_49 = arith.constant 0.000000e+00 : f32
    %56 = vector.broadcast %cst_49 : f32 to vector<80x32xf32>
    %57 = arith.maximumf %55, %56 : vector<80x32xf32>
    %58 = arith.truncf %57 : vector<80x32xf32> to vector<80x32xbf16>
    %c0_50 = arith.constant 0 : index
    %c0_51 = arith.constant 0 : index
    %59 = vector.load %arg4[%c0_50, %c0_51] : memref<32x15xbf16, #tpu.memory_space<vmem>>, vector<32x15xbf16>
    %cst_52 = arith.constant dense<0.000000e+00> : vector<80x15xf32>
    %60 = tpu.matmul %58, %59, %cst_52 {dimension_numbers = #tpu.dot_dimension_numbers<[1], [0], [0], [1], [0, 0, 1, 1], [], []>} : vector<80x32xbf16>, vector<32x15xbf16>, vector<80x15xf32> -> vector<80x15xf32>
    %c0_53 = arith.constant 0 : index
    %c0_54 = arith.constant 0 : index
    %61 = vector.load %arg5[%c0_53, %c0_54] : memref<1x15xf32, #tpu.memory_space<vmem>>, vector<1x15xf32>
    %62 = vector.broadcast %61 : vector<1x15xf32> to vector<80x15xf32>
    %63 = arith.addf %60, %62 : vector<80x15xf32>
    %c0_55 = arith.constant 0 : index
    %c0_56 = arith.constant 0 : index
    %c0_57 = arith.constant 0 : index
    %64 = vector.load %arg6[%c0_55, %c0_56, %c0_57] : memref<1x80x15xf32, #tpu.memory_space<vmem>>, vector<1x80x15xf32>
    %65 = vector.shape_cast %64 : vector<1x80x15xf32> to vector<80x15xf32>
    %66 = vector.shape_cast %63 : vector<80x15xf32> to vector<1x80x15xf32>
    tpu.vector_store %arg6[%c0_55, %c0_56, %c0_57], %66 {strides = array<i32>} : memref<1x80x15xf32, #tpu.memory_space<vmem>>, vector<1x80x15xf32>,
    return
  }
  func.func @transform_0(%arg0: i32) -> (i32, i32, i32) {
    %c0_i32 = arith.constant 0 : i32
    %c0_i32_0 = arith.constant 0 : i32
    %c0_i32_1 = arith.constant 0 : i32
    return %arg0, %c0_i32, %c0_i32_0 : i32, i32, i32
  }
  func.func @transform_1(%arg0: i32) -> (i32, i32, i32) {
    %c0_i32 = arith.constant 0 : i32
    %c0_i32_0 = arith.constant 0 : i32
    %c0_i32_1 = arith.constant 0 : i32
    %c0_i32_2 = arith.constant 0 : i32
    return %c0_i32, %c0_i32_0, %c0_i32_1 : i32, i32, i32
  }
  func.func @transform_2(%arg0: i32) -> (i32, i32) {
    %c0_i32 = arith.constant 0 : i32
    %c0_i32_0 = arith.constant 0 : i32
    %c0_i32_1 = arith.constant 0 : i32
    return %c0_i32, %c0_i32_0 : i32, i32
  }
  func.func @transform_3(%arg0: i32) -> (i32, i32) {
    %c0_i32 = arith.constant 0 : i32
    %c0_i32_0 = arith.constant 0 : i32
    %c0_i32_1 = arith.constant 0 : i32
    return %c0_i32, %c0_i32_0 : i32, i32
  }
  func.func @transform_4(%arg0: i32) -> (i32, i32) {
    %c0_i32 = arith.constant 0 : i32
    %c0_i32_0 = arith.constant 0 : i32
    %c0_i32_1 = arith.constant 0 : i32
    return %c0_i32, %c0_i32_0 : i32, i32
  }
  func.func @transform_5(%arg0: i32) -> (i32, i32, i32) {
    %c0_i32 = arith.constant 0 : i32
    %c0_i32_0 = arith.constant 0 : i32
    %c0_i32_1 = arith.constant 0 : i32
    return %arg0, %c0_i32, %c0_i32_0 : i32, i32, i32
  }
}

module attributes {stable_mosaic.version = 11 : i64} {
  func.func @_det_head_kernel(%arg0: i32, %arg1: memref<8x512xbf16, #tpu.memory_space<vmem>>, %arg2: memref<512x64xbf16, #tpu.memory_space<vmem>>, %arg3: memref<1x64xf32, #tpu.memory_space<vmem>>, %arg4: memref<64x64xbf16, #tpu.memory_space<vmem>>, %arg5: memref<1x64xf32, #tpu.memory_space<vmem>>, %arg6: memref<64x37xbf16, #tpu.memory_space<vmem>>, %arg7: memref<1x37xf32, #tpu.memory_space<vmem>>, %arg8: memref<8x37xf32, #tpu.memory_space<vmem>>) attributes {dimension_semantics = [#tpu.dimension_semantics<parallel>], iteration_bounds = array<i64: 2>, scalar_prefetch = 0 : i64, scratch_operands = 0 : i64, tpu.core_type = #tpu.core_type<tc>, window_params = [{transform_indices = @transform_0, window_bounds = array<i64: 8, 512>}, {pipeline_mode = #tpu.pipeline_mode<synchronous>, transform_indices = @transform_1, window_bounds = array<i64: 512, 64>}, {pipeline_mode = #tpu.pipeline_mode<synchronous>, transform_indices = @transform_2, window_bounds = array<i64: 1, 64>}, {pipeline_mode = #tpu.pipeline_mode<synchronous>, transform_indices = @transform_3, window_bounds = array<i64: 64, 64>}, {pipeline_mode = #tpu.pipeline_mode<synchronous>, transform_indices = @transform_4, window_bounds = array<i64: 1, 64>}, {pipeline_mode = #tpu.pipeline_mode<synchronous>, transform_indices = @transform_5, window_bounds = array<i64: 64, 37>}, {pipeline_mode = #tpu.pipeline_mode<synchronous>, transform_indices = @transform_6, window_bounds = array<i64: 1, 37>}, {transform_indices = @transform_7, window_bounds = array<i64: 8, 37>}]} {
    %c0 = arith.constant 0 : index
    %c0_0 = arith.constant 0 : index
    %0 = vector.load %arg1[%c0, %c0_0] : memref<8x512xbf16, #tpu.memory_space<vmem>>, vector<8x512xbf16>
    %c0_1 = arith.constant 0 : index
    %c0_2 = arith.constant 0 : index
    %1 = vector.load %arg2[%c0_1, %c0_2] : memref<512x64xbf16, #tpu.memory_space<vmem>>, vector<512x64xbf16>
    %cst = arith.constant dense<0.000000e+00> : vector<8x64xf32>
    %2 = tpu.matmul %0, %1, %cst {dimension_numbers = #tpu.dot_dimension_numbers<[1], [0], [0], [1], [0, 0, 1, 1], [], []>} : vector<8x512xbf16>, vector<512x64xbf16>, vector<8x64xf32> -> vector<8x64xf32>
    %c0_3 = arith.constant 0 : index
    %c0_4 = arith.constant 0 : index
    %3 = vector.load %arg3[%c0_3, %c0_4] : memref<1x64xf32, #tpu.memory_space<vmem>>, vector<1x64xf32>
    %4 = vector.broadcast %3 : vector<1x64xf32> to vector<8x64xf32>
    %5 = arith.addf %2, %4 : vector<8x64xf32>
    %cst_5 = arith.constant 0.000000e+00 : f32
    %6 = vector.broadcast %cst_5 : f32 to vector<8x64xf32>
    %7 = arith.maximumf %5, %6 : vector<8x64xf32>
    %8 = arith.truncf %7 : vector<8x64xf32> to vector<8x64xbf16>
    %c0_6 = arith.constant 0 : index
    %c0_7 = arith.constant 0 : index
    %9 = vector.load %arg4[%c0_6, %c0_7] : memref<64x64xbf16, #tpu.memory_space<vmem>>, vector<64x64xbf16>
    %cst_8 = arith.constant dense<0.000000e+00> : vector<8x64xf32>
    %10 = tpu.matmul %8, %9, %cst_8 {dimension_numbers = #tpu.dot_dimension_numbers<[1], [0], [0], [1], [0, 0, 1, 1], [], []>} : vector<8x64xbf16>, vector<64x64xbf16>, vector<8x64xf32> -> vector<8x64xf32>
    %c0_9 = arith.constant 0 : index
    %c0_10 = arith.constant 0 : index
    %11 = vector.load %arg5[%c0_9, %c0_10] : memref<1x64xf32, #tpu.memory_space<vmem>>, vector<1x64xf32>
    %12 = vector.broadcast %11 : vector<1x64xf32> to vector<8x64xf32>
    %13 = arith.addf %10, %12 : vector<8x64xf32>
    %cst_11 = arith.constant 0.000000e+00 : f32
    %14 = vector.broadcast %cst_11 : f32 to vector<8x64xf32>
    %15 = arith.maximumf %13, %14 : vector<8x64xf32>
    %16 = arith.truncf %15 : vector<8x64xf32> to vector<8x64xbf16>
    %c0_12 = arith.constant 0 : index
    %c0_13 = arith.constant 0 : index
    %17 = vector.load %arg6[%c0_12, %c0_13] : memref<64x37xbf16, #tpu.memory_space<vmem>>, vector<64x37xbf16>
    %cst_14 = arith.constant dense<0.000000e+00> : vector<8x37xf32>
    %18 = tpu.matmul %16, %17, %cst_14 {dimension_numbers = #tpu.dot_dimension_numbers<[1], [0], [0], [1], [0, 0, 1, 1], [], []>} : vector<8x64xbf16>, vector<64x37xbf16>, vector<8x37xf32> -> vector<8x37xf32>
    %c0_15 = arith.constant 0 : index
    %c0_16 = arith.constant 0 : index
    %19 = vector.load %arg7[%c0_15, %c0_16] : memref<1x37xf32, #tpu.memory_space<vmem>>, vector<1x37xf32>
    %20 = vector.broadcast %19 : vector<1x37xf32> to vector<8x37xf32>
    %21 = arith.addf %18, %20 : vector<8x37xf32>
    %c0_17 = arith.constant 0 : index
    %c0_18 = arith.constant 0 : index
    %22 = vector.load %arg8[%c0_17, %c0_18] : memref<8x37xf32, #tpu.memory_space<vmem>>, vector<8x37xf32>
    tpu.vector_store %arg8[%c0_17, %c0_18], %21 {strides = array<i32>} : memref<8x37xf32, #tpu.memory_space<vmem>>, vector<8x37xf32>,
    return
  }
  func.func @transform_0(%arg0: i32) -> (i32, i32) {
    %c0_i32 = arith.constant 0 : i32
    %c0_i32_0 = arith.constant 0 : i32
    return %arg0, %c0_i32 : i32, i32
  }
  func.func @transform_1(%arg0: i32) -> (i32, i32) {
    %c0_i32 = arith.constant 0 : i32
    %c0_i32_0 = arith.constant 0 : i32
    %c0_i32_1 = arith.constant 0 : i32
    return %c0_i32, %c0_i32_0 : i32, i32
  }
  func.func @transform_2(%arg0: i32) -> (i32, i32) {
    %c0_i32 = arith.constant 0 : i32
    %c0_i32_0 = arith.constant 0 : i32
    %c0_i32_1 = arith.constant 0 : i32
    return %c0_i32, %c0_i32_0 : i32, i32
  }
  func.func @transform_3(%arg0: i32) -> (i32, i32) {
    %c0_i32 = arith.constant 0 : i32
    %c0_i32_0 = arith.constant 0 : i32
    %c0_i32_1 = arith.constant 0 : i32
    return %c0_i32, %c0_i32_0 : i32, i32
  }
  func.func @transform_4(%arg0: i32) -> (i32, i32) {
    %c0_i32 = arith.constant 0 : i32
    %c0_i32_0 = arith.constant 0 : i32
    %c0_i32_1 = arith.constant 0 : i32
    return %c0_i32, %c0_i32_0 : i32, i32
  }
  func.func @transform_5(%arg0: i32) -> (i32, i32) {
    %c0_i32 = arith.constant 0 : i32
    %c0_i32_0 = arith.constant 0 : i32
    %c0_i32_1 = arith.constant 0 : i32
    return %c0_i32, %c0_i32_0 : i32, i32
  }
  func.func @transform_6(%arg0: i32) -> (i32, i32) {
    %c0_i32 = arith.constant 0 : i32
    %c0_i32_0 = arith.constant 0 : i32
    %c0_i32_1 = arith.constant 0 : i32
    return %c0_i32, %c0_i32_0 : i32, i32
  }
  func.func @transform_7(%arg0: i32) -> (i32, i32) {
    %c0_i32 = arith.constant 0 : i32
    %c0_i32_0 = arith.constant 0 : i32
    return %arg0, %c0_i32 : i32, i32
  }
}

</mosaic_0001>

<llo_original>
// kernel: _lambda_.4
$region0: #{_lambda_.4}
  #allocation0 [shape = 'u32[]', space=smem, size = 0x4, offset = 0x4, fixed_abs, tag = 'smem constant byte address 0x4 - core index']
  #allocation1 [shape = 'u32[144,128]{1,0:T(1,128)}', space=vmem, size = 0x12000, scoped, tag = 'internal scratch']
  %s0 = inlined_call_operand.vmem [shape: bf16[2,306,12], index: 0, kind: input, shape index: {}]
  %s1 = inlined_call_operand.vmem [shape: bf16[4,12,16], index: 1, kind: input, shape index: {}]
  %s2 = inlined_call_operand.vmem [shape: f32[1,16], index: 2, kind: input, shape index: {}]
  %s3 = inlined_call_operand.vmem [shape: bf16[2,272,16], index: 3, kind: output, shape index: {}]
  %s4 = sld [smem:[#allocation0]]
  $region45: #{_lambda_.4} parent=0
    _
  %s6 = ssub.s32 1, %s4
  %s7 = scalar_select 0, %s6, %s4
  loop: start=0, step=1, limit=4
  $region2: #{_lambda_.4} parent=0 // loop_pre_header
    _
  $region3: #{_lambda_.4} parent=0 // loop_header
    %s9 = sphi 0, %s13
    %p10 = scmp.ge.s32.totalorder %s9, 4
    %s19 = sphi 0, %s21
    %s22 = sphi 0, %s19
    %s23 = sphi 0, %s22
    %s39 = sphi 0, %s23
    %s43 = sphi 0, %s43
    %s45 = sphi 0, %s43
    %s46 = sphi 0, %s45
    %s60 = sphi 0, %s46
    %s64 = sphi 0, %s64
    %s66 = sphi 0, %s64
    %s67 = sphi 0, %s66
    %s81 = sphi 0, %s67
    %s87 = sphi 0, %s89
    %s90 = sphi 0, %s87
    %s91 = sphi 0, %s90
    %s107 = sphi 0, %s91
  $region4: #{_lambda_.4} parent=0 // loop_header_branch
    %12 = sbr.rel (%p10) target = $region8
  $region5: #{_lambda_.4} parent=0 // loop_body
    %s14 = ssub.s32 %s9, 1
    %s15 = ssub.s32 %s9, 2
    %s16 = sadd.s32 %s9, 1
    %s17 = ssub.s32 %s9, %s16
    %p18 = scmp.eq.s32.totalorder %s17, 0
    %s20 = sadd.s32 %s19, 1
    %s21 = scalar_select %p18, %s19, %s20
    %p24 = pneg %p18
    %p25 = scmp.eq.s32.totalorder %s9, 1
    %p26 = por %p24, %p25
    %p27 = scmp.ne.s32.totalorder %s19, %s22
    %p28 = scmp.eq.s32.totalorder %s9, 0
    %p29 = por %p27, %p28
    %p30 = scmp.ne.s32.totalorder %s19, %s22
    %p31 = scmp.eq.s32.totalorder %s14, 1
    %p32 = por %p30, %p31
    %p33 = scmp.ne.s32.totalorder %s22, %s23
    %p34 = scmp.eq.s32.totalorder %s14, 0
    %p35 = por %p33, %p34
    %p36 = scmp.ne.s32.totalorder %s22, %s23
    %p37 = scmp.eq.s32.totalorder %s15, 1
    %p38 = por %p36, %p37
    %p40 = scmp.ne.s32.totalorder %s23, %s39
    %p41 = scmp.eq.s32.totalorder %s15, 0
    %p42 = por %p40, %p41
    %s44 = sadd.s32 %s43, 1
    %p47 = scmp.eq.s32.totalorder %s9, 1
    %p48 = scmp.ne.s32.totalorder %s43, %s45
    %p49 = scmp.eq.s32.totalorder %s9, 0
    %p50 = por %p48, %p49
    %p51 = scmp.ne.s32.totalorder %s43, %s45
    %p52 = scmp.eq.s32.totalorder %s14, 1
    %p53 = por %p51, %p52
    %p54 = scmp.ne.s32.totalorder %s45, %s46
    %p55 = scmp.eq.s32.totalorder %s14, 0
    %p56 = por %p54, %p55
    %p57 = scmp.ne.s32.totalorder %s45, %s46
    %p58 = scmp.eq.s32.totalorder %s15, 1
    %p59 = por %p57, %p58
    %p61 = scmp.ne.s32.totalorder %s46, %s60
    %p62 = scmp.eq.s32.totalorder %s15, 0
    %p63 = por %p61, %p62
    %s65 = sadd.s32 %s64, 1
    %p68 = scmp.eq.s32.totalorder %s9, 1
    %p69 = scmp.ne.s32.totalorder %s64, %s66
    %p70 = scmp.eq.s32.totalorder %s9, 0
    %p71 = por %p69, %p70
    %p72 = scmp.ne.s32.totalorder %s64, %s66
    %p73 = scmp.eq.s32.totalorder %s14, 1
    %p74 = por %p72, %p73
    %p75 = scmp.ne.s32.totalorder %s66, %s67
    %p76 = scmp.eq.s32.totalorder %s14, 0
    %p77 = por %p75, %p76
    %p78 = scmp.ne.s32.totalorder %s66, %s67
    %p79 = scmp.eq.s32.totalorder %s15, 1
    %p80 = por %p78, %p79
    %p82 = scmp.ne.s32.totalorder %s67, %s81
    %p83 = scmp.eq.s32.totalorder %s15, 0
    %p84 = por %p82, %p83
    %s85 = ssub.s32 %s9, %s16
    %p86 = scmp.eq.s32.totalorder %s85, 0
    %s88 = sadd.s32 %s87, 1
    %s89 = scalar_select %p86, %s87, %s88
    %p92 = pneg %p86
    %p93 = scmp.eq.s32.totalorder %s9, 1
    %p94 = por %p92, %p93
    %p95 = scmp.ne.s32.totalorder %s87, %s90
    %p96 = scmp.eq.s32.totalorder %s9, 0
    %p97 = por %p95, %p96
    %p98 = scmp.ne.s32.totalorder %s87, %s90
    %p99 = scmp.eq.s32.totalorder %s14, 1
    %p100 = por %p98, %p99
    %p101 = scmp.ne.s32.totalorder %s90, %s91
    %p102 = scmp.eq.s32.totalorder %s14, 0
    %p103 = por %p101, %p102
    %p104 = scmp.ne.s32.totalorder %s90, %s91
    %p105 = scmp.eq.s32.totalorder %s15, 1
    %p106 = por %p104, %p105
    %p108 = scmp.ne.s32.totalorder %s91, %s107
    %p109 = scmp.eq.s32.totalorder %s15, 0
    %p110 = por %p108, %p109
    %p111 = scmp.le.s32.totalorder 1, %s9
    %p112 = scmp.lt.s32.totalorder %s9, 3
    %p113 = pnand %p111, %p112
    %p114 = pneg %p113
    // Predicated region
    $region9: #{_lambda_.4} parent=5 // pred_check
      _
    $region10: #{_lambda_.4} parent=5 // pred_check_branch
      %116 = sbr.rel (%p113) target = $region12
    $region11: #{_lambda_.4} parent=5 // pred_region
      %s117 = ssub.s32 %s9, 1
      // Predicated region
      $region13: #{_lambda_.4} parent=11 // pred_check
        %p118 = pneg %p56
      $region14: #{_lambda_.4} parent=11 // pred_check_branch
        %120 = sbr.rel (%p118) target = $region16
      $region15: #{_lambda_.4} parent=11 // pred_region
        _
      $region16: #{_lambda_.4} parent=11 // pred_fallthru
        _
      // Predicated region
      $region17: #{_lambda_.4} parent=11 // pred_check
        %p121 = pneg %p77
      $region18: #{_lambda_.4} parent=11 // pred_check_branch
        %123 = sbr.rel (%p121) target = $region20
      $region19: #{_lambda_.4} parent=11 // pred_region
        _
      $region20: #{_lambda_.4} parent=11 // pred_fallthru
        _
    $region12: #{_lambda_.4} parent=5 // pred_fallthru
      _
    %p124 = scmp.lt.s32.totalorder %s9, 2
    // Predicated region
    $region21: #{_lambda_.4} parent=5 // pred_check
      %p125 = pneg %p124
    $region22: #{_lambda_.4} parent=5 // pred_check_branch
      %127 = sbr.rel (%p125) target = $region24
    $region23: #{_lambda_.4} parent=5 // pred_region
      // Predicated region
      $region25: #{_lambda_.4} parent=23 // pred_check
        %p128 = pneg %p29
      $region26: #{_lambda_.4} parent=23 // pred_check_branch
        %130 = sbr.rel (%p128) target = $region28
      $region27: #{_lambda_.4} parent=23 // pred_region
        %p131 = scmp.lt.s32.totalorder %s9, 1
        %s132 = scalar_select %p131, %s9, 1
        %s133 = smul.addr %s132, 39
        %s134 = smul.addr %s133, 4
        %s135 = scalar_lea.vmem %s0, %s134
      $region28: #{_lambda_.4} parent=23 // pred_fallthru
        _
    $region24: #{_lambda_.4} parent=5 // pred_fallthru
      _
    %p136 = scmp.le.s32.totalorder 1, %s9
    %p137 = scmp.lt.s32.totalorder %s9, 3
    %p138 = pnand %p136, %p137
    %p139 = pneg %p138
    // Predicated region
    $region29: #{_lambda_.4} parent=5 // pred_check
      _
    $region30: #{_lambda_.4} parent=5 // pred_check_branch
      %141 = sbr.rel (%p138) target = $region32
    $region31: #{_lambda_.4} parent=5 // pred_region
      %s142 = ssub.s32 %s9, 1
      %p143 = scmp.lt.s32.totalorder %s14, 1
      %s144 = scalar_select %p143, %s14, 1
      %s145 = smul.addr %s144, 39
      %s146 = smul.addr %s145, 4
      %s147 = scalar_lea.vmem %s0, %s146
      %p148 = pneg %p35
      %p149 = pneg %p32
      %p150 = pneg %p56
      %p151 = pneg %p53
      %p152 = pneg %p77
      %p153 = pneg %p74
      %p154 = pneg %p103
      %p155 = pneg %p100
      %p156 = scmp.lt.s32.totalorder %s14, 1
      %s157 = scalar_select %p156, %s14, 1
      %s158 = smul.addr %s157, 34
      %s159 = smul.addr %s158, 4
      %s160 = scalar_lea.vmem %s3, %s159
      %p161 = scmp.lt.s32.totalorder %s14, 1
      %s162 = scalar_select %p161, %s14, 1
      %s163 = smul.addr %s162, 39
      %s164 = smul.addr %s163, 4
      %s165 = scalar_lea.vmem %s0, %s164
      %p166 = scmp.lt.s32.totalorder %s14, 1
      %s167 = scalar_select %p166, %s14, 1
      %s168 = smul.addr %s167, 34
      %s169 = smul.addr %s168, 4
      %s170 = scalar_lea.vmem %s3, %s169
      %v172 = vld [vmem:[%s165] sm:$0xf]
      %v173 = vld [vmem:[%s165 + $0x4] sm:$0xf]
      %v174 = vld [vmem:[%s165 + $0x8] sm:$0xf]
      %v175 = vld [vmem:[%s165 + $0xc] sm:$0xf]
      %v176 = vld [vmem:[%s165 + $0x10] sm:$0xf]
      %v177 = vld [vmem:[%s165 + $0x14] sm:$0xf]
      %v178 = vld [vmem:[%s165 + $0x18] sm:$0xf]
      %v179 = vld [vmem:[%s165 + $0x1c] sm:$0xf]
      %v180 = vld [vmem:[%s165 + $0x20] sm:$0xf]
      %v181 = vld [vmem:[%s165 + $0x24] sm:$0xf]
      %v182 = vld [vmem:[%s165 + $0x28] sm:$0xf]
      %v183 = vld [vmem:[%s165 + $0x2c] sm:$0xf]
      %v184 = vld [vmem:[%s165 + $0x30] sm:$0xf]
      %v185 = vld [vmem:[%s165 + $0x34] sm:$0xf]
      %v186 = vld [vmem:[%s165 + $0x38] sm:$0xf]
      %v187 = vld [vmem:[%s165 + $0x3c] sm:$0xf]
      %v188 = vld [vmem:[%s165 + $0x40] sm:$0xf]
      %v189 = vld [vmem:[%s165 + $0x44] sm:$0xf]
      %v190 = vld [vmem:[%s165 + $0x48] sm:$0xf]
      %v191 = vld [vmem:[%s165 + $0x4c] sm:$0xf]
      %v192 = vld [vmem:[%s165 + $0x50] sm:$0xf]
      %v193 = vld [vmem:[%s165 + $0x54] sm:$0xf]
      %v194 = vld [vmem:[%s165 + $0x58] sm:$0xf]
      %v195 = vld [vmem:[%s165 + $0x5c] sm:$0xf]
      %v196 = vld [vmem:[%s165 + $0x60] sm:$0xf]
      %v197 = vld [vmem:[%s165 + $0x64] sm:$0xf]
      %v198 = vld [vmem:[%s165 + $0x68] sm:$0xf]
      %v199 = vld [vmem:[%s165 + $0x6c] sm:$0xf]
      %v200 = vld [vmem:[%s165 + $0x70] sm:$0xf]
      %v201 = vld [vmem:[%s165 + $0x74] sm:$0xf]
      %v202 = vld [vmem:[%s165 + $0x78] sm:$0xf]
      %v203 = vld [vmem:[%s165 + $0x7c] sm:$0xf]
      %v204 = vld [vmem:[%s165 + $0x80] sm:$0xf]
      %v205 = vld [vmem:[%s165 + $0x84] sm:$0xf]
      %v206 = vld [vmem:[%s1] sm:$0xf]
      %v207 = vld [vmem:[%s1 + $0x4] sm:$0x3]
      %v208 = vld [vmem:[%s165 + $0x88] sm:$0x1]
      %s209 = scalar_lea.vmem %s1, 8
      %v210 = vld [vmem:[%s209] sm:$0xf]
      %v211 = vld [vmem:[%s209 + $0x4] sm:$0x3]
      %v247 = vunpack.c.l.b16 %v172
      %v248 = vunpack.c.l.b16 %v173
      %v249 = vunpack.c.l.b16 %v174
      %v250 = vunpack.c.l.b16 %v175
      %v251 = vunpack.c.l.b16 %v176
      %v252 = vunpack.c.l.b16 %v177
      %v253 = vunpack.c.l.b16 %v178
      %v254 = vunpack.c.l.b16 %v179
      %v255 = vunpack.c.l.b16 %v180
      %v256 = vunpack.c.l.b16 %v181
      %v257 = vunpack.c.l.b16 %v182
      %v258 = vunpack.c.l.b16 %v183
      %v259 = vunpack.c.l.b16 %v184
      %v260 = vunpack.c.l.b16 %v185
      %v261 = vunpack.c.l.b16 %v186
      %v262 = vunpack.c.l.b16 %v187
      %v263 = vunpack.c.l.b16 %v188
      %v264 = vunpack.c.l.b16 %v189
      %v265 = vunpack.c.l.b16 %v190
      %v266 = vunpack.c.l.b16 %v191
      %v267 = vunpack.c.l.b16 %v192
      %v268 = vunpack.c.l.b16 %v193
      %v269 = vunpack.c.l.b16 %v194
      %v270 = vunpack.c.l.b16 %v195
      %v271 = vunpack.c.l.b16 %v196
      %v272 = vunpack.c.l.b16 %v197
      %v273 = vunpack.c.l.b16 %v198
      %v274 = vunpack.c.l.b16 %v199
      %v275 = vunpack.c.l.b16 %v200
      %v276 = vunpack.c.l.b16 %v201
      %v277 = vunpack.c.l.b16 %v202
      %v278 = vunpack.c.l.b16 %v203
      %v279 = vunpack.c.l.b16 %v204
      %v280 = vunpack.c.l.b16 %v205
      %v281 = vunpack.c.l.b16 %v208
      %v282 = vpack.c.b16 %v248, %v247
      %v283 = vpack.c.b16 %v250, %v249
      %v284 = vpack.c.b16 %v252, %v251
      %v285 = vpack.c.b16 %v254, %v253
      %v286 = vpack.c.b16 %v256, %v255
      %v287 = vpack.c.b16 %v258, %v257
      %v288 = vpack.c.b16 %v260, %v259
      %v289 = vpack.c.b16 %v262, %v261
      %v290 = vpack.c.b16 %v264, %v263
      %v291 = vpack.c.b16 %v266, %v265
      %v292 = vpack.c.b16 %v268, %v267
      %v293 = vpack.c.b16 %v270, %v269
      %v294 = vpack.c.b16 %v272, %v271
      %v295 = vpack.c.b16 %v274, %v273
      %v296 = vpack.c.b16 %v276, %v275
      %v297 = vpack.c.b16 %v278, %v277
      %v298 = vpack.c.b16 %v280, %v279
      %v299 = vpack.c.b16 %v281, %v281
      %vm300 = vsmask.f32 7424
      %v302 = vshrl.u32 %v282, 16
      %v304 = vshll.u32 %v282, 16
      %v306 = vrot.slane %v304, 1
      %v307 = vor.u32 %v302, %v306
      %v309 = vshll.u32 %v283, 16
      %v311 = vrot.slane %v309, 1
      %v312 = vsel %vm300, %v307, %v311
      %v313 = vshrl.u32 %v283, 16
      %v315 = vor.u32 %v313, %v311
      %v317 = vshll.u32 %v284, 16
      %v319 = vrot.slane %v317, 1
      %v320 = vsel %vm300, %v315, %v319
      %v321 = vshrl.u32 %v284, 16
      %v323 = vor.u32 %v321, %v319
      %v325 = vshll.u32 %v285, 16
      %v327 = vrot.slane %v325, 1
      %v328 = vsel %vm300, %v323, %v327
      %v329 = vshrl.u32 %v285, 16
      %v331 = vor.u32 %v329, %v327
      %v333 = vshll.u32 %v286, 16
      %v335 = vrot.slane %v333, 1
      %v336 = vsel %vm300, %v331, %v335
      %v337 = vshrl.u32 %v286, 16
      %v339 = vor.u32 %v337, %v335
      %v341 = vshll.u32 %v287, 16
      %v343 = vrot.slane %v341, 1
      %v344 = vsel %vm300, %v339, %v343
      %v345 = vshrl.u32 %v287, 16
      %v347 = vor.u32 %v345, %v343
      %v349 = vshll.u32 %v288, 16
      %v351 = vrot.slane %v349, 1
      %v352 = vsel %vm300, %v347, %v351
      %v353 = vshrl.u32 %v288, 16
      %v355 = vor.u32 %v353, %v351
      %v357 = vshll.u32 %v289, 16
      %v359 = vrot.slane %v357, 1
      %v360 = vsel %vm300, %v355, %v359
      %v361 = vshrl.u32 %v289, 16
      %v363 = vor.u32 %v361, %v359
      %v365 = vshll.u32 %v290, 16
      %v367 = vrot.slane %v365, 1
      %v368 = vsel %vm300, %v363, %v367
      %v369 = vshrl.u32 %v290, 16
      %v371 = vor.u32 %v369, %v367
      %v373 = vshll.u32 %v291, 16
      %v375 = vrot.slane %v373, 1
      %v376 = vsel %vm300, %v371, %v375
      %v377 = vshrl.u32 %v291, 16
      %v379 = vor.u32 %v377, %v375
      %v381 = vshll.u32 %v292, 16
      %v383 = vrot.slane %v381, 1
      %v384 = vsel %vm300, %v379, %v383
      %v385 = vshrl.u32 %v292, 16
      %v387 = vor.u32 %v385, %v383
      %v389 = vshll.u32 %v293, 16
      %v391 = vrot.slane %v389, 1
      %v392 = vsel %vm300, %v387, %v391
      %v393 = vshrl.u32 %v293, 16
      %v395 = vor.u32 %v393, %v391
      %v397 = vshll.u32 %v294, 16
      %v399 = vrot.slane %v397, 1
      %v400 = vsel %vm300, %v395, %v399
      %v401 = vshrl.u32 %v294, 16
      %v403 = vor.u32 %v401, %v399
      %v405 = vshll.u32 %v295, 16
      %v407 = vrot.slane %v405, 1
      %v408 = vsel %vm300, %v403, %v407
      %v409 = vshrl.u32 %v295, 16
      %v411 = vor.u32 %v409, %v407
      %v413 = vshll.u32 %v296, 16
      %v415 = vrot.slane %v413, 1
      %v416 = vsel %vm300, %v411, %v415
      %v417 = vshrl.u32 %v296, 16
      %v419 = vor.u32 %v417, %v415
      %v421 = vshll.u32 %v297, 16
      %v423 = vrot.slane %v421, 1
      %v424 = vsel %vm300, %v419, %v423
      %v425 = vshrl.u32 %v297, 16
      %v427 = vor.u32 %v425, %v423
      %v429 = vshll.u32 %v298, 16
      %v431 = vrot.slane %v429, 1
      %v432 = vsel %vm300, %v427, %v431
      %v433 = vshrl.u32 %v298, 16
      %v435 = vor.u32 %v433, %v431
      %v437 = vshll.u32 %v299, 16
      %v439 = vrot.slane %v437, 1
      %v440 = vsel %vm300, %v435, %v439
      %v443 = vunpack.c.l.b16 %v210
      %v444 = vunpack.c.l.b16 %v211
      %v445 = vpack.c.b16 %v444, %v443
      %vm446 = vcmask 97280
      %v448 = vsel %vm446, %v312, 0
      %v451 = vsel %vm446, %v320, 0
      %v454 = vsel %vm446, %v328, 0
      %v457 = vsel %vm446, %v336, 0
      %v460 = vsel %vm446, %v344, 0
      %v463 = vsel %vm446, %v352, 0
      %v466 = vsel %vm446, %v360, 0
      %v469 = vsel %vm446, %v368, 0
      %v472 = vsel %vm446, %v376, 0
      %v475 = vsel %vm446, %v384, 0
      %v478 = vsel %vm446, %v392, 0
      %v481 = vsel %vm446, %v400, 0
      %v484 = vsel %vm446, %v408, 0
      %v487 = vsel %vm446, %v416, 0
      %v490 = vsel %vm446, %v424, 0
      %v493 = vsel %vm446, %v432, 0
      %v496 = vsel %vm446, %v440, 0
      %vm498 = vcmask 1045504
      %v500 = vsel %vm498, %v445, 0
      %502 = vmatprep.subr.bf16.mxu0 0
      %503 = vmatpush1.bf16.msra.mxu0 0
      %504 = vmatprep.subr.bf16.mxu0 0
      %505 = vmatpush1.bf16.msra.mxu0 0
      %506 = vmatprep.subr.bf16.mxu0 0
      %507 = vmatpush1.bf16.msra.mxu0 0
      %508 = vmatprep.subr.bf16.mxu0 0
      %509 = vmatpush1.bf16.msra.mxu0 0
      %510 = vmatprep.subr.bf16.mxu0 0
      %511 = vmatpush1.bf16.msra.mxu0 0
      %512 = vmatprep.subr.bf16.mxu0 0
      %513 = vmatpush1.bf16.msra.mxu0 0
      %514 = vmatprep.subr.bf16.mxu0 0
      %515 = vmatpush1.bf16.msra.mxu0 0
      %516 = vmatprep.subr.bf16.mxu0 0
      %517 = vmatpush1.bf16.msra.mxu0 %v500
      %518 = vmatprep.subr.bf16.mxu0 0
      %519 = vmatpush2.bf16.msra.mxu0 0
      %520 = vmatprep.subr.bf16.mxu0 0
      %521 = vmatpush2.bf16.msra.mxu0 0
      %522 = vmatprep.subr.bf16.mxu0 0
      %523 = vmatpush2.bf16.msra.mxu0 0
      %524 = vmatprep.subr.bf16.mxu0 0
      %525 = vmatpush2.bf16.msra.mxu0 0
      %526 = vmatprep.subr.bf16.mxu0 0
      %527 = vmatpush2.bf16.msra.mxu0 0
      %528 = vmatprep.subr.bf16.mxu0 0
      %529 = vmatpush2.bf16.msra.mxu0 0
      %530 = vmatprep.subr.bf16.mxu0 0
      %531 = vmatpush2.bf16.msra.mxu0 0
      %532 = vmatprep.subr.bf16.mxu0 0
      %533 = vmatpush2.bf16.msra.mxu0 0
      %534 = vmatprep.mubr.bf16.mxu0 0
      %535 = vmatmul.mubr.bf16.gmra.mxu0 %v448
      %v536 = vpop.f32.mrf.mxu0
      %v537 = vadd.f32 0.0, %v536
      %v538 = vpop.f32.mrf.mxu0
      %v539 = vpop.f32.mrf.mxu0
      %v540 = vadd.f32 0.0, %v539
      %v541 = vpop.f32.mrf.mxu0
      %542 = vmatprep.mubr.bf16.mxu0 0
      %543 = vmatmul.mubr.bf16.gmra.mxu0 %v451
      %v544 = vpop.f32.mrf.mxu0
      %v545 = vadd.f32 0.0, %v544
      %v546 = vpop.f32.mrf.mxu0
      %v547 = vpop.f32.mrf.mxu0
      %v548 = vadd.f32 0.0, %v547
      %v549 = vpop.f32.mrf.mxu0
      %550 = vmatprep.mubr.bf16.mxu0 0
      %551 = vmatmul.mubr.bf16.gmra.mxu0 %v454
      %v552 = vpop.f32.mrf.mxu0
      %v553 = vadd.f32 0.0, %v552
      %v554 = vpop.f32.mrf.mxu0
      %v555 = vpop.f32.mrf.mxu0
      %v556 = vadd.f32 0.0, %v555
      %v557 = vpop.f32.mrf.mxu0
      %558 = vmatprep.mubr.bf16.mxu0 0
      %559 = vmatmul.mubr.bf16.gmra.mxu0 %v457
      %v560 = vpop.f32.mrf.mxu0
      %v561 = vadd.f32 0.0, %v560
      %v562 = vpop.f32.mrf.mxu0
      %v563 = vpop.f32.mrf.mxu0
      %v564 = vadd.f32 0.0, %v563
      %v565 = vpop.f32.mrf.mxu0
      %566 = vmatprep.mubr.bf16.mxu0 0
      %567 = vmatmul.mubr.bf16.gmra.mxu0 %v460
      %v568 = vpop.f32.mrf.mxu0
      %v569 = vadd.f32 0.0, %v568
      %v570 = vpop.f32.mrf.mxu0
      %v571 = vpop.f32.mrf.mxu0
      %v572 = vadd.f32 0.0, %v571
      %v573 = vpop.f32.mrf.mxu0
      %574 = vmatprep.mubr.bf16.mxu0 0
      %575 = vmatmul.mubr.bf16.gmra.mxu0 %v463
      %v576 = vpop.f32.mrf.mxu0
      %v577 = vadd.f32 0.0, %v576
      %v578 = vpop.f32.mrf.mxu0
      %v579 = vpop.f32.mrf.mxu0
      %v580 = vadd.f32 0.0, %v579
      %v581 = vpop.f32.mrf.mxu0
      %582 = vmatprep.mubr.bf16.mxu0 0
      %583 = vmatmul.mubr.bf16.gmra.mxu0 %v466
      %v584 = vpop.f32.mrf.mxu0
      %v585 = vadd.f32 0.0, %v584
      %v586 = vpop.f32.mrf.mxu0
      %v587 = vpop.f32.mrf.mxu0
      %v588 = vadd.f32 0.0, %v587
      %v589 = vpop.f32.mrf.mxu0
      %590 = vmatprep.mubr.bf16.mxu0 0
      %591 = vmatmul.mubr.bf16.gmra.mxu0 %v469
      %v592 = vpop.f32.mrf.mxu0
      %v593 = vadd.f32 0.0, %v592
      %v594 = vpop.f32.mrf.mxu0
      %v595 = vpop.f32.mrf.mxu0
      %v596 = vadd.f32 0.0, %v595
      %v597 = vpop.f32.mrf.mxu0
      %598 = vmatprep.mubr.bf16.mxu0 0
      %599 = vmatmul.mubr.bf16.gmra.mxu0 %v472
      %v600 = vpop.f32.mrf.mxu0
      %v601 = vadd.f32 0.0, %v600
      %v602 = vpop.f32.mrf.mxu0
      %v603 = vpop.f32.mrf.mxu0
      %v604 = vadd.f32 0.0, %v603
      %v605 = vpop.f32.mrf.mxu0
      %606 = vmatprep.mubr.bf16.mxu0 0
      %607 = vmatmul.mubr.bf16.gmra.mxu0 %v475
      %v608 = vpop.f32.mrf.mxu0
      %v609 = vadd.f32 0.0, %v608
      %v610 = vpop.f32.mrf.mxu0
      %v611 = vpop.f32.mrf.mxu0
      %v612 = vadd.f32 0.0, %v611
      %v613 = vpop.f32.mrf.mxu0
      %614 = vmatprep.mubr.bf16.mxu0 0
      %615 = vmatmul.mubr.bf16.gmra.mxu0 %v478
      %v616 = vpop.f32.mrf.mxu0
      %v617 = vadd.f32 0.0, %v616
      %v618 = vpop.f32.mrf.mxu0
      %v619 = vpop.f32.mrf.mxu0
      %v620 = vadd.f32 0.0, %v619
      %v621 = vpop.f32.mrf.mxu0
      %622 = vmatprep.mubr.bf16.mxu0 0
      %623 = vmatmul.mubr.bf16.gmra.mxu0 %v481
      %v624 = vpop.f32.mrf.mxu0
      %v625 = vadd.f32 0.0, %v624
      %v626 = vpop.f32.mrf.mxu0
      %v627 = vpop.f32.mrf.mxu0
      %v628 = vadd.f32 0.0, %v627
      %v629 = vpop.f32.mrf.mxu0
      %630 = vmatprep.mubr.bf16.mxu0 0
      %631 = vmatmul.mubr.bf16.gmra.mxu0 %v484
      %v632 = vpop.f32.mrf.mxu0
      %v633 = vadd.f32 0.0, %v632
      %v634 = vpop.f32.mrf.mxu0
      %v635 = vpop.f32.mrf.mxu0
      %v636 = vadd.f32 0.0, %v635
      %v637 = vpop.f32.mrf.mxu0
      %638 = vmatprep.mubr.bf16.mxu0 0
      %639 = vmatmul.mubr.bf16.gmra.mxu0 %v487
      %v640 = vpop.f32.mrf.mxu0
      %v641 = vadd.f32 0.0, %v640
      %v642 = vpop.f32.mrf.mxu0
      %v643 = vpop.f32.mrf.mxu0
      %v644 = vadd.f32 0.0, %v643
      %v645 = vpop.f32.mrf.mxu0
      %646 = vmatprep.mubr.bf16.mxu0 0
      %647 = vmatmul.mubr.bf16.gmra.mxu0 %v490
      %v648 = vpop.f32.mrf.mxu0
      %v649 = vadd.f32 0.0, %v648
      %v650 = vpop.f32.mrf.mxu0
      %v651 = vpop.f32.mrf.mxu0
      %v652 = vadd.f32 0.0, %v651
      %v653 = vpop.f32.mrf.mxu0
      %654 = vmatprep.mubr.bf16.mxu0 0
      %655 = vmatmul.mubr.bf16.gmra.mxu0 %v493
      %v656 = vpop.f32.mrf.mxu0
      %v657 = vadd.f32 0.0, %v656
      %v658 = vpop.f32.mrf.mxu0
      %v659 = vpop.f32.mrf.mxu0
      %v660 = vadd.f32 0.0, %v659
      %v661 = vpop.f32.mrf.mxu0
      %662 = vmatprep.mubr.bf16.mxu0 0
      %663 = vmatmul.mubr.bf16.gmra.mxu0 %v496
      %v664 = vpop.f32.mrf.mxu0
      %v665 = vadd.f32 0.0, %v664
      %v666 = vpop.f32.mrf.mxu0
      %v667 = vpop.f32.mrf.mxu0
      %v668 = vadd.f32 0.0, %v667
      %v669 = vpop.f32.mrf.mxu0
      %670 = vdwg.mxu0
      %v673 = vunpack.c.l.b16 %v206
      %v674 = vunpack.c.l.b16 %v207
      %v675 = vpack.c.b16 %v674, %v673
      %v676 = vsel %vm446, %v282, 0
      %v678 = vsel %vm446, %v283, 0
      %v680 = vsel %vm446, %v284, 0
      %v682 = vsel %vm446, %v285, 0
      %v684 = vsel %vm446, %v286, 0
      %v686 = vsel %vm446, %v287, 0
      %v688 = vsel %vm446, %v288, 0
      %v690 = vsel %vm446, %v289, 0
      %v692 = vsel %vm446, %v290, 0
      %v694 = vsel %vm446, %v291, 0
      %v696 = vsel %vm446, %v292, 0
      %v698 = vsel %vm446, %v293, 0
      %v700 = vsel %vm446, %v294, 0
      %v702 = vsel %vm446, %v295, 0
      %v704 = vsel %vm446, %v296, 0
      %v706 = vsel %vm446, %v297, 0
      %v708 = vsel %vm446, %v298, 0
      %v711 = vsel %vm498, %v675, 0
      %713 = vmatprep.subr.bf16.mxu0 0
      %714 = vmatpush1.bf16.msra.mxu0 0
      %715 = vmatprep.subr.bf16.mxu0 0
      %716 = vmatpush1.bf16.msra.mxu0 0
      %717 = vmatprep.subr.bf16.mxu0 0
      %718 = vmatpush1.bf16.msra.mxu0 0
      %719 = vmatprep.subr.bf16.mxu0 0
      %720 = vmatpush1.bf16.msra.mxu0 0
      %721 = vmatprep.subr.bf16.mxu0 0
      %722 = vmatpush1.bf16.msra.mxu0 0
      %723 = vmatprep.subr.bf16.mxu0 0
      %724 = vmatpush1.bf16.msra.mxu0 0
      %725 = vmatprep.subr.bf16.mxu0 0
      %726 = vmatpush1.bf16.msra.mxu0 0
      %727 = vmatprep.subr.bf16.mxu0 0
      %728 = vmatpush1.bf16.msra.mxu0 %v711
      %729 = vmatprep.subr.bf16.mxu0 0
      %730 = vmatpush2.bf16.msra.mxu0 0
      %731 = vmatprep.subr.bf16.mxu0 0
      %732 = vmatpush2.bf16.msra.mxu0 0
      %733 = vmatprep.subr.bf16.mxu0 0
      %734 = vmatpush2.bf16.msra.mxu0 0
      %735 = vmatprep.subr.bf16.mxu0 0
      %736 = vmatpush2.bf16.msra.mxu0 0
      %737 = vmatprep.subr.bf16.mxu0 0
      %738 = vmatpush2.bf16.msra.mxu0 0
      %739 = vmatprep.subr.bf16.mxu0 0
      %740 = vmatpush2.bf16.msra.mxu0 0
      %741 = vmatprep.subr.bf16.mxu0 0
      %742 = vmatpush2.bf16.msra.mxu0 0
      %743 = vmatprep.subr.bf16.mxu0 0
      %744 = vmatpush2.bf16.msra.mxu0 0
      %745 = vmatprep.mubr.bf16.mxu0 0
      %746 = vmatmul.mubr.bf16.gmra.mxu0 %v676
      %v747 = vpop.f32.mrf.mxu0
      %v748 = vadd.f32 %v537, %v747
      %v749 = vpop.f32.mrf.mxu0
      %v750 = vpop.f32.mrf.mxu0
      %v751 = vadd.f32 %v540, %v750
      %v752 = vpop.f32.mrf.mxu0
      %753 = vmatprep.mubr.bf16.mxu0 0
      %754 = vmatmul.mubr.bf16.gmra.mxu0 %v678
      %v755 = vpop.f32.mrf.mxu0
      %v756 = vadd.f32 %v545, %v755
      %v757 = vpop.f32.mrf.mxu0
      %v758 = vpop.f32.mrf.mxu0
      %v759 = vadd.f32 %v548, %v758
      %v760 = vpop.f32.mrf.mxu0
      %761 = vmatprep.mubr.bf16.mxu0 0
      %762 = vmatmul.mubr.bf16.gmra.mxu0 %v680
      %v763 = vpop.f32.mrf.mxu0
      %v764 = vadd.f32 %v553, %v763
      %v765 = vpop.f32.mrf.mxu0
      %v766 = vpop.f32.mrf.mxu0
      %v767 = vadd.f32 %v556, %v766
      %v768 = vpop.f32.mrf.mxu0
      %769 = vmatprep.mubr.bf16.mxu0 0
      %770 = vmatmul.mubr.bf16.gmra.mxu0 %v682
      %v771 = vpop.f32.mrf.mxu0
      %v772 = vadd.f32 %v561, %v771
      %v773 = vpop.f32.mrf.mxu0
      %v774 = vpop.f32.mrf.mxu0
      %v775 = vadd.f32 %v564, %v774
      %v776 = vpop.f32.mrf.mxu0
      %777 = vmatprep.mubr.bf16.mxu0 0
      %778 = vmatmul.mubr.bf16.gmra.mxu0 %v684
      %v779 = vpop.f32.mrf.mxu0
      %v780 = vadd.f32 %v569, %v779
      %v781 = vpop.f32.mrf.mxu0
      %v782 = vpop.f32.mrf.mxu0
      %v783 = vadd.f32 %v572, %v782
      %v784 = vpop.f32.mrf.mxu0
      %785 = vmatprep.mubr.bf16.mxu0 0
      %786 = vmatmul.mubr.bf16.gmra.mxu0 %v686
      %v787 = vpop.f32.mrf.mxu0
      %v788 = vadd.f32 %v577, %v787
      %v789 = vpop.f32.mrf.mxu0
      %v790 = vpop.f32.mrf.mxu0
      %v791 = vadd.f32 %v580, %v790
      %v792 = vpop.f32.mrf.mxu0
      %793 = vmatprep.mubr.bf16.mxu0 0
      %794 = vmatmul.mubr.bf16.gmra.mxu0 %v688
      %v795 = vpop.f32.mrf.mxu0
      %v796 = vadd.f32 %v585, %v795
      %v797 = vpop.f32.mrf.mxu0
      %v798 = vpop.f32.mrf.mxu0
      %v799 = vadd.f32 %v588, %v798
      %v800 = vpop.f32.mrf.mxu0
      %801 = vmatprep.mubr.bf16.mxu0 0
      %802 = vmatmul.mubr.bf16.gmra.mxu0 %v690
      %v803 = vpop.f32.mrf.mxu0
      %v804 = vadd.f32 %v593, %v803
      %v805 = vpop.f32.mrf.mxu0
      %v806 = vpop.f32.mrf.mxu0
      %v807 = vadd.f32 %v596, %v806
      %v808 = vpop.f32.mrf.mxu0
      %809 = vmatprep.mubr.bf16.mxu0 0
      %810 = vmatmul.mubr.bf16.gmra.mxu0 %v692
      %v811 = vpop.f32.mrf.mxu0
      %v812 = vadd.f32 %v601, %v811
      %v813 = vpop.f32.mrf.mxu0
      %v814 = vpop.f32.mrf.mxu0
      %v815 = vadd.f32 %v604, %v814
      %v816 = vpop.f32.mrf.mxu0
      %817 = vmatprep.mubr.bf16.mxu0 0
      %818 = vmatmul.mubr.bf16.gmra.mxu0 %v694
      %v819 = vpop.f32.mrf.mxu0
      %v820 = vadd.f32 %v609, %v819
      %v821 = vpop.f32.mrf.mxu0
      %v822 = vpop.f32.mrf.mxu0
      %v823 = vadd.f32 %v612, %v822
      %v824 = vpop.f32.mrf.mxu0
      %825 = vmatprep.mubr.bf16.mxu0 0
      %826 = vmatmul.mubr.bf16.gmra.mxu0 %v696
      %v827 = vpop.f32.mrf.mxu0
      %v828 = vadd.f32 %v617, %v827
      %v829 = vpop.f32.mrf.mxu0
      %v830 = vpop.f32.mrf.mxu0
      %v831 = vadd.f32 %v620, %v830
      %v832 = vpop.f32.mrf.mxu0
      %833 = vmatprep.mubr.bf16.mxu0 0
      %834 = vmatmul.mubr.bf16.gmra.mxu0 %v698
      %v835 = vpop.f32.mrf.mxu0
      %v836 = vadd.f32 %v625, %v835
      %v837 = vpop.f32.mrf.mxu0
      %v838 = vpop.f32.mrf.mxu0
      %v839 = vadd.f32 %v628, %v838
      %v840 = vpop.f32.mrf.mxu0
      %841 = vmatprep.mubr.bf16.mxu0 0
      %842 = vmatmul.mubr.bf16.gmra.mxu0 %v700
      %v843 = vpop.f32.mrf.mxu0
      %v844 = vadd.f32 %v633, %v843
      %v845 = vpop.f32.mrf.mxu0
      %v846 = vpop.f32.mrf.mxu0
      %v847 = vadd.f32 %v636, %v846
      %v848 = vpop.f32.mrf.mxu0
      %849 = vmatprep.mubr.bf16.mxu0 0
      %850 = vmatmul.mubr.bf16.gmra.mxu0 %v702
      %v851 = vpop.f32.mrf.mxu0
      %v852 = vadd.f32 %v641, %v851
      %v853 = vpop.f32.mrf.mxu0
      %v854 = vpop.f32.mrf.mxu0
      %v855 = vadd.f32 %v644, %v854
      %v856 = vpop.f32.mrf.mxu0
      %857 = vmatprep.mubr.bf16.mxu0 0
      %858 = vmatmul.mubr.bf16.gmra.mxu0 %v704
      %v859 = vpop.f32.mrf.mxu0
      %v860 = vadd.f32 %v649, %v859
      %v861 = vpop.f32.mrf.mxu0
      %v862 = vpop.f32.mrf.mxu0
      %v863 = vadd.f32 %v652, %v862
      %v864 = vpop.f32.mrf.mxu0
      %865 = vmatprep.mubr.bf16.mxu0 0
      %866 = vmatmul.mubr.bf16.gmra.mxu0 %v706
      %v867 = vpop.f32.mrf.mxu0
      %v868 = vadd.f32 %v657, %v867
      %v869 = vpop.f32.mrf.mxu0
      %v870 = vpop.f32.mrf.mxu0
      %v871 = vadd.f32 %v660, %v870
      %v872 = vpop.f32.mrf.mxu0
      %873 = vmatprep.mubr.bf16.mxu0 0
      %874 = vmatmul.mubr.bf16.gmra.mxu0 %v708
      %v875 = vpop.f32.mrf.mxu0
      %v876 = vadd.f32 %v665, %v875
      %v877 = vpop.f32.mrf.mxu0
      %v878 = vpop.f32.mrf.mxu0
      %v879 = vadd.f32 %v668, %v878
      %v880 = vpop.f32.mrf.mxu0
      %881 = vdwg.mxu0
      %v882 = vld [vmem:[%s165 + $0x8] sm:$0xf]
      %v883 = vld [vmem:[%s165 + $0xc] sm:$0xf]
      %v884 = vld [vmem:[%s165 + $0x10] sm:$0xf]
      %v885 = vld [vmem:[%s165 + $0x14] sm:$0xf]
      %v886 = vld [vmem:[%s165 + $0x18] sm:$0xf]
      %v887 = vld [vmem:[%s165 + $0x1c] sm:$0xf]
      %v888 = vld [vmem:[%s165 + $0x20] sm:$0xf]
      %v889 = vld [vmem:[%s165 + $0x24] sm:$0xf]
      %v890 = vld [vmem:[%s165 + $0x28] sm:$0xf]
      %v891 = vld [vmem:[%s165 + $0x2c] sm:$0xf]
      %v892 = vld [vmem:[%s165 + $0x30] sm:$0xf]
      %v893 = vld [vmem:[%s165 + $0x34] sm:$0xf]
      %v894 = vld [vmem:[%s165 + $0x38] sm:$0xf]
      %v895 = vld [vmem:[%s165 + $0x3c] sm:$0xf]
      %v896 = vld [vmem:[%s165 + $0x40] sm:$0xf]
      %v897 = vld [vmem:[%s165 + $0x44] sm:$0xf]
      %v898 = vld [vmem:[%s165 + $0x48] sm:$0xf]
      %v899 = vld [vmem:[%s165 + $0x4c] sm:$0xf]
      %v900 = vld [vmem:[%s165 + $0x50] sm:$0xf]
      %v901 = vld [vmem:[%s165 + $0x54] sm:$0xf]
      %v902 = vld [vmem:[%s165 + $0x58] sm:$0xf]
      %v903 = vld [vmem:[%s165 + $0x5c] sm:$0xf]
      %v904 = vld [vmem:[%s165 + $0x60] sm:$0xf]
      %v905 = vld [vmem:[%s165 + $0x64] sm:$0xf]
      %v906 = vld [vmem:[%s165 + $0x68] sm:$0xf]
      %v907 = vld [vmem:[%s165 + $0x6c] sm:$0xf]
      %v908 = vld [vmem:[%s165 + $0x70] sm:$0xf]
      %v909 = vld [vmem:[%s165 + $0x74] sm:$0xf]
      %v910 = vld [vmem:[%s165 + $0x78] sm:$0xf]
      %v911 = vld [vmem:[%s165 + $0x7c] sm:$0xf]
      %v912 = vld [vmem:[%s165 + $0x80] sm:$0xf]
      %v913 = vld [vmem:[%s165 + $0x84] sm:$0xf]
      %v914 = vld [vmem:[%s165 + $0x88] sm:$0xf]
      %v915 = vld [vmem:[%s165 + $0x8c] sm:$0xf]
      %v916 = vld [vmem:[%s165 + $0x90] sm:$0x1]
      %s917 = scalar_lea.vmem %s1, 16
      %v918 = vld [vmem:[%s917] sm:$0xf]
      %v919 = vld [vmem:[%s917 + $0x4] sm:$0x3]
      %v955 = vunpack.c.l.b16 %v882
      %v956 = vunpack.c.l.b16 %v883
      %v957 = vunpack.c.l.b16 %v884
      %v958 = vunpack.c.l.b16 %v885
      %v959 = vunpack.c.l.b16 %v886
      %v960 = vunpack.c.l.b16 %v887
      %v961 = vunpack.c.l.b16 %v888
      %v962 = vunpack.c.l.b16 %v889
      %v963 = vunpack.c.l.b16 %v890
      %v964 = vunpack.c.l.b16 %v891
      %v965 = vunpack.c.l.b16 %v892
      %v966 = vunpack.c.l.b16 %v893
      %v967 = vunpack.c.l.b16 %v894
      %v968 = vunpack.c.l.b16 %v895
      %v969 = vunpack.c.l.b16 %v896
      %v970 = vunpack.c.l.b16 %v897
      %v971 = vunpack.c.l.b16 %v898
      %v972 = vunpack.c.l.b16 %v899
      %v973 = vunpack.c.l.b16 %v900
      %v974 = vunpack.c.l.b16 %v901
      %v975 = vunpack.c.l.b16 %v902
      %v976 = vunpack.c.l.b16 %v903
      %v977 = vunpack.c.l.b16 %v904
      %v978 = vunpack.c.l.b16 %v905
      %v979 = vunpack.c.l.b16 %v906
      %v980 = vunpack.c.l.b16 %v907
      %v981 = vunpack.c.l.b16 %v908
      %v982 = vunpack.c.l.b16 %v909
      %v983 = vunpack.c.l.b16 %v910
      %v984 = vunpack.c.l.b16 %v911
      %v985 = vunpack.c.l.b16 %v912
      %v986 = vunpack.c.l.b16 %v913
      %v987 = vunpack.c.l.b16 %v914
      %v988 = vunpack.c.l.b16 %v915
      %v989 = vunpack.c.l.b16 %v916
      %v990 = vpack.c.b16 %v956, %v955
      %v991 = vpack.c.b16 %v958, %v957
      %v992 = vpack.c.b16 %v960, %v959
      %v993 = vpack.c.b16 %v962, %v961
      %v994 = vpack.c.b16 %v964, %v963
      %v995 = vpack.c.b16 %v966, %v965
      %v996 = vpack.c.b16 %v968, %v967
      %v997 = vpack.c.b16 %v970, %v969
      %v998 = vpack.c.b16 %v972, %v971
      %v999 = vpack.c.b16 %v974, %v973
      %v1000 = vpack.c.b16 %v976, %v975
      %v1001 = vpack.c.b16 %v978, %v977
      %v1002 = vpack.c.b16 %v980, %v979
      %v1003 = vpack.c.b16 %v982, %v981
      %v1004 = vpack.c.b16 %v984, %v983
      %v1005 = vpack.c.b16 %v986, %v985
      %v1006 = vpack.c.b16 %v988, %v987
      %v1007 = vpack.c.b16 %v989, %v989
      %v1009 = vshrl.u32 %v990, 16
      %v1011 = vshll.u32 %v990, 16
      %v1013 = vrot.slane %v1011, 1
      %v1014 = vor.u32 %v1009, %v1013
      %v1016 = vshll.u32 %v991, 16
      %v1018 = vrot.slane %v1016, 1
      %v1019 = vsel %vm300, %v1014, %v1018
      %v1020 = vshrl.u32 %v991, 16
      %v1022 = vor.u32 %v1020, %v1018
      %v1024 = vshll.u32 %v992, 16
      %v1026 = vrot.slane %v1024, 1
      %v1027 = vsel %vm300, %v1022, %v1026
      %v1028 = vshrl.u32 %v992, 16
      %v1030 = vor.u32 %v1028, %v1026
      %v1032 = vshll.u32 %v993, 16
      %v1034 = vrot.slane %v1032, 1
      %v1035 = vsel %vm300, %v1030, %v1034
      %v1036 = vshrl.u32 %v993, 16
      %v1038 = vor.u32 %v1036, %v1034
      %v1040 = vshll.u32 %v994, 16
      %v1042 = vrot.slane %v1040, 1
      %v1043 = vsel %vm300, %v1038, %v1042
      %v1044 = vshrl.u32 %v994, 16
      %v1046 = vor.u32 %v1044, %v1042
      %v1048 = vshll.u32 %v995, 16
      %v1050 = vrot.slane %v1048, 1
      %v1051 = vsel %vm300, %v1046, %v1050
      %v1052 = vshrl.u32 %v995, 16
      %v1054 = vor.u32 %v1052, %v1050
      %v1056 = vshll.u32 %v996, 16
      %v1058 = vrot.slane %v1056, 1
      %v1059 = vsel %vm300, %v1054, %v1058
      %v1060 = vshrl.u32 %v996, 16
      %v1062 = vor.u32 %v1060, %v1058
      %v1064 = vshll.u32 %v997, 16
      %v1066 = vrot.slane %v1064, 1
      %v1067 = vsel %vm300, %v1062, %v1066
      %v1068 = vshrl.u32 %v997, 16
      %v1070 = vor.u32 %v1068, %v1066
      %v1072 = vshll.u32 %v998, 16
      %v1074 = vrot.slane %v1072, 1
      %v1075 = vsel %vm300, %v1070, %v1074
      %v1076 = vshrl.u32 %v998, 16
      %v1078 = vor.u32 %v1076, %v1074
      %v1080 = vshll.u32 %v999, 16
      %v1082 = vrot.slane %v1080, 1
      %v1083 = vsel %vm300, %v1078, %v1082
      %v1084 = vshrl.u32 %v999, 16
      %v1086 = vor.u32 %v1084, %v1082
      %v1088 = vshll.u32 %v1000, 16
      %v1090 = vrot.slane %v1088, 1
      %v1091 = vsel %vm300, %v1086, %v1090
      %v1092 = vshrl.u32 %v1000, 16
      %v1094 = vor.u32 %v1092, %v1090
      %v1096 = vshll.u32 %v1001, 16
      %v1098 = vrot.slane %v1096, 1
      %v1099 = vsel %vm300, %v1094, %v1098
      %v1100 = vshrl.u32 %v1001, 16
      %v1102 = vor.u32 %v1100, %v1098
      %v1104 = vshll.u32 %v1002, 16
      %v1106 = vrot.slane %v1104, 1
      %v1107 = vsel %vm300, %v1102, %v1106
      %v1108 = vshrl.u32 %v1002, 16
      %v1110 = vor.u32 %v1108, %v1106
      %v1112 = vshll.u32 %v1003, 16
      %v1114 = vrot.slane %v1112, 1
      %v1115 = vsel %vm300, %v1110, %v1114
      %v1116 = vshrl.u32 %v1003, 16
      %v1118 = vor.u32 %v1116, %v1114
      %v1120 = vshll.u32 %v1004, 16
      %v1122 = vrot.slane %v1120, 1
      %v1123 = vsel %vm300, %v1118, %v1122
      %v1124 = vshrl.u32 %v1004, 16
      %v1126 = vor.u32 %v1124, %v1122
      %v1128 = vshll.u32 %v1005, 16
      %v1130 = vrot.slane %v1128, 1
      %v1131 = vsel %vm300, %v1126, %v1130
      %v1132 = vshrl.u32 %v1005, 16
      %v1134 = vor.u32 %v1132, %v1130
      %v1136 = vshll.u32 %v1006, 16
      %v1138 = vrot.slane %v1136, 1
      %v1139 = vsel %vm300, %v1134, %v1138
      %v1140 = vshrl.u32 %v1006, 16
      %v1142 = vor.u32 %v1140, %v1138
      %v1144 = vshll.u32 %v1007, 16
      %v1146 = vrot.slane %v1144, 1
      %v1147 = vsel %vm300, %v1142, %v1146
      %v1150 = vunpack.c.l.b16 %v918
      %v1151 = vunpack.c.l.b16 %v919
      %v1152 = vpack.c.b16 %v1151, %v1150
      %v1154 = vsel %vm446, %v1019, 0
      %v1157 = vsel %vm446, %v1027, 0
      %v1160 = vsel %vm446, %v1035, 0
      %v1163 = vsel %vm446, %v1043, 0
      %v1166 = vsel %vm446, %v1051, 0
      %v1169 = vsel %vm446, %v1059, 0
      %v1172 = vsel %vm446, %v1067, 0
      %v1175 = vsel %vm446, %v1075, 0
      %v1178 = vsel %vm446, %v1083, 0
      %v1181 = vsel %vm446, %v1091, 0
      %v1184 = vsel %vm446, %v1099, 0
      %v1187 = vsel %vm446, %v1107, 0
      %v1190 = vsel %vm446, %v1115, 0
      %v1193 = vsel %vm446, %v1123, 0
      %v1196 = vsel %vm446, %v1131, 0
      %v1199 = vsel %vm446, %v1139, 0
      %v1202 = vsel %vm446, %v1147, 0
      %v1205 = vsel %vm498, %v1152, 0
      %1207 = vmatprep.subr.bf16.mxu0 0
      %1208 = vmatpush1.bf16.msra.mxu0 0
      %1209 = vmatprep.subr.bf16.mxu0 0
      %1210 = vmatpush1.bf16.msra.mxu0 0
      %1211 = vmatprep.subr.bf16.mxu0 0
      %1212 = vmatpush1.bf16.msra.mxu0 0
      %1213 = vmatprep.subr.bf16.mxu0 0
      %1214 = vmatpush1.bf16.msra.mxu0 0
      %1215 = vmatprep.subr.bf16.mxu0 0
      %1216 = vmatpush1.bf16.msra.mxu0 0
      %1217 = vmatprep.subr.bf16.mxu0 0
      %1218 = vmatpush1.bf16.msra.mxu0 0
      %1219 = vmatprep.subr.bf16.mxu0 0
      %1220 = vmatpush1.bf16.msra.mxu0 0
      %1221 = vmatprep.subr.bf16.mxu0 0
      %1222 = vmatpush1.bf16.msra.mxu0 %v1205
      %1223 = vmatprep.subr.bf16.mxu0 0
      %1224 = vmatpush2.bf16.msra.mxu0 0
      %1225 = vmatprep.subr.bf16.mxu0 0
      %1226 = vmatpush2.bf16.msra.mxu0 0
      %1227 = vmatprep.subr.bf16.mxu0 0
      %1228 = vmatpush2.bf16.msra.mxu0 0
      %1229 = vmatprep.subr.bf16.mxu0 0
      %1230 = vmatpush2.bf16.msra.mxu0 0
      %1231 = vmatprep.subr.bf16.mxu0 0
      %1232 = vmatpush2.bf16.msra.mxu0 0
      %1233 = vmatprep.subr.bf16.mxu0 0
      %1234 = vmatpush2.bf16.msra.mxu0 0
      %1235 = vmatprep.subr.bf16.mxu0 0
      %1236 = vmatpush2.bf16.msra.mxu0 0
      %1237 = vmatprep.subr.bf16.mxu0 0
      %1238 = vmatpush2.bf16.msra.mxu0 0
      %1239 = vmatprep.mubr.bf16.mxu0 0
      %1240 = vmatmul.mubr.bf16.gmra.mxu0 %v1154
      %v1241 = vpop.f32.mrf.mxu0
      %v1242 = vadd.f32 0.0, %v1241
      %v1243 = vpop.f32.mrf.mxu0
      %v1244 = vpop.f32.mrf.mxu0
      %v1245 = vadd.f32 0.0, %v1244
      %v1246 = vpop.f32.mrf.mxu0
      %1247 = vmatprep.mubr.bf16.mxu0 0
      %1248 = vmatmul.mubr.bf16.gmra.mxu0 %v1157
      %v1249 = vpop.f32.mrf.mxu0
      %v1250 = vadd.f32 0.0, %v1249
      %v1251 = vpop.f32.mrf.mxu0
      %v1252 = vpop.f32.mrf.mxu0
      %v1253 = vadd.f32 0.0, %v1252
      %v1254 = vpop.f32.mrf.mxu0
      %1255 = vmatprep.mubr.bf16.mxu0 0
      %1256 = vmatmul.mubr.bf16.gmra.mxu0 %v1160
      %v1257 = vpop.f32.mrf.mxu0
      %v1258 = vadd.f32 0.0, %v1257
      %v1259 = vpop.f32.mrf.mxu0
      %v1260 = vpop.f32.mrf.mxu0
      %v1261 = vadd.f32 0.0, %v1260
      %v1262 = vpop.f32.mrf.mxu0
      %1263 = vmatprep.mubr.bf16.mxu0 0
      %1264 = vmatmul.mubr.bf16.gmra.mxu0 %v1163
      %v1265 = vpop.f32.mrf.mxu0
      %v1266 = vadd.f32 0.0, %v1265
      %v1267 = vpop.f32.mrf.mxu0
      %v1268 = vpop.f32.mrf.mxu0
      %v1269 = vadd.f32 0.0, %v1268
      %v1270 = vpop.f32.mrf.mxu0
      %1271 = vmatprep.mubr.bf16.mxu0 0
      %1272 = vmatmul.mubr.bf16.gmra.mxu0 %v1166
      %v1273 = vpop.f32.mrf.mxu0
      %v1274 = vadd.f32 0.0, %v1273
      %v1275 = vpop.f32.mrf.mxu0
      %v1276 = vpop.f32.mrf.mxu0
      %v1277 = vadd.f32 0.0, %v1276
      %v1278 = vpop.f32.mrf.mxu0
      %1279 = vmatprep.mubr.bf16.mxu0 0
      %1280 = vmatmul.mubr.bf16.gmra.mxu0 %v1169
      %v1281 = vpop.f32.mrf.mxu0
      %v1282 = vadd.f32 0.0, %v1281
      %v1283 = vpop.f32.mrf.mxu0
      %v1284 = vpop.f32.mrf.mxu0
      %v1285 = vadd.f32 0.0, %v1284
      %v1286 = vpop.f32.mrf.mxu0
      %1287 = vmatprep.mubr.bf16.mxu0 0
      %1288 = vmatmul.mubr.bf16.gmra.mxu0 %v1172
      %v1289 = vpop.f32.mrf.mxu0
      %v1290 = vadd.f32 0.0, %v1289
      %v1291 = vpop.f32.mrf.mxu0
      %v1292 = vpop.f32.mrf.mxu0
      %v1293 = vadd.f32 0.0, %v1292
      %v1294 = vpop.f32.mrf.mxu0
      %1295 = vmatprep.mubr.bf16.mxu0 0
      %1296 = vmatmul.mubr.bf16.gmra.mxu0 %v1175
      %v1297 = vpop.f32.mrf.mxu0
      %v1298 = vadd.f32 0.0, %v1297
      %v1299 = vpop.f32.mrf.mxu0
      %v1300 = vpop.f32.mrf.mxu0
      %v1301 = vadd.f32 0.0, %v1300
      %v1302 = vpop.f32.mrf.mxu0
      %1303 = vmatprep.mubr.bf16.mxu0 0
      %1304 = vmatmul.mubr.bf16.gmra.mxu0 %v1178
      %v1305 = vpop.f32.mrf.mxu0
      %v1306 = vadd.f32 0.0, %v1305
      %v1307 = vpop.f32.mrf.mxu0
      %v1308 = vpop.f32.mrf.mxu0
      %v1309 = vadd.f32 0.0, %v1308
      %v1310 = vpop.f32.mrf.mxu0
      %1311 = vmatprep.mubr.bf16.mxu0 0
      %1312 = vmatmul.mubr.bf16.gmra.mxu0 %v1181
      %v1313 = vpop.f32.mrf.mxu0
      %v1314 = vadd.f32 0.0, %v1313
      %v1315 = vpop.f32.mrf.mxu0
      %v1316 = vpop.f32.mrf.mxu0
      %v1317 = vadd.f32 0.0, %v1316
      %v1318 = vpop.f32.mrf.mxu0
      %1319 = vmatprep.mubr.bf16.mxu0 0
      %1320 = vmatmul.mubr.bf16.gmra.mxu0 %v1184
      %v1321 = vpop.f32.mrf.mxu0
      %v1322 = vadd.f32 0.0, %v1321
      %v1323 = vpop.f32.mrf.mxu0
      %v1324 = vpop.f32.mrf.mxu0
      %v1325 = vadd.f32 0.0, %v1324
      %v1326 = vpop.f32.mrf.mxu0
      %1327 = vmatprep.mubr.bf16.mxu0 0
      %1328 = vmatmul.mubr.bf16.gmra.mxu0 %v1187
      %v1329 = vpop.f32.mrf.mxu0
      %v1330 = vadd.f32 0.0, %v1329
      %v1331 = vpop.f32.mrf.mxu0
      %v1332 = vpop.f32.mrf.mxu0
      %v1333 = vadd.f32 0.0, %v1332
      %v1334 = vpop.f32.mrf.mxu0
      %1335 = vmatprep.mubr.bf16.mxu0 0
      %1336 = vmatmul.mubr.bf16.gmra.mxu0 %v1190
      %v1337 = vpop.f32.mrf.mxu0
      %v1338 = vadd.f32 0.0, %v1337
      %v1339 = vpop.f32.mrf.mxu0
      %v1340 = vpop.f32.mrf.mxu0
      %v1341 = vadd.f32 0.0, %v1340
      %v1342 = vpop.f32.mrf.mxu0
      %1343 = vmatprep.mubr.bf16.mxu0 0
      %1344 = vmatmul.mubr.bf16.gmra.mxu0 %v1193
      %v1345 = vpop.f32.mrf.mxu0
      %v1346 = vadd.f32 0.0, %v1345
      %v1347 = vpop.f32.mrf.mxu0
      %v1348 = vpop.f32.mrf.mxu0
      %v1349 = vadd.f32 0.0, %v1348
      %v1350 = vpop.f32.mrf.mxu0
      %1351 = vmatprep.mubr.bf16.mxu0 0
      %1352 = vmatmul.mubr.bf16.gmra.mxu0 %v1196
      %v1353 = vpop.f32.mrf.mxu0
      %v1354 = vadd.f32 0.0, %v1353
      %v1355 = vpop.f32.mrf.mxu0
      %v1356 = vpop.f32.mrf.mxu0
      %v1357 = vadd.f32 0.0, %v1356
      %v1358 = vpop.f32.mrf.mxu0
      %1359 = vmatprep.mubr.bf16.mxu0 0
      %1360 = vmatmul.mubr.bf16.gmra.mxu0 %v1199
      %v1361 = vpop.f32.mrf.mxu0
      %v1362 = vadd.f32 0.0, %v1361
      %v1363 = vpop.f32.mrf.mxu0
      %v1364 = vpop.f32.mrf.mxu0
      %v1365 = vadd.f32 0.0, %v1364
      %v1366 = vpop.f32.mrf.mxu0
      %1367 = vmatprep.mubr.bf16.mxu0 0
      %1368 = vmatmul.mubr.bf16.gmra.mxu0 %v1202
      %v1369 = vpop.f32.mrf.mxu0
      %v1370 = vadd.f32 0.0, %v1369
      %v1371 = vpop.f32.mrf.mxu0
      %v1372 = vpop.f32.mrf.mxu0
      %v1373 = vadd.f32 0.0, %v1372
      %v1374 = vpop.f32.mrf.mxu0
      %1375 = vdwg.mxu0
      %v1376 = vadd.f32 %v748, %v1242
      %v1377 = vadd.f32 %v751, %v1245
      %v1378 = vadd.f32 %v756, %v1250
      %v1379 = vadd.f32 %v759, %v1253
      %v1380 = vadd.f32 %v764, %v1258
      %v1381 = vadd.f32 %v767, %v1261
      %v1382 = vadd.f32 %v772, %v1266
      %v1383 = vadd.f32 %v775, %v1269
      %v1384 = vadd.f32 %v780, %v1274
      %v1385 = vadd.f32 %v783, %v1277
      %v1386 = vadd.f32 %v788, %v1282
      %v1387 = vadd.f32 %v791, %v1285
      %v1388 = vadd.f32 %v796, %v1290
      %v1389 = vadd.f32 %v799, %v1293
      %v1390 = vadd.f32 %v804, %v1298
      %v1391 = vadd.f32 %v807, %v1301
      %v1392 = vadd.f32 %v812, %v1306
      %v1393 = vadd.f32 %v815, %v1309
      %v1394 = vadd.f32 %v820, %v1314
      %v1395 = vadd.f32 %v823, %v1317
      %v1396 = vadd.f32 %v828, %v1322
      %v1397 = vadd.f32 %v831, %v1325
      %v1398 = vadd.f32 %v836, %v1330
      %v1399 = vadd.f32 %v839, %v1333
      %v1400 = vadd.f32 %v844, %v1338
      %v1401 = vadd.f32 %v847, %v1341
      %v1402 = vadd.f32 %v852, %v1346
      %v1403 = vadd.f32 %v855, %v1349
      %v1404 = vadd.f32 %v860, %v1354
      %v1405 = vadd.f32 %v863, %v1357
      %v1406 = vadd.f32 %v868, %v1362
      %v1407 = vadd.f32 %v871, %v1365
      %v1408 = vadd.f32 %v876, %v1370
      %v1409 = vadd.f32 %v879, %v1373
      %v1410 = vld [vmem:[%s165 + $0x8] sm:$0xe]
      %s1411 = scalar_lea.vmem %s1, 24
      %v1412 = vld [vmem:[%s1411] sm:$0xf]
      %v1413 = vld [vmem:[%s1411 + $0x4] sm:$0x3]
      %v1415 = vunpack.c.l.b16 %v1410
      %v1416 = vpack.c.b16 %v956, %v1415
      %vm1417 = vcmask 1046528
      %v1418 = vrot.slane %v1416, 1
      %v1419 = vrot.slane %v991, 1
      %v1420 = vsel %vm1417, %v1418, %v1419
      %v1421 = vrot.slane %v992, 1
      %v1422 = vsel %vm1417, %v1419, %v1421
      %v1423 = vrot.slane %v993, 1
      %v1424 = vsel %vm1417, %v1421, %v1423
      %v1425 = vrot.slane %v994, 1
      %v1426 = vsel %vm1417, %v1423, %v1425
      %v1427 = vrot.slane %v995, 1
      %v1428 = vsel %vm1417, %v1425, %v1427
      %v1429 = vrot.slane %v996, 1
      %v1430 = vsel %vm1417, %v1427, %v1429
      %v1431 = vrot.slane %v997, 1
      %v1432 = vsel %vm1417, %v1429, %v1431
      %v1433 = vrot.slane %v998, 1
      %v1434 = vsel %vm1417, %v1431, %v1433
      %v1435 = vrot.slane %v999, 1
      %v1436 = vsel %vm1417, %v1433, %v1435
      %v1437 = vrot.slane %v1000, 1
      %v1438 = vsel %vm1417, %v1435, %v1437
      %v1439 = vrot.slane %v1001, 1
      %v1440 = vsel %vm1417, %v1437, %v1439
      %v1441 = vrot.slane %v1002, 1
      %v1442 = vsel %vm1417, %v1439, %v1441
      %v1443 = vrot.slane %v1003, 1
      %v1444 = vsel %vm1417, %v1441, %v1443
      %v1445 = vrot.slane %v1004, 1
      %v1446 = vsel %vm1417, %v1443, %v1445
      %v1447 = vrot.slane %v1005, 1
      %v1448 = vsel %vm1417, %v1445, %v1447
      %v1449 = vrot.slane %v1006, 1
      %v1450 = vsel %vm1417, %v1447, %v1449
      %v1451 = vrot.slane %v1007, 1
      %v1452 = vsel %vm1417, %v1449, %v1451
      %v1455 = vunpack.c.l.b16 %v1412
      %v1456 = vunpack.c.l.b16 %v1413
      %v1457 = vpack.c.b16 %v1456, %v1455
      %v1459 = vsel %vm446, %v1420, 0
      %v1462 = vsel %vm446, %v1422, 0
      %v1465 = vsel %vm446, %v1424, 0
      %v1468 = vsel %vm446, %v1426, 0
      %v1471 = vsel %vm446, %v1428, 0
      %v1474 = vsel %vm446, %v1430, 0
      %v1477 = vsel %vm446, %v1432, 0
      %v1480 = vsel %vm446, %v1434, 0
      %v1483 = vsel %vm446, %v1436, 0
      %v1486 = vsel %vm446, %v1438, 0
      %v1489 = vsel %vm446, %v1440, 0
      %v1492 = vsel %vm446, %v1442, 0
      %v1495 = vsel %vm446, %v1444, 0
      %v1498 = vsel %vm446, %v1446, 0
      %v1501 = vsel %vm446, %v1448, 0
      %v1504 = vsel %vm446, %v1450, 0
      %v1507 = vsel %vm446, %v1452, 0
      %v1510 = vsel %vm498, %v1457, 0
      %1512 = vmatprep.subr.bf16.mxu0 0
      %1513 = vmatpush1.bf16.msra.mxu0 0
      %1514 = vmatprep.subr.bf16.mxu0 0
      %1515 = vmatpush1.bf16.msra.mxu0 0
      %1516 = vmatprep.subr.bf16.mxu0 0
      %1517 = vmatpush1.bf16.msra.mxu0 0
      %1518 = vmatprep.subr.bf16.mxu0 0
      %1519 = vmatpush1.bf16.msra.mxu0 0
      %1520 = vmatprep.subr.bf16.mxu0 0
      %1521 = vmatpush1.bf16.msra.mxu0 0
      %1522 = vmatprep.subr.bf16.mxu0 0
      %1523 = vmatpush1.bf16.msra.mxu0 0
      %1524 = vmatprep.subr.bf16.mxu0 0
      %1525 = vmatpush1.bf16.msra.mxu0 0
      %1526 = vmatprep.subr.bf16.mxu0 0
      %1527 = vmatpush1.bf16.msra.mxu0 %v1510
      %1528 = vmatprep.subr.bf16.mxu0 0
      %1529 = vmatpush2.bf16.msra.mxu0 0
      %1530 = vmatprep.subr.bf16.mxu0 0
      %1531 = vmatpush2.bf16.msra.mxu0 0
      %1532 = vmatprep.subr.bf16.mxu0 0
      %1533 = vmatpush2.bf16.msra.mxu0 0
      %1534 = vmatprep.subr.bf16.mxu0 0
      %1535 = vmatpush2.bf16.msra.mxu0 0
      %1536 = vmatprep.subr.bf16.mxu0 0
      %1537 = vmatpush2.bf16.msra.mxu0 0
      %1538 = vmatprep.subr.bf16.mxu0 0
      %1539 = vmatpush2.bf16.msra.mxu0 0
      %1540 = vmatprep.subr.bf16.mxu0 0
      %1541 = vmatpush2.bf16.msra.mxu0 0
      %1542 = vmatprep.subr.bf16.mxu0 0
      %1543 = vmatpush2.bf16.msra.mxu0 0
      %1544 = vmatprep.mubr.bf16.mxu0 0
      %1545 = vmatmul.mubr.bf16.gmra.mxu0 %v1459
      %v1546 = vpop.f32.mrf.mxu0
      %v1547 = vadd.f32 0.0, %v1546
      %v1548 = vpop.f32.mrf.mxu0
      %v1549 = vpop.f32.mrf.mxu0
      %v1550 = vadd.f32 0.0, %v1549
      %v1551 = vpop.f32.mrf.mxu0
      %1552 = vmatprep.mubr.bf16.mxu0 0
      %1553 = vmatmul.mubr.bf16.gmra.mxu0 %v1462
      %v1554 = vpop.f32.mrf.mxu0
      %v1555 = vadd.f32 0.0, %v1554
      %v1556 = vpop.f32.mrf.mxu0
      %v1557 = vpop.f32.mrf.mxu0
      %v1558 = vadd.f32 0.0, %v1557
      %v1559 = vpop.f32.mrf.mxu0
      %1560 = vmatprep.mubr.bf16.mxu0 0
      %1561 = vmatmul.mubr.bf16.gmra.mxu0 %v1465
      %v1562 = vpop.f32.mrf.mxu0
      %v1563 = vadd.f32 0.0, %v1562
      %v1564 = vpop.f32.mrf.mxu0
      %v1565 = vpop.f32.mrf.mxu0
      %v1566 = vadd.f32 0.0, %v1565
      %v1567 = vpop.f32.mrf.mxu0
      %1568 = vmatprep.mubr.bf16.mxu0 0
      %1569 = vmatmul.mubr.bf16.gmra.mxu0 %v1468
      %v1570 = vpop.f32.mrf.mxu0
      %v1571 = vadd.f32 0.0, %v1570
      %v1572 = vpop.f32.mrf.mxu0
      %v1573 = vpop.f32.mrf.mxu0
      %v1574 = vadd.f32 0.0, %v1573
      %v1575 = vpop.f32.mrf.mxu0
      %1576 = vmatprep.mubr.bf16.mxu0 0
      %1577 = vmatmul.mubr.bf16.gmra.mxu0 %v1471
      %v1578 = vpop.f32.mrf.mxu0
      %v1579 = vadd.f32 0.0, %v1578
      %v1580 = vpop.f32.mrf.mxu0
      %v1581 = vpop.f32.mrf.mxu0
      %v1582 = vadd.f32 0.0, %v1581
      %v1583 = vpop.f32.mrf.mxu0
      %1584 = vmatprep.mubr.bf16.mxu0 0
      %1585 = vmatmul.mubr.bf16.gmra.mxu0 %v1474
      %v1586 = vpop.f32.mrf.mxu0
      %v1587 = vadd.f32 0.0, %v1586
      %v1588 = vpop.f32.mrf.mxu0
      %v1589 = vpop.f32.mrf.mxu0
      %v1590 = vadd.f32 0.0, %v1589
      %v1591 = vpop.f32.mrf.mxu0
      %1592 = vmatprep.mubr.bf16.mxu0 0
      %1593 = vmatmul.mubr.bf16.gmra.mxu0 %v1477
      %v1594 = vpop.f32.mrf.mxu0
      %v1595 = vadd.f32 0.0, %v1594
      %v1596 = vpop.f32.mrf.mxu0
      %v1597 = vpop.f32.mrf.mxu0
      %v1598 = vadd.f32 0.0, %v1597
      %v1599 = vpop.f32.mrf.mxu0
      %1600 = vmatprep.mubr.bf16.mxu0 0
      %1601 = vmatmul.mubr.bf16.gmra.mxu0 %v1480
      %v1602 = vpop.f32.mrf.mxu0
      %v1603 = vadd.f32 0.0, %v1602
      %v1604 = vpop.f32.mrf.mxu0
      %v1605 = vpop.f32.mrf.mxu0
      %v1606 = vadd.f32 0.0, %v1605
      %v1607 = vpop.f32.mrf.mxu0
      %1608 = vmatprep.mubr.bf16.mxu0 0
      %1609 = vmatmul.mubr.bf16.gmra.mxu0 %v1483
      %v1610 = vpop.f32.mrf.mxu0
      %v1611 = vadd.f32 0.0, %v1610
      %v1612 = vpop.f32.mrf.mxu0
      %v1613 = vpop.f32.mrf.mxu0
      %v1614 = vadd.f32 0.0, %v1613
      %v1615 = vpop.f32.mrf.mxu0
      %1616 = vmatprep.mubr.bf16.mxu0 0
      %1617 = vmatmul.mubr.bf16.gmra.mxu0 %v1486
      %v1618 = vpop.f32.mrf.mxu0
      %v1619 = vadd.f32 0.0, %v1618
      %v1620 = vpop.f32.mrf.mxu0
      %v1621 = vpop.f32.mrf.mxu0
      %v1622 = vadd.f32 0.0, %v1621
      %v1623 = vpop.f32.mrf.mxu0
      %1624 = vmatprep.mubr.bf16.mxu0 0
      %1625 = vmatmul.mubr.bf16.gmra.mxu0 %v1489
      %v1626 = vpop.f32.mrf.mxu0
      %v1627 = vadd.f32 0.0, %v1626
      %v1628 = vpop.f32.mrf.mxu0
      %v1629 = vpop.f32.mrf.mxu0
      %v1630 = vadd.f32 0.0, %v1629
      %v1631 = vpop.f32.mrf.mxu0
      %1632 = vmatprep.mubr.bf16.mxu0 0
      %1633 = vmatmul.mubr.bf16.gmra.mxu0 %v1492
      %v1634 = vpop.f32.mrf.mxu0
      %v1635 = vadd.f32 0.0, %v1634
      %v1636 = vpop.f32.mrf.mxu0
      %v1637 = vpop.f32.mrf.mxu0
      %v1638 = vadd.f32 0.0, %v1637
      %v1639 = vpop.f32.mrf.mxu0
      %1640 = vmatprep.mubr.bf16.mxu0 0
      %1641 = vmatmul.mubr.bf16.gmra.mxu0 %v1495
      %v1642 = vpop.f32.mrf.mxu0
      %v1643 = vadd.f32 0.0, %v1642
      %v1644 = vpop.f32.mrf.mxu0
      %v1645 = vpop.f32.mrf.mxu0
      %v1646 = vadd.f32 0.0, %v1645
      %v1647 = vpop.f32.mrf.mxu0
      %1648 = vmatprep.mubr.bf16.mxu0 0
      %1649 = vmatmul.mubr.bf16.gmra.mxu0 %v1498
      %v1650 = vpop.f32.mrf.mxu0
      %v1651 = vadd.f32 0.0, %v1650
      %v1652 = vpop.f32.mrf.mxu0
      %v1653 = vpop.f32.mrf.mxu0
      %v1654 = vadd.f32 0.0, %v1653
      %v1655 = vpop.f32.mrf.mxu0
      %1656 = vmatprep.mubr.bf16.mxu0 0
      %1657 = vmatmul.mubr.bf16.gmra.mxu0 %v1501
      %v1658 = vpop.f32.mrf.mxu0
      %v1659 = vadd.f32 0.0, %v1658
      %v1660 = vpop.f32.mrf.mxu0
      %v1661 = vpop.f32.mrf.mxu0
      %v1662 = vadd.f32 0.0, %v1661
      %v1663 = vpop.f32.mrf.mxu0
      %1664 = vmatprep.mubr.bf16.mxu0 0
      %1665 = vmatmul.mubr.bf16.gmra.mxu0 %v1504
      %v1666 = vpop.f32.mrf.mxu0
      %v1667 = vadd.f32 0.0, %v1666
      %v1668 = vpop.f32.mrf.mxu0
      %v1669 = vpop.f32.mrf.mxu0
      %v1670 = vadd.f32 0.0, %v1669
      %v1671 = vpop.f32.mrf.mxu0
      %1672 = vmatprep.mubr.bf16.mxu0 0
      %1673 = vmatmul.mubr.bf16.gmra.mxu0 %v1507
      %v1674 = vpop.f32.mrf.mxu0
      %v1675 = vadd.f32 0.0, %v1674
      %v1676 = vpop.f32.mrf.mxu0
      %v1677 = vpop.f32.mrf.mxu0
      %v1678 = vadd.f32 0.0, %v1677
      %v1679 = vpop.f32.mrf.mxu0
      %1680 = vdwg.mxu0
      %v1681 = vadd.f32 %v1376, %v1547
      %v1682 = vadd.f32 %v1377, %v1550
      %v1683 = vadd.f32 %v1378, %v1555
      %v1684 = vadd.f32 %v1379, %v1558
      %v1685 = vadd.f32 %v1380, %v1563
      %v1686 = vadd.f32 %v1381, %v1566
      %v1687 = vadd.f32 %v1382, %v1571
      %v1688 = vadd.f32 %v1383, %v1574
      %v1689 = vadd.f32 %v1384, %v1579
      %v1690 = vadd.f32 %v1385, %v1582
      %v1691 = vadd.f32 %v1386, %v1587
      %v1692 = vadd.f32 %v1387, %v1590
      %v1693 = vadd.f32 %v1388, %v1595
      %v1694 = vadd.f32 %v1389, %v1598
      %v1695 = vadd.f32 %v1390, %v1603
      %v1696 = vadd.f32 %v1391, %v1606
      %v1697 = vadd.f32 %v1392, %v1611
      %v1698 = vadd.f32 %v1393, %v1614
      %v1699 = vadd.f32 %v1394, %v1619
      %v1700 = vadd.f32 %v1395, %v1622
      %v1701 = vadd.f32 %v1396, %v1627
      %v1702 = vadd.f32 %v1397, %v1630
      %v1703 = vadd.f32 %v1398, %v1635
      %v1704 = vadd.f32 %v1399, %v1638
      %v1705 = vadd.f32 %v1400, %v1643
      %v1706 = vadd.f32 %v1401, %v1646
      %v1707 = vadd.f32 %v1402, %v1651
      %v1708 = vadd.f32 %v1403, %v1654
      %v1709 = vadd.f32 %v1404, %v1659
      %v1710 = vadd.f32 %v1405, %v1662
      %v1711 = vadd.f32 %v1406, %v1667
      %v1712 = vadd.f32 %v1407, %v1670
      %v1713 = vadd.f32 %v1408, %v1675
      %v1714 = vadd.f32 %v1409, %v1678
      %v1715 = vld [vmem:[%s2] sm:$0x1]
      %v1717 = vlaneseq
      %v1718 = vshrl.u32 %v1717, 7
      %v1719 = vsub.s32 0, %v1718
      %v1720 = vrot.slane %v1715, %v1719
      %v1722 = vadd.f32 %v1681, %v1720
      %v1723 = vadd.f32 %v1682, %v1720
      %v1724 = vadd.f32 %v1683, %v1720
      %v1725 = vadd.f32 %v1684, %v1720
      %v1726 = vadd.f32 %v1685, %v1720
      %v1727 = vadd.f32 %v1686, %v1720
      %v1728 = vadd.f32 %v1687, %v1720
      %v1729 = vadd.f32 %v1688, %v1720
      %v1730 = vadd.f32 %v1689, %v1720
      %v1731 = vadd.f32 %v1690, %v1720
      %v1732 = vadd.f32 %v1691, %v1720
      %v1733 = vadd.f32 %v1692, %v1720
      %v1734 = vadd.f32 %v1693, %v1720
      %v1735 = vadd.f32 %v1694, %v1720
      %v1736 = vadd.f32 %v1695, %v1720
      %v1737 = vadd.f32 %v1696, %v1720
      %v1738 = vadd.f32 %v1697, %v1720
      %v1739 = vadd.f32 %v1698, %v1720
      %v1740 = vadd.f32 %v1699, %v1720
      %v1741 = vadd.f32 %v1700, %v1720
      %v1742 = vadd.f32 %v1701, %v1720
      %v1743 = vadd.f32 %v1702, %v1720
      %v1744 = vadd.f32 %v1703, %v1720
      %v1745 = vadd.f32 %v1704, %v1720
      %v1746 = vadd.f32 %v1705, %v1720
      %v1747 = vadd.f32 %v1706, %v1720
      %v1748 = vadd.f32 %v1707, %v1720
      %v1749 = vadd.f32 %v1708, %v1720
      %v1750 = vadd.f32 %v1709, %v1720
      %v1751 = vadd.f32 %v1710, %v1720
      %v1752 = vadd.f32 %v1711, %v1720
      %v1753 = vadd.f32 %v1712, %v1720
      %v1754 = vadd.f32 %v1713, %v1720
      %v1755 = vadd.f32 %v1714, %v1720
      %v1756 = vmax.f32 %v1722, 0.0
      %v1757 = vmax.f32 %v1723, 0.0
      %v1758 = vmax.f32 %v1724, 0.0
      %v1759 = vmax.f32 %v1725, 0.0
      %v1760 = vmax.f32 %v1726, 0.0
      %v1761 = vmax.f32 %v1727, 0.0
      %v1762 = vmax.f32 %v1728, 0.0
      %v1763 = vmax.f32 %v1729, 0.0
      %v1764 = vmax.f32 %v1730, 0.0
      %v1765 = vmax.f32 %v1731, 0.0
      %v1766 = vmax.f32 %v1732, 0.0
      %v1767 = vmax.f32 %v1733, 0.0
      %v1768 = vmax.f32 %v1734, 0.0
      %v1769 = vmax.f32 %v1735, 0.0
      %v1770 = vmax.f32 %v1736, 0.0
      %v1771 = vmax.f32 %v1737, 0.0
      %v1772 = vmax.f32 %v1738, 0.0
      %v1773 = vmax.f32 %v1739, 0.0
      %v1774 = vmax.f32 %v1740, 0.0
      %v1775 = vmax.f32 %v1741, 0.0
      %v1776 = vmax.f32 %v1742, 0.0
      %v1777 = vmax.f32 %v1743, 0.0
      %v1778 = vmax.f32 %v1744, 0.0
      %v1779 = vmax.f32 %v1745, 0.0
      %v1780 = vmax.f32 %v1746, 0.0
      %v1781 = vmax.f32 %v1747, 0.0
      %v1782 = vmax.f32 %v1748, 0.0
      %v1783 = vmax.f32 %v1749, 0.0
      %v1784 = vmax.f32 %v1750, 0.0
      %v1785 = vmax.f32 %v1751, 0.0
      %v1786 = vmax.f32 %v1752, 0.0
      %v1787 = vmax.f32 %v1753, 0.0
      %v1788 = vmax.f32 %v1754, 0.0
      %v1789 = vmax.f32 %v1755, 0.0
      %v1790 = vpack.c.bf16 %v1757, %v1756
      %v1791 = vpack.c.bf16 %v1759, %v1758
      %v1792 = vpack.c.bf16 %v1761, %v1760
      %v1793 = vpack.c.bf16 %v1763, %v1762
      %v1794 = vpack.c.bf16 %v1765, %v1764
      %v1795 = vpack.c.bf16 %v1767, %v1766
      %v1796 = vpack.c.bf16 %v1769, %v1768
      %v1797 = vpack.c.bf16 %v1771, %v1770
      %v1798 = vpack.c.bf16 %v1773, %v1772
      %v1799 = vpack.c.bf16 %v1775, %v1774
      %v1800 = vpack.c.bf16 %v1777, %v1776
      %v1801 = vpack.c.bf16 %v1779, %v1778
      %v1802 = vpack.c.bf16 %v1781, %v1780
      %v1803 = vpack.c.bf16 %v1783, %v1782
      %v1804 = vpack.c.bf16 %v1785, %v1784
      %v1805 = vpack.c.bf16 %v1787, %v1786
      %v1806 = vpack.c.bf16 %v1789, %v1788
      %v1824 = vunpack.c.l.b16 %v1790
      %v1825 = vunpack.c.h.b16 %v1790
      %v1826 = vunpack.c.l.b16 %v1791
      %v1827 = vunpack.c.h.b16 %v1791
      %v1828 = vunpack.c.l.b16 %v1792
      %v1829 = vunpack.c.h.b16 %v1792
      %v1830 = vunpack.c.l.b16 %v1793
      %v1831 = vunpack.c.h.b16 %v1793
      %v1832 = vunpack.c.l.b16 %v1794
      %v1833 = vunpack.c.h.b16 %v1794
      %v1834 = vunpack.c.l.b16 %v1795
      %v1835 = vunpack.c.h.b16 %v1795
      %v1836 = vunpack.c.l.b16 %v1796
      %v1837 = vunpack.c.h.b16 %v1796
      %v1838 = vunpack.c.l.b16 %v1797
      %v1839 = vunpack.c.h.b16 %v1797
      %v1840 = vunpack.c.l.b16 %v1798
      %v1841 = vunpack.c.h.b16 %v1798
      %v1842 = vunpack.c.l.b16 %v1799
      %v1843 = vunpack.c.h.b16 %v1799
      %v1844 = vunpack.c.l.b16 %v1800
      %v1845 = vunpack.c.h.b16 %v1800
      %v1846 = vunpack.c.l.b16 %v1801
      %v1847 = vunpack.c.h.b16 %v1801
      %v1848 = vunpack.c.l.b16 %v1802
      %v1849 = vunpack.c.h.b16 %v1802
      %v1850 = vunpack.c.l.b16 %v1803
      %v1851 = vunpack.c.h.b16 %v1803
      %v1852 = vunpack.c.l.b16 %v1804
      %v1853 = vunpack.c.h.b16 %v1804
      %v1854 = vunpack.c.l.b16 %v1805
      %v1855 = vunpack.c.h.b16 %v1805
      %v1856 = vunpack.c.l.b16 %v1806
      %v1857 = vunpack.c.h.b16 %v1806
      %v1858 = vpack.c.b16 %v1824, %v1824
      %v1859 = vpack.c.b16 %v1825, %v1825
      %v1860 = vpack.c.b16 %v1826, %v1826
      %v1861 = vpack.c.b16 %v1827, %v1827
      %v1862 = vpack.c.b16 %v1828, %v1828
      %v1863 = vpack.c.b16 %v1829, %v1829
      %v1864 = vpack.c.b16 %v1830, %v1830
      %v1865 = vpack.c.b16 %v1831, %v1831
      %v1866 = vpack.c.b16 %v1832, %v1832
      %v1867 = vpack.c.b16 %v1833, %v1833
      %v1868 = vpack.c.b16 %v1834, %v1834
      %v1869 = vpack.c.b16 %v1835, %v1835
      %v1870 = vpack.c.b16 %v1836, %v1836
      %v1871 = vpack.c.b16 %v1837, %v1837
      %v1872 = vpack.c.b16 %v1838, %v1838
      %v1873 = vpack.c.b16 %v1839, %v1839
      %v1874 = vpack.c.b16 %v1840, %v1840
      %v1875 = vpack.c.b16 %v1841, %v1841
      %v1876 = vpack.c.b16 %v1842, %v1842
      %v1877 = vpack.c.b16 %v1843, %v1843
      %v1878 = vpack.c.b16 %v1844, %v1844
      %v1879 = vpack.c.b16 %v1845, %v1845
      %v1880 = vpack.c.b16 %v1846, %v1846
      %v1881 = vpack.c.b16 %v1847, %v1847
      %v1882 = vpack.c.b16 %v1848, %v1848
      %v1883 = vpack.c.b16 %v1849, %v1849
      %v1884 = vpack.c.b16 %v1850, %v1850
      %v1885 = vpack.c.b16 %v1851, %v1851
      %v1886 = vpack.c.b16 %v1852, %v1852
      %v1887 = vpack.c.b16 %v1853, %v1853
      %v1888 = vpack.c.b16 %v1854, %v1854
      %v1889 = vpack.c.b16 %v1855, %v1855
      %v1890 = vpack.c.b16 %v1856, %v1856
      %v1891 = vpack.c.b16 %v1857, %v1857
      %vm1926 = vcmask 125952
      %1927 = vst.msk [vmem:[%s170] sm:$0xf] %vm1926, %v1858
      %1928 = vst.msk [vmem:[%s170 + $0x4] sm:$0xf] %vm1926, %v1859
      %1929 = vst.msk [vmem:[%s170 + $0x8] sm:$0xf] %vm1926, %v1860
      %1930 = vst.msk [vmem:[%s170 + $0xc] sm:$0xf] %vm1926, %v1861
      %1931 = vst.msk [vmem:[%s170 + $0x10] sm:$0xf] %vm1926, %v1862
      %1932 = vst.msk [vmem:[%s170 + $0x14] sm:$0xf] %vm1926, %v1863
      %1933 = vst.msk [vmem:[%s170 + $0x18] sm:$0xf] %vm1926, %v1864
      %1934 = vst.msk [vmem:[%s170 + $0x1c] sm:$0xf] %vm1926, %v1865
      %1935 = vst.msk [vmem:[%s170 + $0x20] sm:$0xf] %vm1926, %v1866
      %1936 = vst.msk [vmem:[%s170 + $0x24] sm:$0xf] %vm1926, %v1867
      %1937 = vst.msk [vmem:[%s170 + $0x28] sm:$0xf] %vm1926, %v1868
      %1938 = vst.msk [vmem:[%s170 + $0x2c] sm:$0xf] %vm1926, %v1869
      %1939 = vst.msk [vmem:[%s170 + $0x30] sm:$0xf] %vm1926, %v1870
      %1940 = vst.msk [vmem:[%s170 + $0x34] sm:$0xf] %vm1926, %v1871
      %1941 = vst.msk [vmem:[%s170 + $0x38] sm:$0xf] %vm1926, %v1872
      %1942 = vst.msk [vmem:[%s170 + $0x3c] sm:$0xf] %vm1926, %v1873
      %1943 = vst.msk [vmem:[%s170 + $0x40] sm:$0xf] %vm1926, %v1874
      %1944 = vst.msk [vmem:[%s170 + $0x44] sm:$0xf] %vm1926, %v1875
      %1945 = vst.msk [vmem:[%s170 + $0x48] sm:$0xf] %vm1926, %v1876
      %1946 = vst.msk [vmem:[%s170 + $0x4c] sm:$0xf] %vm1926, %v1877
      %1947 = vst.msk [vmem:[%s170 + $0x50] sm:$0xf] %vm1926, %v1878
      %1948 = vst.msk [vmem:[%s170 + $0x54] sm:$0xf] %vm1926, %v1879
      %1949 = vst.msk [vmem:[%s170 + $0x58] sm:$0xf] %vm1926, %v1880
      %1950 = vst.msk [vmem:[%s170 + $0x5c] sm:$0xf] %vm1926, %v1881
      %1951 = vst.msk [vmem:[%s170 + $0x60] sm:$0xf] %vm1926, %v1882
      %1952 = vst.msk [vmem:[%s170 + $0x64] sm:$0xf] %vm1926, %v1883
      %1953 = vst.msk [vmem:[%s170 + $0x68] sm:$0xf] %vm1926, %v1884
      %1954 = vst.msk [vmem:[%s170 + $0x6c] sm:$0xf] %vm1926, %v1885
      %1955 = vst.msk [vmem:[%s170 + $0x70] sm:$0xf] %vm1926, %v1886
      %1956 = vst.msk [vmem:[%s170 + $0x74] sm:$0xf] %vm1926, %v1887
      %1957 = vst.msk [vmem:[%s170 + $0x78] sm:$0xf] %vm1926, %v1888
      %1958 = vst.msk [vmem:[%s170 + $0x7c] sm:$0xf] %vm1926, %v1889
      %1959 = vst.msk [vmem:[%s170 + $0x80] sm:$0xf] %vm1926, %v1890
      %1960 = vst.msk [vmem:[%s170 + $0x84] sm:$0xf] %vm1926, %v1891
      %p1961 = scmp.lt.s32.totalorder %s14, 1
      %s1962 = scalar_select %p1961, %s14, 1
      %s1963 = smul.addr %s1962, 34
      %s1964 = smul.addr %s1963, 4
      %s1965 = scalar_lea.vmem %s3, %s1964
      // Predicated region
      $region33: #{_lambda_.4} parent=31 // pred_check
        %p1966 = pneg %p100
      $region34: #{_lambda_.4} parent=31 // pred_check_branch
        %1968 = sbr.rel (%p1966) target = $region36
      $region35: #{_lambda_.4} parent=31 // pred_region
        _
      $region36: #{_lambda_.4} parent=31 // pred_fallthru
        _
    $region32: #{_lambda_.4} parent=5 // pred_fallthru
      _
    %p1969 = scmp.le.s32.totalorder 2, %s9
    // Predicated region
    $region37: #{_lambda_.4} parent=5 // pred_check
      %p1970 = pneg %p1969
    $region38: #{_lambda_.4} parent=5 // pred_check_branch
      %1972 = sbr.rel (%p1970) target = $region40
    $region39: #{_lambda_.4} parent=5 // pred_region
      %s1973 = ssub.s32 %s9, 2
      // Predicated region
      $region41: #{_lambda_.4} parent=39 // pred_check
        %p1974 = pneg %p106
      $region42: #{_lambda_.4} parent=39 // pred_check_branch
        %1976 = sbr.rel (%p1974) target = $region44
      $region43: #{_lambda_.4} parent=39 // pred_region
        %p1977 = scmp.lt.s32.totalorder %s15, 1
        %s1978 = scalar_select %p1977, %s15, 1
        %s1979 = smul.addr %s1978, 34
        %s1980 = smul.addr %s1979, 4
        %s1981 = scalar_lea.vmem %s3, %s1980
      $region44: #{_lambda_.4} parent=39 // pred_fallthru
        _
    $region40: #{_lambda_.4} parent=5 // pred_fallthru
      _
  $region6: #{_lambda_.4} parent=0 // loop_footer
    %s13 = sadd.s32 1, %s9
  $region7: #{_lambda_.4} parent=0 // loop_footer_branch
    %8 = sbr.rel target = $region3
  $region8: #{_lambda_.4} parent=0 // loop_exit
    _

// kernel: _lambda_.5
$region0: #{_lambda_.5}
  #allocation0 [shape = 'u32[]', space=smem, size = 0x4, offset = 0x4, fixed_abs, tag = 'smem constant byte address 0x4 - core index']
  #allocation1 [shape = 'u32[144,128]{1,0:T(1,128)}', space=vmem, size = 0x12000, scoped, tag = 'internal scratch']
  %s0 = inlined_call_operand.vmem [shape: bf16[2,90,64], index: 0, kind: input, shape index: {}]
  %s1 = inlined_call_operand.vmem [shape: bf16[4,64,32], index: 1, kind: input, shape index: {}]
  %s2 = inlined_call_operand.vmem [shape: f32[1,32], index: 2, kind: input, shape index: {}]
  %s3 = inlined_call_operand.vmem [shape: bf16[2,72,32], index: 3, kind: output, shape index: {}]
  %s4 = sld [smem:[#allocation0]]
  $region45: #{_lambda_.5} parent=0
    _
  %s6 = ssub.s32 1, %s4
  %s7 = scalar_select 0, %s6, %s4
  loop: start=0, step=1, limit=4
  $region2: #{_lambda_.5} parent=0 // loop_pre_header
    _
  $region3: #{_lambda_.5} parent=0 // loop_header
    %s9 = sphi 0, %s13
    %p10 = scmp.ge.s32.totalorder %s9, 4
    %s19 = sphi 0, %s21
    %s22 = sphi 0, %s19
    %s23 = sphi 0, %s22
    %s39 = sphi 0, %s23
    %s43 = sphi 0, %s43
    %s45 = sphi 0, %s43
    %s46 = sphi 0, %s45
    %s60 = sphi 0, %s46
    %s64 = sphi 0, %s64
    %s66 = sphi 0, %s64
    %s67 = sphi 0, %s66
    %s81 = sphi 0, %s67
    %s87 = sphi 0, %s89
    %s90 = sphi 0, %s87
    %s91 = sphi 0, %s90
    %s107 = sphi 0, %s91
  $region4: #{_lambda_.5} parent=0 // loop_header_branch
    %12 = sbr.rel (%p10) target = $region8
  $region5: #{_lambda_.5} parent=0 // loop_body
    %s14 = ssub.s32 %s9, 1
    %s15 = ssub.s32 %s9, 2
    %s16 = sadd.s32 %s9, 1
    %s17 = ssub.s32 %s9, %s16
    %p18 = scmp.eq.s32.totalorder %s17, 0
    %s20 = sadd.s32 %s19, 1
    %s21 = scalar_select %p18, %s19, %s20
    %p24 = pneg %p18
    %p25 = scmp.eq.s32.totalorder %s9, 1
    %p26 = por %p24, %p25
    %p27 = scmp.ne.s32.totalorder %s19, %s22
    %p28 = scmp.eq.s32.totalorder %s9, 0
    %p29 = por %p27, %p28
    %p30 = scmp.ne.s32.totalorder %s19, %s22
    %p31 = scmp.eq.s32.totalorder %s14, 1
    %p32 = por %p30, %p31
    %p33 = scmp.ne.s32.totalorder %s22, %s23
    %p34 = scmp.eq.s32.totalorder %s14, 0
    %p35 = por %p33, %p34
    %p36 = scmp.ne.s32.totalorder %s22, %s23
    %p37 = scmp.eq.s32.totalorder %s15, 1
    %p38 = por %p36, %p37
    %p40 = scmp.ne.s32.totalorder %s23, %s39
    %p41 = scmp.eq.s32.totalorder %s15, 0
    %p42 = por %p40, %p41
    %s44 = sadd.s32 %s43, 1
    %p47 = scmp.eq.s32.totalorder %s9, 1
    %p48 = scmp.ne.s32.totalorder %s43, %s45
    %p49 = scmp.eq.s32.totalorder %s9, 0
    %p50 = por %p48, %p49
    %p51 = scmp.ne.s32.totalorder %s43, %s45
    %p52 = scmp.eq.s32.totalorder %s14, 1
    %p53 = por %p51, %p52
    %p54 = scmp.ne.s32.totalorder %s45, %s46
    %p55 = scmp.eq.s32.totalorder %s14, 0
    %p56 = por %p54, %p55
    %p57 = scmp.ne.s32.totalorder %s45, %s46
    %p58 = scmp.eq.s32.totalorder %s15, 1
    %p59 = por %p57, %p58
    %p61 = scmp.ne.s32.totalorder %s46, %s60
    %p62 = scmp.eq.s32.totalorder %s15, 0
    %p63 = por %p61, %p62
    %s65 = sadd.s32 %s64, 1
    %p68 = scmp.eq.s32.totalorder %s9, 1
    %p69 = scmp.ne.s32.totalorder %s64, %s66
    %p70 = scmp.eq.s32.totalorder %s9, 0
    %p71 = por %p69, %p70
    %p72 = scmp.ne.s32.totalorder %s64, %s66
    %p73 = scmp.eq.s32.totalorder %s14, 1
    %p74 = por %p72, %p73
    %p75 = scmp.ne.s32.totalorder %s66, %s67
    %p76 = scmp.eq.s32.totalorder %s14, 0
    %p77 = por %p75, %p76
    %p78 = scmp.ne.s32.totalorder %s66, %s67
    %p79 = scmp.eq.s32.totalorder %s15, 1
    %p80 = por %p78, %p79
    %p82 = scmp.ne.s32.totalorder %s67, %s81
    %p83 = scmp.eq.s32.totalorder %s15, 0
    %p84 = por %p82, %p83
    %s85 = ssub.s32 %s9, %s16
    %p86 = scmp.eq.s32.totalorder %s85, 0
    %s88 = sadd.s32 %s87, 1
    %s89 = scalar_select %p86, %s87, %s88
    %p92 = pneg %p86
    %p93 = scmp.eq.s32.totalorder %s9, 1
    %p94 = por %p92, %p93
    %p95 = scmp.ne.s32.totalorder %s87, %s90
    %p96 = scmp.eq.s32.totalorder %s9, 0
    %p97 = por %p95, %p96
    %p98 = scmp.ne.s32.totalorder %s87, %s90
    %p99 = scmp.eq.s32.totalorder %s14, 1
    %p100 = por %p98, %p99
    %p101 = scmp.ne.s32.totalorder %s90, %s91
    %p102 = scmp.eq.s32.totalorder %s14, 0
    %p103 = por %p101, %p102
    %p104 = scmp.ne.s32.totalorder %s90, %s91
    %p105 = scmp.eq.s32.totalorder %s15, 1
    %p106 = por %p104, %p105
    %p108 = scmp.ne.s32.totalorder %s91, %s107
    %p109 = scmp.eq.s32.totalorder %s15, 0
    %p110 = por %p108, %p109
    %p111 = scmp.le.s32.totalorder 1, %s9
    %p112 = scmp.lt.s32.totalorder %s9, 3
    %p113 = pnand %p111, %p112
    %p114 = pneg %p113
    // Predicated region
    $region9: #{_lambda_.5} parent=5 // pred_check
      _
    $region10: #{_lambda_.5} parent=5 // pred_check_branch
      %116 = sbr.rel (%p113) target = $region12
    $region11: #{_lambda_.5} parent=5 // pred_region
      %s117 = ssub.s32 %s9, 1
      // Predicated region
      $region13: #{_lambda_.5} parent=11 // pred_check
        %p118 = pneg %p56
      $region14: #{_lambda_.5} parent=11 // pred_check_branch
        %120 = sbr.rel (%p118) target = $region16
      $region15: #{_lambda_.5} parent=11 // pred_region
        _
      $region16: #{_lambda_.5} parent=11 // pred_fallthru
        _
      // Predicated region
      $region17: #{_lambda_.5} parent=11 // pred_check
        %p121 = pneg %p77
      $region18: #{_lambda_.5} parent=11 // pred_check_branch
        %123 = sbr.rel (%p121) target = $region20
      $region19: #{_lambda_.5} parent=11 // pred_region
        _
      $region20: #{_lambda_.5} parent=11 // pred_fallthru
        _
    $region12: #{_lambda_.5} parent=5 // pred_fallthru
      _
    %p124 = scmp.lt.s32.totalorder %s9, 2
    // Predicated region
    $region21: #{_lambda_.5} parent=5 // pred_check
      %p125 = pneg %p124
    $region22: #{_lambda_.5} parent=5 // pred_check_branch
      %127 = sbr.rel (%p125) target = $region24
    $region23: #{_lambda_.5} parent=5 // pred_region
      // Predicated region
      $region25: #{_lambda_.5} parent=23 // pred_check
        %p128 = pneg %p29
      $region26: #{_lambda_.5} parent=23 // pred_check_branch
        %130 = sbr.rel (%p128) target = $region28
      $region27: #{_lambda_.5} parent=23 // pred_region
        %p131 = scmp.lt.s32.totalorder %s9, 1
        %s132 = scalar_select %p131, %s9, 1
        %s133 = smul.addr %s132, 12
        %s134 = smul.addr %s133, 4
        %s135 = scalar_lea.vmem %s0, %s134
      $region28: #{_lambda_.5} parent=23 // pred_fallthru
        _
    $region24: #{_lambda_.5} parent=5 // pred_fallthru
      _
    %p136 = scmp.le.s32.totalorder 1, %s9
    %p137 = scmp.lt.s32.totalorder %s9, 3
    %p138 = pnand %p136, %p137
    %p139 = pneg %p138
    // Predicated region
    $region29: #{_lambda_.5} parent=5 // pred_check
      _
    $region30: #{_lambda_.5} parent=5 // pred_check_branch
      %141 = sbr.rel (%p138) target = $region32
    $region31: #{_lambda_.5} parent=5 // pred_region
      %s142 = ssub.s32 %s9, 1
      %p143 = scmp.lt.s32.totalorder %s14, 1
      %s144 = scalar_select %p143, %s14, 1
      %s145 = smul.addr %s144, 12
      %s146 = smul.addr %s145, 4
      %s147 = scalar_lea.vmem %s0, %s146
      %p148 = pneg %p35
      %p149 = pneg %p32
      %p150 = pneg %p56
      %p151 = pneg %p53
      %p152 = pneg %p77
      %p153 = pneg %p74
      %p154 = pneg %p103
      %p155 = pneg %p100
      %p156 = scmp.lt.s32.totalorder %s14, 1
      %s157 = scalar_select %p156, %s14, 1
      %s158 = smul.addr %s157, 9
      %s159 = smul.addr %s158, 4
      %s160 = scalar_lea.vmem %s3, %s159
      %p161 = scmp.lt.s32.totalorder %s14, 1
      %s162 = scalar_select %p161, %s14, 1
      %s163 = smul.addr %s162, 12
      %s164 = smul.addr %s163, 4
      %s165 = scalar_lea.vmem %s0, %s164
      %p166 = scmp.lt.s32.totalorder %s14, 1
      %s167 = scalar_select %p166, %s14, 1
      %s168 = smul.addr %s167, 9
      %s169 = smul.addr %s168, 4
      %s170 = scalar_lea.vmem %s3, %s169
      %v172 = vld [vmem:[%s165] sm:$0xf]
      %v173 = vld [vmem:[%s165 + $0x4] sm:$0xf]
      %v174 = vld [vmem:[%s165 + $0x8] sm:$0xf]
      %v175 = vld [vmem:[%s165 + $0xc] sm:$0xf]
      %v176 = vld [vmem:[%s165 + $0x10] sm:$0xf]
      %v177 = vld [vmem:[%s165 + $0x14] sm:$0xf]
      %v178 = vld [vmem:[%s165 + $0x18] sm:$0xf]
      %v179 = vld [vmem:[%s165 + $0x1c] sm:$0xf]
      %v180 = vld [vmem:[%s165 + $0x20] sm:$0xf]
      %v181 = vld [vmem:[%s1] sm:$0xf]
      %v182 = vld [vmem:[%s1 + $0x4] sm:$0xf]
      %v183 = vld [vmem:[%s1 + $0x8] sm:$0xf]
      %v184 = vld [vmem:[%s1 + $0xc] sm:$0xf]
      %v185 = vld [vmem:[%s1 + $0x10] sm:$0xf]
      %v186 = vld [vmem:[%s1 + $0x14] sm:$0xf]
      %v187 = vld [vmem:[%s1 + $0x18] sm:$0xf]
      %v188 = vld [vmem:[%s1 + $0x1c] sm:$0xf]
      %v189 = vld [vmem:[%s165 + $0x24] sm:$0x1]
      %s190 = scalar_lea.vmem %s1, 32
      %v191 = vld [vmem:[%s190] sm:$0xf]
      %v192 = vld [vmem:[%s190 + $0x4] sm:$0xf]
      %v193 = vld [vmem:[%s190 + $0x8] sm:$0xf]
      %v194 = vld [vmem:[%s190 + $0xc] sm:$0xf]
      %v195 = vld [vmem:[%s190 + $0x10] sm:$0xf]
      %v196 = vld [vmem:[%s190 + $0x14] sm:$0xf]
      %v197 = vld [vmem:[%s190 + $0x18] sm:$0xf]
      %v198 = vld [vmem:[%s190 + $0x1c] sm:$0xf]
      %v209 = vunpack.c.l.b16 %v172
      %v210 = vunpack.c.l.b16 %v173
      %v211 = vunpack.c.l.b16 %v174
      %v212 = vunpack.c.l.b16 %v175
      %v213 = vunpack.c.l.b16 %v176
      %v214 = vunpack.c.l.b16 %v177
      %v215 = vunpack.c.l.b16 %v178
      %v216 = vunpack.c.l.b16 %v179
      %v217 = vunpack.c.l.b16 %v180
      %v218 = vunpack.c.l.b16 %v189
      %v219 = vpack.c.b16 %v210, %v209
      %v220 = vpack.c.b16 %v212, %v211
      %v221 = vpack.c.b16 %v214, %v213
      %v222 = vpack.c.b16 %v216, %v215
      %v223 = vpack.c.b16 %v218, %v217
      %vm224 = vsmask.f32 7424
      %v226 = vshrl.u32 %v219, 16
      %v228 = vshll.u32 %v219, 16
      %v230 = vrot.slane %v228, 1
      %v231 = vor.u32 %v226, %v230
      %v233 = vshll.u32 %v220, 16
      %v235 = vrot.slane %v233, 1
      %v236 = vsel %vm224, %v231, %v235
      %v237 = vshrl.u32 %v220, 16
      %v239 = vor.u32 %v237, %v235
      %v241 = vshll.u32 %v221, 16
      %v243 = vrot.slane %v241, 1
      %v244 = vsel %vm224, %v239, %v243
      %v245 = vshrl.u32 %v221, 16
      %v247 = vor.u32 %v245, %v243
      %v249 = vshll.u32 %v222, 16
      %v251 = vrot.slane %v249, 1
      %v252 = vsel %vm224, %v247, %v251
      %v253 = vshrl.u32 %v222, 16
      %v255 = vor.u32 %v253, %v251
      %v257 = vshll.u32 %v223, 16
      %v259 = vrot.slane %v257, 1
      %v260 = vsel %vm224, %v255, %v259
      %v261 = vshrl.u32 %v223, 16
      %v263 = vor.u32 %v261, %v259
      %v272 = vunpack.c.l.b16 %v191
      %v273 = vunpack.c.l.b16 %v192
      %v274 = vunpack.c.l.b16 %v193
      %v275 = vunpack.c.l.b16 %v194
      %v276 = vunpack.c.l.b16 %v195
      %v277 = vunpack.c.l.b16 %v196
      %v278 = vunpack.c.l.b16 %v197
      %v279 = vunpack.c.l.b16 %v198
      %v280 = vpack.c.b16 %v273, %v272
      %v281 = vpack.c.b16 %v275, %v274
      %v282 = vpack.c.b16 %v277, %v276
      %v283 = vpack.c.b16 %v279, %v278
      %vm288 = vcmask 523264
      %v290 = vsel %vm288, %v236, 0
      %v293 = vsel %vm288, %v244, 0
      %v296 = vsel %vm288, %v252, 0
      %v299 = vsel %vm288, %v260, 0
      %v302 = vsel %vm288, %v263, 0
      %304 = vmatprep.subr.bf16.mxu0 0
      %305 = vmatpush1.bf16.msra.mxu0 0
      %306 = vmatprep.subr.bf16.mxu0 0
      %307 = vmatpush1.bf16.msra.mxu0 0
      %308 = vmatprep.subr.bf16.mxu0 0
      %309 = vmatpush1.bf16.msra.mxu0 0
      %310 = vmatprep.subr.bf16.mxu0 0
      %311 = vmatpush1.bf16.msra.mxu0 0
      %312 = vmatprep.subr.bf16.mxu0 0
      %313 = vmatpush1.bf16.msra.mxu0 %v283
      %314 = vmatprep.subr.bf16.mxu0 0
      %315 = vmatpush1.bf16.msra.mxu0 %v282
      %316 = vmatprep.subr.bf16.mxu0 0
      %317 = vmatpush1.bf16.msra.mxu0 %v281
      %318 = vmatprep.subr.bf16.mxu0 0
      %319 = vmatpush1.bf16.msra.mxu0 %v280
      %320 = vmatprep.subr.bf16.mxu0 0
      %321 = vmatpush2.bf16.msra.mxu0 0
      %322 = vmatprep.subr.bf16.mxu0 0
      %323 = vmatpush2.bf16.msra.mxu0 0
      %324 = vmatprep.subr.bf16.mxu0 0
      %325 = vmatpush2.bf16.msra.mxu0 0
      %326 = vmatprep.subr.bf16.mxu0 0
      %327 = vmatpush2.bf16.msra.mxu0 0
      %328 = vmatprep.subr.bf16.mxu0 0
      %329 = vmatpush2.bf16.msra.mxu0 0
      %330 = vmatprep.subr.bf16.mxu0 0
      %331 = vmatpush2.bf16.msra.mxu0 0
      %332 = vmatprep.subr.bf16.mxu0 0
      %333 = vmatpush2.bf16.msra.mxu0 0
      %334 = vmatprep.subr.bf16.mxu0 0
      %335 = vmatpush2.bf16.msra.mxu0 0
      %336 = vmatprep.mubr.bf16.mxu0 0
      %337 = vmatmul.mubr.bf16.gmra.mxu0 %v290
      %v338 = vpop.f32.mrf.mxu0
      %v339 = vadd.f32 0.0, %v338
      %v340 = vpop.f32.mrf.mxu0
      %v341 = vpop.f32.mrf.mxu0
      %v342 = vadd.f32 0.0, %v341
      %v343 = vpop.f32.mrf.mxu0
      %344 = vmatprep.mubr.bf16.mxu0 0
      %345 = vmatmul.mubr.bf16.gmra.mxu0 %v293
      %v346 = vpop.f32.mrf.mxu0
      %v347 = vadd.f32 0.0, %v346
      %v348 = vpop.f32.mrf.mxu0
      %v349 = vpop.f32.mrf.mxu0
      %v350 = vadd.f32 0.0, %v349
      %v351 = vpop.f32.mrf.mxu0
      %352 = vmatprep.mubr.bf16.mxu0 0
      %353 = vmatmul.mubr.bf16.gmra.mxu0 %v296
      %v354 = vpop.f32.mrf.mxu0
      %v355 = vadd.f32 0.0, %v354
      %v356 = vpop.f32.mrf.mxu0
      %v357 = vpop.f32.mrf.mxu0
      %v358 = vadd.f32 0.0, %v357
      %v359 = vpop.f32.mrf.mxu0
      %360 = vmatprep.mubr.bf16.mxu0 0
      %361 = vmatmul.mubr.bf16.gmra.mxu0 %v299
      %v362 = vpop.f32.mrf.mxu0
      %v363 = vadd.f32 0.0, %v362
      %v364 = vpop.f32.mrf.mxu0
      %v365 = vpop.f32.mrf.mxu0
      %v366 = vadd.f32 0.0, %v365
      %v367 = vpop.f32.mrf.mxu0
      %368 = vmatprep.mubr.bf16.mxu0 0
      %369 = vmatmul.mubr.bf16.gmra.mxu0 %v302
      %v370 = vpop.f32.mrf.mxu0
      %v371 = vadd.f32 0.0, %v370
      %v372 = vpop.f32.mrf.mxu0
      %v373 = vpop.f32.mrf.mxu0
      %v374 = vpop.f32.mrf.mxu0
      %375 = vdwg.mxu0
      %v376 = vpack.c.b16 %v217, %v217
      %v385 = vunpack.c.l.b16 %v181
      %v386 = vunpack.c.l.b16 %v182
      %v387 = vunpack.c.l.b16 %v183
      %v388 = vunpack.c.l.b16 %v184
      %v389 = vunpack.c.l.b16 %v185
      %v390 = vunpack.c.l.b16 %v186
      %v391 = vunpack.c.l.b16 %v187
      %v392 = vunpack.c.l.b16 %v188
      %v393 = vpack.c.b16 %v386, %v385
      %v394 = vpack.c.b16 %v388, %v387
      %v395 = vpack.c.b16 %v390, %v389
      %v396 = vpack.c.b16 %v392, %v391
      %v401 = vsel %vm288, %v219, 0
      %v403 = vsel %vm288, %v220, 0
      %v405 = vsel %vm288, %v221, 0
      %v407 = vsel %vm288, %v222, 0
      %v410 = vsel %vm288, %v376, 0
      %412 = vmatprep.subr.bf16.mxu0 0
      %413 = vmatpush1.bf16.msra.mxu0 0
      %414 = vmatprep.subr.bf16.mxu0 0
      %415 = vmatpush1.bf16.msra.mxu0 0
      %416 = vmatprep.subr.bf16.mxu0 0
      %417 = vmatpush1.bf16.msra.mxu0 0
      %418 = vmatprep.subr.bf16.mxu0 0
      %419 = vmatpush1.bf16.msra.mxu0 0
      %420 = vmatprep.subr.bf16.mxu0 0
      %421 = vmatpush1.bf16.msra.mxu0 %v396
      %422 = vmatprep.subr.bf16.mxu0 0
      %423 = vmatpush1.bf16.msra.mxu0 %v395
      %424 = vmatprep.subr.bf16.mxu0 0
      %425 = vmatpush1.bf16.msra.mxu0 %v394
      %426 = vmatprep.subr.bf16.mxu0 0
      %427 = vmatpush1.bf16.msra.mxu0 %v393
      %428 = vmatprep.subr.bf16.mxu0 0
      %429 = vmatpush2.bf16.msra.mxu0 0
      %430 = vmatprep.subr.bf16.mxu0 0
      %431 = vmatpush2.bf16.msra.mxu0 0
      %432 = vmatprep.subr.bf16.mxu0 0
      %433 = vmatpush2.bf16.msra.mxu0 0
      %434 = vmatprep.subr.bf16.mxu0 0
      %435 = vmatpush2.bf16.msra.mxu0 0
      %436 = vmatprep.subr.bf16.mxu0 0
      %437 = vmatpush2.bf16.msra.mxu0 0
      %438 = vmatprep.subr.bf16.mxu0 0
      %439 = vmatpush2.bf16.msra.mxu0 0
      %440 = vmatprep.subr.bf16.mxu0 0
      %441 = vmatpush2.bf16.msra.mxu0 0
      %442 = vmatprep.subr.bf16.mxu0 0
      %443 = vmatpush2.bf16.msra.mxu0 0
      %444 = vmatprep.mubr.bf16.mxu0 0
      %445 = vmatmul.mubr.bf16.gmra.mxu0 %v401
      %v446 = vpop.f32.mrf.mxu0
      %v447 = vadd.f32 %v339, %v446
      %v448 = vpop.f32.mrf.mxu0
      %v449 = vpop.f32.mrf.mxu0
      %v450 = vadd.f32 %v342, %v449
      %v451 = vpop.f32.mrf.mxu0
      %452 = vmatprep.mubr.bf16.mxu0 0
      %453 = vmatmul.mubr.bf16.gmra.mxu0 %v403
      %v454 = vpop.f32.mrf.mxu0
      %v455 = vadd.f32 %v347, %v454
      %v456 = vpop.f32.mrf.mxu0
      %v457 = vpop.f32.mrf.mxu0
      %v458 = vadd.f32 %v350, %v457
      %v459 = vpop.f32.mrf.mxu0
      %460 = vmatprep.mubr.bf16.mxu0 0
      %461 = vmatmul.mubr.bf16.gmra.mxu0 %v405
      %v462 = vpop.f32.mrf.mxu0
      %v463 = vadd.f32 %v355, %v462
      %v464 = vpop.f32.mrf.mxu0
      %v465 = vpop.f32.mrf.mxu0
      %v466 = vadd.f32 %v358, %v465
      %v467 = vpop.f32.mrf.mxu0
      %468 = vmatprep.mubr.bf16.mxu0 0
      %469 = vmatmul.mubr.bf16.gmra.mxu0 %v407
      %v470 = vpop.f32.mrf.mxu0
      %v471 = vadd.f32 %v363, %v470
      %v472 = vpop.f32.mrf.mxu0
      %v473 = vpop.f32.mrf.mxu0
      %v474 = vadd.f32 %v366, %v473
      %v475 = vpop.f32.mrf.mxu0
      %476 = vmatprep.mubr.bf16.mxu0 0
      %477 = vmatmul.mubr.bf16.gmra.mxu0 %v410
      %v478 = vpop.f32.mrf.mxu0
      %v479 = vadd.f32 %v371, %v478
      %v480 = vpop.f32.mrf.mxu0
      %v481 = vpop.f32.mrf.mxu0
      %v482 = vpop.f32.mrf.mxu0
      %483 = vdwg.mxu0
      %v484 = vld [vmem:[%s165 + $0x4] sm:$0xf]
      %v485 = vld [vmem:[%s165 + $0x8] sm:$0xf]
      %v486 = vld [vmem:[%s165 + $0xc] sm:$0xf]
      %v487 = vld [vmem:[%s165 + $0x10] sm:$0xf]
      %v488 = vld [vmem:[%s165 + $0x14] sm:$0xf]
      %v489 = vld [vmem:[%s165 + $0x18] sm:$0xf]
      %v490 = vld [vmem:[%s165 + $0x1c] sm:$0xf]
      %v491 = vld [vmem:[%s165 + $0x20] sm:$0xf]
      %v492 = vld [vmem:[%s165 + $0x24] sm:$0xf]
      %v493 = vld [vmem:[%s165 + $0x28] sm:$0x1]
      %s494 = scalar_lea.vmem %s1, 64
      %v495 = vld [vmem:[%s494] sm:$0xf]
      %v496 = vld [vmem:[%s494 + $0x4] sm:$0xf]
      %v497 = vld [vmem:[%s494 + $0x8] sm:$0xf]
      %v498 = vld [vmem:[%s494 + $0xc] sm:$0xf]
      %v499 = vld [vmem:[%s494 + $0x10] sm:$0xf]
      %v500 = vld [vmem:[%s494 + $0x14] sm:$0xf]
      %v501 = vld [vmem:[%s494 + $0x18] sm:$0xf]
      %v502 = vld [vmem:[%s494 + $0x1c] sm:$0xf]
      %v513 = vunpack.c.l.b16 %v484
      %v514 = vunpack.c.l.b16 %v485
      %v515 = vunpack.c.l.b16 %v486
      %v516 = vunpack.c.l.b16 %v487
      %v517 = vunpack.c.l.b16 %v488
      %v518 = vunpack.c.l.b16 %v489
      %v519 = vunpack.c.l.b16 %v490
      %v520 = vunpack.c.l.b16 %v491
      %v521 = vunpack.c.l.b16 %v492
      %v522 = vunpack.c.l.b16 %v493
      %v523 = vpack.c.b16 %v514, %v513
      %v524 = vpack.c.b16 %v516, %v515
      %v525 = vpack.c.b16 %v518, %v517
      %v526 = vpack.c.b16 %v520, %v519
      %v527 = vpack.c.b16 %v522, %v521
      %v529 = vshrl.u32 %v523, 16
      %v531 = vshll.u32 %v523, 16
      %v533 = vrot.slane %v531, 1
      %v534 = vor.u32 %v529, %v533
      %v536 = vshll.u32 %v524, 16
      %v538 = vrot.slane %v536, 1
      %v539 = vsel %vm224, %v534, %v538
      %v540 = vshrl.u32 %v524, 16
      %v542 = vor.u32 %v540, %v538
      %v544 = vshll.u32 %v525, 16
      %v546 = vrot.slane %v544, 1
      %v547 = vsel %vm224, %v542, %v546
      %v548 = vshrl.u32 %v525, 16
      %v550 = vor.u32 %v548, %v546
      %v552 = vshll.u32 %v526, 16
      %v554 = vrot.slane %v552, 1
      %v555 = vsel %vm224, %v550, %v554
      %v556 = vshrl.u32 %v526, 16
      %v558 = vor.u32 %v556, %v554
      %v560 = vshll.u32 %v527, 16
      %v562 = vrot.slane %v560, 1
      %v563 = vsel %vm224, %v558, %v562
      %v564 = vshrl.u32 %v527, 16
      %v566 = vor.u32 %v564, %v562
      %v575 = vunpack.c.l.b16 %v495
      %v576 = vunpack.c.l.b16 %v496
      %v577 = vunpack.c.l.b16 %v497
      %v578 = vunpack.c.l.b16 %v498
      %v579 = vunpack.c.l.b16 %v499
      %v580 = vunpack.c.l.b16 %v500
      %v581 = vunpack.c.l.b16 %v501
      %v582 = vunpack.c.l.b16 %v502
      %v583 = vpack.c.b16 %v576, %v575
      %v584 = vpack.c.b16 %v578, %v577
      %v585 = vpack.c.b16 %v580, %v579
      %v586 = vpack.c.b16 %v582, %v581
      %v592 = vsel %vm288, %v539, 0
      %v595 = vsel %vm288, %v547, 0
      %v598 = vsel %vm288, %v555, 0
      %v601 = vsel %vm288, %v563, 0
      %v604 = vsel %vm288, %v566, 0
      %606 = vmatprep.subr.bf16.mxu0 0
      %607 = vmatpush1.bf16.msra.mxu0 0
      %608 = vmatprep.subr.bf16.mxu0 0
      %609 = vmatpush1.bf16.msra.mxu0 0
      %610 = vmatprep.subr.bf16.mxu0 0
      %611 = vmatpush1.bf16.msra.mxu0 0
      %612 = vmatprep.subr.bf16.mxu0 0
      %613 = vmatpush1.bf16.msra.mxu0 0
      %614 = vmatprep.subr.bf16.mxu0 0
      %615 = vmatpush1.bf16.msra.mxu0 %v586
      %616 = vmatprep.subr.bf16.mxu0 0
      %617 = vmatpush1.bf16.msra.mxu0 %v585
      %618 = vmatprep.subr.bf16.mxu0 0
      %619 = vmatpush1.bf16.msra.mxu0 %v584
      %620 = vmatprep.subr.bf16.mxu0 0
      %621 = vmatpush1.bf16.msra.mxu0 %v583
      %622 = vmatprep.subr.bf16.mxu0 0
      %623 = vmatpush2.bf16.msra.mxu0 0
      %624 = vmatprep.subr.bf16.mxu0 0
      %625 = vmatpush2.bf16.msra.mxu0 0
      %626 = vmatprep.subr.bf16.mxu0 0
      %627 = vmatpush2.bf16.msra.mxu0 0
      %628 = vmatprep.subr.bf16.mxu0 0
      %629 = vmatpush2.bf16.msra.mxu0 0
      %630 = vmatprep.subr.bf16.mxu0 0
      %631 = vmatpush2.bf16.msra.mxu0 0
      %632 = vmatprep.subr.bf16.mxu0 0
      %633 = vmatpush2.bf16.msra.mxu0 0
      %634 = vmatprep.subr.bf16.mxu0 0
      %635 = vmatpush2.bf16.msra.mxu0 0
      %636 = vmatprep.subr.bf16.mxu0 0
      %637 = vmatpush2.bf16.msra.mxu0 0
      %638 = vmatprep.mubr.bf16.mxu0 0
      %639 = vmatmul.mubr.bf16.gmra.mxu0 %v592
      %v640 = vpop.f32.mrf.mxu0
      %v641 = vadd.f32 0.0, %v640
      %v642 = vpop.f32.mrf.mxu0
      %v643 = vpop.f32.mrf.mxu0
      %v644 = vadd.f32 0.0, %v643
      %v645 = vpop.f32.mrf.mxu0
      %646 = vmatprep.mubr.bf16.mxu0 0
      %647 = vmatmul.mubr.bf16.gmra.mxu0 %v595
      %v648 = vpop.f32.mrf.mxu0
      %v649 = vadd.f32 0.0, %v648
      %v650 = vpop.f32.mrf.mxu0
      %v651 = vpop.f32.mrf.mxu0
      %v652 = vadd.f32 0.0, %v651
      %v653 = vpop.f32.mrf.mxu0
      %654 = vmatprep.mubr.bf16.mxu0 0
      %655 = vmatmul.mubr.bf16.gmra.mxu0 %v598
      %v656 = vpop.f32.mrf.mxu0
      %v657 = vadd.f32 0.0, %v656
      %v658 = vpop.f32.mrf.mxu0
      %v659 = vpop.f32.mrf.mxu0
      %v660 = vadd.f32 0.0, %v659
      %v661 = vpop.f32.mrf.mxu0
      %662 = vmatprep.mubr.bf16.mxu0 0
      %663 = vmatmul.mubr.bf16.gmra.mxu0 %v601
      %v664 = vpop.f32.mrf.mxu0
      %v665 = vadd.f32 0.0, %v664
      %v666 = vpop.f32.mrf.mxu0
      %v667 = vpop.f32.mrf.mxu0
      %v668 = vadd.f32 0.0, %v667
      %v669 = vpop.f32.mrf.mxu0
      %670 = vmatprep.mubr.bf16.mxu0 0
      %671 = vmatmul.mubr.bf16.gmra.mxu0 %v604
      %v672 = vpop.f32.mrf.mxu0
      %v673 = vadd.f32 0.0, %v672
      %v674 = vpop.f32.mrf.mxu0
      %v675 = vpop.f32.mrf.mxu0
      %v676 = vpop.f32.mrf.mxu0
      %677 = vdwg.mxu0
      %v678 = vadd.f32 %v447, %v641
      %v679 = vadd.f32 %v450, %v644
      %v680 = vadd.f32 %v455, %v649
      %v681 = vadd.f32 %v458, %v652
      %v682 = vadd.f32 %v463, %v657
      %v683 = vadd.f32 %v466, %v660
      %v684 = vadd.f32 %v471, %v665
      %v685 = vadd.f32 %v474, %v668
      %v686 = vadd.f32 %v479, %v673
      %v687 = vld [vmem:[%s165 + $0x4] sm:$0xe]
      %s688 = scalar_lea.vmem %s1, 96
      %v689 = vld [vmem:[%s688] sm:$0xf]
      %v690 = vld [vmem:[%s688 + $0x4] sm:$0xf]
      %v691 = vld [vmem:[%s688 + $0x8] sm:$0xf]
      %v692 = vld [vmem:[%s688 + $0xc] sm:$0xf]
      %v693 = vld [vmem:[%s688 + $0x10] sm:$0xf]
      %v694 = vld [vmem:[%s688 + $0x14] sm:$0xf]
      %v695 = vld [vmem:[%s688 + $0x18] sm:$0xf]
      %v696 = vld [vmem:[%s688 + $0x1c] sm:$0xf]
      %v698 = vunpack.c.l.b16 %v687
      %v699 = vpack.c.b16 %v514, %v698
      %vm700 = vcmask 1046528
      %v701 = vrot.slane %v699, 1
      %v702 = vrot.slane %v524, 1
      %v703 = vsel %vm700, %v701, %v702
      %v704 = vrot.slane %v525, 1
      %v705 = vsel %vm700, %v702, %v704
      %v706 = vrot.slane %v526, 1
      %v707 = vsel %vm700, %v704, %v706
      %v708 = vrot.slane %v527, 1
      %v709 = vsel %vm700, %v706, %v708
      %v718 = vunpack.c.l.b16 %v689
      %v719 = vunpack.c.l.b16 %v690
      %v720 = vunpack.c.l.b16 %v691
      %v721 = vunpack.c.l.b16 %v692
      %v722 = vunpack.c.l.b16 %v693
      %v723 = vunpack.c.l.b16 %v694
      %v724 = vunpack.c.l.b16 %v695
      %v725 = vunpack.c.l.b16 %v696
      %v726 = vpack.c.b16 %v719, %v718
      %v727 = vpack.c.b16 %v721, %v720
      %v728 = vpack.c.b16 %v723, %v722
      %v729 = vpack.c.b16 %v725, %v724
      %v735 = vsel %vm288, %v703, 0
      %v738 = vsel %vm288, %v705, 0
      %v741 = vsel %vm288, %v707, 0
      %v744 = vsel %vm288, %v709, 0
      %v747 = vsel %vm288, %v708, 0
      %749 = vmatprep.subr.bf16.mxu0 0
      %750 = vmatpush1.bf16.msra.mxu0 0
      %751 = vmatprep.subr.bf16.mxu0 0
      %752 = vmatpush1.bf16.msra.mxu0 0
      %753 = vmatprep.subr.bf16.mxu0 0
      %754 = vmatpush1.bf16.msra.mxu0 0
      %755 = vmatprep.subr.bf16.mxu0 0
      %756 = vmatpush1.bf16.msra.mxu0 0
      %757 = vmatprep.subr.bf16.mxu0 0
      %758 = vmatpush1.bf16.msra.mxu0 %v729
      %759 = vmatprep.subr.bf16.mxu0 0
      %760 = vmatpush1.bf16.msra.mxu0 %v728
      %761 = vmatprep.subr.bf16.mxu0 0
      %762 = vmatpush1.bf16.msra.mxu0 %v727
      %763 = vmatprep.subr.bf16.mxu0 0
      %764 = vmatpush1.bf16.msra.mxu0 %v726
      %765 = vmatprep.subr.bf16.mxu0 0
      %766 = vmatpush2.bf16.msra.mxu0 0
      %767 = vmatprep.subr.bf16.mxu0 0
      %768 = vmatpush2.bf16.msra.mxu0 0
      %769 = vmatprep.subr.bf16.mxu0 0
      %770 = vmatpush2.bf16.msra.mxu0 0
      %771 = vmatprep.subr.bf16.mxu0 0
      %772 = vmatpush2.bf16.msra.mxu0 0
      %773 = vmatprep.subr.bf16.mxu0 0
      %774 = vmatpush2.bf16.msra.mxu0 0
      %775 = vmatprep.subr.bf16.mxu0 0
      %776 = vmatpush2.bf16.msra.mxu0 0
      %777 = vmatprep.subr.bf16.mxu0 0
      %778 = vmatpush2.bf16.msra.mxu0 0
      %779 = vmatprep.subr.bf16.mxu0 0
      %780 = vmatpush2.bf16.msra.mxu0 0
      %781 = vmatprep.mubr.bf16.mxu0 0
      %782 = vmatmul.mubr.bf16.gmra.mxu0 %v735
      %v783 = vpop.f32.mrf.mxu0
      %v784 = vadd.f32 0.0, %v783
      %v785 = vpop.f32.mrf.mxu0
      %v786 = vpop.f32.mrf.mxu0
      %v787 = vadd.f32 0.0, %v786
      %v788 = vpop.f32.mrf.mxu0
      %789 = vmatprep.mubr.bf16.mxu0 0
      %790 = vmatmul.mubr.bf16.gmra.mxu0 %v738
      %v791 = vpop.f32.mrf.mxu0
      %v792 = vadd.f32 0.0, %v791
      %v793 = vpop.f32.mrf.mxu0
      %v794 = vpop.f32.mrf.mxu0
      %v795 = vadd.f32 0.0, %v794
      %v796 = vpop.f32.mrf.mxu0
      %797 = vmatprep.mubr.bf16.mxu0 0
      %798 = vmatmul.mubr.bf16.gmra.mxu0 %v741
      %v799 = vpop.f32.mrf.mxu0
      %v800 = vadd.f32 0.0, %v799
      %v801 = vpop.f32.mrf.mxu0
      %v802 = vpop.f32.mrf.mxu0
      %v803 = vadd.f32 0.0, %v802
      %v804 = vpop.f32.mrf.mxu0
      %805 = vmatprep.mubr.bf16.mxu0 0
      %806 = vmatmul.mubr.bf16.gmra.mxu0 %v744
      %v807 = vpop.f32.mrf.mxu0
      %v808 = vadd.f32 0.0, %v807
      %v809 = vpop.f32.mrf.mxu0
      %v810 = vpop.f32.mrf.mxu0
      %v811 = vadd.f32 0.0, %v810
      %v812 = vpop.f32.mrf.mxu0
      %813 = vmatprep.mubr.bf16.mxu0 0
      %814 = vmatmul.mubr.bf16.gmra.mxu0 %v747
      %v815 = vpop.f32.mrf.mxu0
      %v816 = vadd.f32 0.0, %v815
      %v817 = vpop.f32.mrf.mxu0
      %v818 = vpop.f32.mrf.mxu0
      %v819 = vpop.f32.mrf.mxu0
      %820 = vdwg.mxu0
      %v821 = vadd.f32 %v678, %v784
      %v822 = vadd.f32 %v679, %v787
      %v823 = vadd.f32 %v680, %v792
      %v824 = vadd.f32 %v681, %v795
      %v825 = vadd.f32 %v682, %v800
      %v826 = vadd.f32 %v683, %v803
      %v827 = vadd.f32 %v684, %v808
      %v828 = vadd.f32 %v685, %v811
      %v829 = vadd.f32 %v686, %v816
      %v830 = vld [vmem:[%s2] sm:$0x1]
      %v832 = vlaneseq
      %v833 = vshrl.u32 %v832, 7
      %v834 = vsub.s32 0, %v833
      %v835 = vrot.slane %v830, %v834
      %v837 = vadd.f32 %v821, %v835
      %v838 = vadd.f32 %v822, %v835
      %v839 = vadd.f32 %v823, %v835
      %v840 = vadd.f32 %v824, %v835
      %v841 = vadd.f32 %v825, %v835
      %v842 = vadd.f32 %v826, %v835
      %v843 = vadd.f32 %v827, %v835
      %v844 = vadd.f32 %v828, %v835
      %v845 = vadd.f32 %v829, %v835
      %v846 = vmax.f32 %v837, 0.0
      %v847 = vmax.f32 %v838, 0.0
      %v848 = vmax.f32 %v839, 0.0
      %v849 = vmax.f32 %v840, 0.0
      %v850 = vmax.f32 %v841, 0.0
      %v851 = vmax.f32 %v842, 0.0
      %v852 = vmax.f32 %v843, 0.0
      %v853 = vmax.f32 %v844, 0.0
      %v854 = vmax.f32 %v845, 0.0
      %v855 = vpack.c.bf16 %v847, %v846
      %v856 = vpack.c.bf16 %v849, %v848
      %v857 = vpack.c.bf16 %v851, %v850
      %v858 = vpack.c.bf16 %v853, %v852
      %v859 = vpack.c.bf16 %v854, %v854
      %v865 = vunpack.c.l.b16 %v855
      %v866 = vunpack.c.h.b16 %v855
      %v867 = vunpack.c.l.b16 %v856
      %v868 = vunpack.c.h.b16 %v856
      %v869 = vunpack.c.l.b16 %v857
      %v870 = vunpack.c.h.b16 %v857
      %v871 = vunpack.c.l.b16 %v858
      %v872 = vunpack.c.h.b16 %v858
      %v873 = vunpack.c.l.b16 %v859
      %v874 = vpack.c.b16 %v865, %v865
      %v875 = vpack.c.b16 %v866, %v866
      %v876 = vpack.c.b16 %v867, %v867
      %v877 = vpack.c.b16 %v868, %v868
      %v878 = vpack.c.b16 %v869, %v869
      %v879 = vpack.c.b16 %v870, %v870
      %v880 = vpack.c.b16 %v871, %v871
      %v881 = vpack.c.b16 %v872, %v872
      %v882 = vpack.c.b16 %v873, %v873
      %vm892 = vcmask 257024
      %893 = vst.msk [vmem:[%s170] sm:$0xf] %vm892, %v874
      %894 = vst.msk [vmem:[%s170 + $0x4] sm:$0xf] %vm892, %v875
      %895 = vst.msk [vmem:[%s170 + $0x8] sm:$0xf] %vm892, %v876
      %896 = vst.msk [vmem:[%s170 + $0xc] sm:$0xf] %vm892, %v877
      %897 = vst.msk [vmem:[%s170 + $0x10] sm:$0xf] %vm892, %v878
      %898 = vst.msk [vmem:[%s170 + $0x14] sm:$0xf] %vm892, %v879
      %899 = vst.msk [vmem:[%s170 + $0x18] sm:$0xf] %vm892, %v880
      %900 = vst.msk [vmem:[%s170 + $0x1c] sm:$0xf] %vm892, %v881
      %901 = vst.msk [vmem:[%s170 + $0x20] sm:$0xf] %vm892, %v882
      %p902 = scmp.lt.s32.totalorder %s14, 1
      %s903 = scalar_select %p902, %s14, 1
      %s904 = smul.addr %s903, 9
      %s905 = smul.addr %s904, 4
      %s906 = scalar_lea.vmem %s3, %s905
      // Predicated region
      $region33: #{_lambda_.5} parent=31 // pred_check
        %p907 = pneg %p100
      $region34: #{_lambda_.5} parent=31 // pred_check_branch
        %909 = sbr.rel (%p907) target = $region36
      $region35: #{_lambda_.5} parent=31 // pred_region
        _
      $region36: #{_lambda_.5} parent=31 // pred_fallthru
        _
    $region32: #{_lambda_.5} parent=5 // pred_fallthru
      _
    %p910 = scmp.le.s32.totalorder 2, %s9
    // Predicated region
    $region37: #{_lambda_.5} parent=5 // pred_check
      %p911 = pneg %p910
    $region38: #{_lambda_.5} parent=5 // pred_check_branch
      %913 = sbr.rel (%p911) target = $region40
    $region39: #{_lambda_.5} parent=5 // pred_region
      %s914 = ssub.s32 %s9, 2
      // Predicated region
      $region41: #{_lambda_.5} parent=39 // pred_check
        %p915 = pneg %p106
      $region42: #{_lambda_.5} parent=39 // pred_check_branch
        %917 = sbr.rel (%p915) target = $region44
      $region43: #{_lambda_.5} parent=39 // pred_region
        %p918 = scmp.lt.s32.totalorder %s15, 1
        %s919 = scalar_select %p918, %s15, 1
        %s920 = smul.addr %s919, 9
        %s921 = smul.addr %s920, 4
        %s922 = scalar_lea.vmem %s3, %s921
      $region44: #{_lambda_.5} parent=39 // pred_fallthru
        _
    $region40: #{_lambda_.5} parent=5 // pred_fallthru
      _
  $region6: #{_lambda_.5} parent=0 // loop_footer
    %s13 = sadd.s32 1, %s9
  $region7: #{_lambda_.5} parent=0 // loop_footer_branch
    %8 = sbr.rel target = $region3
  $region8: #{_lambda_.5} parent=0 // loop_exit
    _

// kernel: _lambda_.6
$region0: #{_lambda_.6}
  #allocation0 [shape = 'u32[]', space=smem, size = 0x4, offset = 0x4, fixed_abs, tag = 'smem constant byte address 0x4 - core index']
  #allocation1 [shape = 'u32[144,128]{1,0:T(1,128)}', space=vmem, size = 0x12000, scoped, tag = 'internal scratch']
  %s0 = inlined_call_operand.vmem [shape: bf16[2,110,32], index: 0, kind: input, shape index: {}]
  %s1 = inlined_call_operand.vmem [shape: bf16[9,32,32], index: 1, kind: input, shape index: {}]
  %s2 = inlined_call_operand.vmem [shape: f32[1,32], index: 2, kind: input, shape index: {}]
  %s3 = inlined_call_operand.vmem [shape: bf16[32,15], index: 3, kind: input, shape index: {}]
  %s4 = inlined_call_operand.vmem [shape: f32[1,15], index: 4, kind: input, shape index: {}]
  %s5 = inlined_call_operand.vmem [shape: f32[2,80,15], index: 5, kind: output, shape index: {}]
  %s6 = sld [smem:[#allocation0]]
  $region53: #{_lambda_.6} parent=0
    _
  %s8 = ssub.s32 1, %s6
  %s9 = scalar_select 0, %s8, %s6
  loop: start=0, step=1, limit=4
  $region2: #{_lambda_.6} parent=0 // loop_pre_header
    _
  $region3: #{_lambda_.6} parent=0 // loop_header
    %s11 = sphi 0, %s15
    %p12 = scmp.ge.s32.totalorder %s11, 4
    %s21 = sphi 0, %s23
    %s24 = sphi 0, %s21
    %s25 = sphi 0, %s24
    %s41 = sphi 0, %s25
    %s45 = sphi 0, %s45
    %s47 = sphi 0, %s45
    %s48 = sphi 0, %s47
    %s62 = sphi 0, %s48
    %s66 = sphi 0, %s66
    %s68 = sphi 0, %s66
    %s69 = sphi 0, %s68
    %s83 = sphi 0, %s69
    %s87 = sphi 0, %s87
    %s89 = sphi 0, %s87
    %s90 = sphi 0, %s89
    %s104 = sphi 0, %s90
    %s108 = sphi 0, %s108
    %s110 = sphi 0, %s108
    %s111 = sphi 0, %s110
    %s125 = sphi 0, %s111
    %s131 = sphi 0, %s133
    %s134 = sphi 0, %s131
    %s135 = sphi 0, %s134
    %s151 = sphi 0, %s135
  $region4: #{_lambda_.6} parent=0 // loop_header_branch
    %14 = sbr.rel (%p12) target = $region8
  $region5: #{_lambda_.6} parent=0 // loop_body
    %s16 = ssub.s32 %s11, 1
    %s17 = ssub.s32 %s11, 2
    %s18 = sadd.s32 %s11, 1
    %s19 = ssub.s32 %s11, %s18
    %p20 = scmp.eq.s32.totalorder %s19, 0
    %s22 = sadd.s32 %s21, 1
    %s23 = scalar_select %p20, %s21, %s22
    %p26 = pneg %p20
    %p27 = scmp.eq.s32.totalorder %s11, 1
    %p28 = por %p26, %p27
    %p29 = scmp.ne.s32.totalorder %s21, %s24
    %p30 = scmp.eq.s32.totalorder %s11, 0
    %p31 = por %p29, %p30
    %p32 = scmp.ne.s32.totalorder %s21, %s24
    %p33 = scmp.eq.s32.totalorder %s16, 1
    %p34 = por %p32, %p33
    %p35 = scmp.ne.s32.totalorder %s24, %s25
    %p36 = scmp.eq.s32.totalorder %s16, 0
    %p37 = por %p35, %p36
    %p38 = scmp.ne.s32.totalorder %s24, %s25
    %p39 = scmp.eq.s32.totalorder %s17, 1
    %p40 = por %p38, %p39
    %p42 = scmp.ne.s32.totalorder %s25, %s41
    %p43 = scmp.eq.s32.totalorder %s17, 0
    %p44 = por %p42, %p43
    %s46 = sadd.s32 %s45, 1
    %p49 = scmp.eq.s32.totalorder %s11, 1
    %p50 = scmp.ne.s32.totalorder %s45, %s47
    %p51 = scmp.eq.s32.totalorder %s11, 0
    %p52 = por %p50, %p51
    %p53 = scmp.ne.s32.totalorder %s45, %s47
    %p54 = scmp.eq.s32.totalorder %s16, 1
    %p55 = por %p53, %p54
    %p56 = scmp.ne.s32.totalorder %s47, %s48
    %p57 = scmp.eq.s32.totalorder %s16, 0
    %p58 = por %p56, %p57
    %p59 = scmp.ne.s32.totalorder %s47, %s48
    %p60 = scmp.eq.s32.totalorder %s17, 1
    %p61 = por %p59, %p60
    %p63 = scmp.ne.s32.totalorder %s48, %s62
    %p64 = scmp.eq.s32.totalorder %s17, 0
    %p65 = por %p63, %p64
    %s67 = sadd.s32 %s66, 1
    %p70 = scmp.eq.s32.totalorder %s11, 1
    %p71 = scmp.ne.s32.totalorder %s66, %s68
    %p72 = scmp.eq.s32.totalorder %s11, 0
    %p73 = por %p71, %p72
    %p74 = scmp.ne.s32.totalorder %s66, %s68
    %p75 = scmp.eq.s32.totalorder %s16, 1
    %p76 = por %p74, %p75
    %p77 = scmp.ne.s32.totalorder %s68, %s69
    %p78 = scmp.eq.s32.totalorder %s16, 0
    %p79 = por %p77, %p78
    %p80 = scmp.ne.s32.totalorder %s68, %s69
    %p81 = scmp.eq.s32.totalorder %s17, 1
    %p82 = por %p80, %p81
    %p84 = scmp.ne.s32.totalorder %s69, %s83
    %p85 = scmp.eq.s32.totalorder %s17, 0
    %p86 = por %p84, %p85
    %s88 = sadd.s32 %s87, 1
    %p91 = scmp.eq.s32.totalorder %s11, 1
    %p92 = scmp.ne.s32.totalorder %s87, %s89
    %p93 = scmp.eq.s32.totalorder %s11, 0
    %p94 = por %p92, %p93
    %p95 = scmp.ne.s32.totalorder %s87, %s89
    %p96 = scmp.eq.s32.totalorder %s16, 1
    %p97 = por %p95, %p96
    %p98 = scmp.ne.s32.totalorder %s89, %s90
    %p99 = scmp.eq.s32.totalorder %s16, 0
    %p100 = por %p98, %p99
    %p101 = scmp.ne.s32.totalorder %s89, %s90
    %p102 = scmp.eq.s32.totalorder %s17, 1
    %p103 = por %p101, %p102
    %p105 = scmp.ne.s32.totalorder %s90, %s104
    %p106 = scmp.eq.s32.totalorder %s17, 0
    %p107 = por %p105, %p106
    %s109 = sadd.s32 %s108, 1
    %p112 = scmp.eq.s32.totalorder %s11, 1
    %p113 = scmp.ne.s32.totalorder %s108, %s110
    %p114 = scmp.eq.s32.totalorder %s11, 0
    %p115 = por %p113, %p114
    %p116 = scmp.ne.s32.totalorder %s108, %s110
    %p117 = scmp.eq.s32.totalorder %s16, 1
    %p118 = por %p116, %p117
    %p119 = scmp.ne.s32.totalorder %s110, %s111
    %p120 = scmp.eq.s32.totalorder %s16, 0
    %p121 = por %p119, %p120
    %p122 = scmp.ne.s32.totalorder %s110, %s111
    %p123 = scmp.eq.s32.totalorder %s17, 1
    %p124 = por %p122, %p123
    %p126 = scmp.ne.s32.totalorder %s111, %s125
    %p127 = scmp.eq.s32.totalorder %s17, 0
    %p128 = por %p126, %p127
    %s129 = ssub.s32 %s11, %s18
    %p130 = scmp.eq.s32.totalorder %s129, 0
    %s132 = sadd.s32 %s131, 1
    %s133 = scalar_select %p130, %s131, %s132
    %p136 = pneg %p130
    %p137 = scmp.eq.s32.totalorder %s11, 1
    %p138 = por %p136, %p137
    %p139 = scmp.ne.s32.totalorder %s131, %s134
    %p140 = scmp.eq.s32.totalorder %s11, 0
    %p141 = por %p139, %p140
    %p142 = scmp.ne.s32.totalorder %s131, %s134
    %p143 = scmp.eq.s32.totalorder %s16, 1
    %p144 = por %p142, %p143
    %p145 = scmp.ne.s32.totalorder %s134, %s135
    %p146 = scmp.eq.s32.totalorder %s16, 0
    %p147 = por %p145, %p146
    %p148 = scmp.ne.s32.totalorder %s134, %s135
    %p149 = scmp.eq.s32.totalorder %s17, 1
    %p150 = por %p148, %p149
    %p152 = scmp.ne.s32.totalorder %s135, %s151
    %p153 = scmp.eq.s32.totalorder %s17, 0
    %p154 = por %p152, %p153
    %p155 = scmp.le.s32.totalorder 1, %s11
    %p156 = scmp.lt.s32.totalorder %s11, 3
    %p157 = pnand %p155, %p156
    %p158 = pneg %p157
    // Predicated region
    $region9: #{_lambda_.6} parent=5 // pred_check
      _
    $region10: #{_lambda_.6} parent=5 // pred_check_branch
      %160 = sbr.rel (%p157) target = $region12
    $region11: #{_lambda_.6} parent=5 // pred_region
      %s161 = ssub.s32 %s11, 1
      // Predicated region
      $region13: #{_lambda_.6} parent=11 // pred_check
        %p162 = pneg %p58
      $region14: #{_lambda_.6} parent=11 // pred_check_branch
        %164 = sbr.rel (%p162) target = $region16
      $region15: #{_lambda_.6} parent=11 // pred_region
        _
      $region16: #{_lambda_.6} parent=11 // pred_fallthru
        _
      // Predicated region
      $region17: #{_lambda_.6} parent=11 // pred_check
        %p165 = pneg %p79
      $region18: #{_lambda_.6} parent=11 // pred_check_branch
        %167 = sbr.rel (%p165) target = $region20
      $region19: #{_lambda_.6} parent=11 // pred_region
        _
      $region20: #{_lambda_.6} parent=11 // pred_fallthru
        _
      // Predicated region
      $region21: #{_lambda_.6} parent=11 // pred_check
        %p168 = pneg %p100
      $region22: #{_lambda_.6} parent=11 // pred_check_branch
        %170 = sbr.rel (%p168) target = $region24
      $region23: #{_lambda_.6} parent=11 // pred_region
        _
      $region24: #{_lambda_.6} parent=11 // pred_fallthru
        _
      // Predicated region
      $region25: #{_lambda_.6} parent=11 // pred_check
        %p171 = pneg %p121
      $region26: #{_lambda_.6} parent=11 // pred_check_branch
        %173 = sbr.rel (%p171) target = $region28
      $region27: #{_lambda_.6} parent=11 // pred_region
        _
      $region28: #{_lambda_.6} parent=11 // pred_fallthru
        _
    $region12: #{_lambda_.6} parent=5 // pred_fallthru
      _
    %p174 = scmp.lt.s32.totalorder %s11, 2
    // Predicated region
    $region29: #{_lambda_.6} parent=5 // pred_check
      %p175 = pneg %p174
    $region30: #{_lambda_.6} parent=5 // pred_check_branch
      %177 = sbr.rel (%p175) target = $region32
    $region31: #{_lambda_.6} parent=5 // pred_region
      // Predicated region
      $region33: #{_lambda_.6} parent=31 // pred_check
        %p178 = pneg %p31
      $region34: #{_lambda_.6} parent=31 // pred_check_branch
        %180 = sbr.rel (%p178) target = $region36
      $region35: #{_lambda_.6} parent=31 // pred_region
        %p181 = scmp.lt.s32.totalorder %s11, 1
        %s182 = scalar_select %p181, %s11, 1
        %s183 = smul.addr %s182, 14
        %s184 = smul.addr %s183, 4
        %s185 = scalar_lea.vmem %s0, %s184
      $region36: #{_lambda_.6} parent=31 // pred_fallthru
        _
    $region32: #{_lambda_.6} parent=5 // pred_fallthru
      _
    %p186 = scmp.le.s32.totalorder 1, %s11
    %p187 = scmp.lt.s32.totalorder %s11, 3
    %p188 = pnand %p186, %p187
    %p189 = pneg %p188
    // Predicated region
    $region37: #{_lambda_.6} parent=5 // pred_check
      _
    $region38: #{_lambda_.6} parent=5 // pred_check_branch
      %191 = sbr.rel (%p188) target = $region40
    $region39: #{_lambda_.6} parent=5 // pred_region
      %s192 = ssub.s32 %s11, 1
      %p193 = scmp.lt.s32.totalorder %s16, 1
      %s194 = scalar_select %p193, %s16, 1
      %s195 = smul.addr %s194, 14
      %s196 = smul.addr %s195, 4
      %s197 = scalar_lea.vmem %s0, %s196
      %p198 = pneg %p37
      %p199 = pneg %p34
      %p200 = pneg %p58
      %p201 = pneg %p55
      %p202 = pneg %p79
      %p203 = pneg %p76
      %p204 = pneg %p100
      %p205 = pneg %p97
      %p206 = pneg %p121
      %p207 = pneg %p118
      %p208 = pneg %p147
      %p209 = pneg %p144
      %p210 = scmp.lt.s32.totalorder %s16, 1
      %s211 = scalar_select %p210, %s16, 1
      %s212 = smul.addr %s211, 10
      %s213 = smul.addr %s212, 8
      %s214 = scalar_lea.vmem %s5, %s213
      %p215 = scmp.lt.s32.totalorder %s16, 1
      %s216 = scalar_select %p215, %s16, 1
      %s217 = smul.addr %s216, 14
      %s218 = smul.addr %s217, 4
      %s219 = scalar_lea.vmem %s0, %s218
      %p220 = scmp.lt.s32.totalorder %s16, 1
      %s221 = scalar_select %p220, %s16, 1
      %s222 = smul.addr %s221, 10
      %s223 = smul.addr %s222, 8
      %s224 = scalar_lea.vmem %s5, %s223
      %v226 = vld [vmem:[%s219] sm:$0xf]
      %v227 = vld [vmem:[%s219 + $0x4] sm:$0xf]
      %v228 = vld [vmem:[%s219 + $0x8] sm:$0xf]
      %v229 = vld [vmem:[%s219 + $0xc] sm:$0xf]
      %v230 = vld [vmem:[%s219 + $0x10] sm:$0xf]
      %v231 = vld [vmem:[%s219 + $0x14] sm:$0xf]
      %v232 = vld [vmem:[%s219 + $0x18] sm:$0xf]
      %v233 = vld [vmem:[%s219 + $0x1c] sm:$0xf]
      %v234 = vld [vmem:[%s219 + $0x20] sm:$0xf]
      %v235 = vld [vmem:[%s219 + $0x24] sm:$0xf]
      %v236 = vld [vmem:[%s1] sm:$0xf]
      %v237 = vld [vmem:[%s1 + $0x4] sm:$0xf]
      %v238 = vld [vmem:[%s1 + $0x8] sm:$0xf]
      %v239 = vld [vmem:[%s1 + $0xc] sm:$0xf]
      %v240 = vld [vmem:[%s219 + $0x28] sm:$0x1]
      %s241 = scalar_lea.vmem %s1, 16
      %v242 = vld [vmem:[%s241] sm:$0xf]
      %v243 = vld [vmem:[%s241 + $0x4] sm:$0xf]
      %v244 = vld [vmem:[%s241 + $0x8] sm:$0xf]
      %v245 = vld [vmem:[%s241 + $0xc] sm:$0xf]
      %v257 = vunpack.c.l.b16 %v226
      %v258 = vunpack.c.l.b16 %v227
      %v259 = vunpack.c.l.b16 %v228
      %v260 = vunpack.c.l.b16 %v229
      %v261 = vunpack.c.l.b16 %v230
      %v262 = vunpack.c.l.b16 %v231
      %v263 = vunpack.c.l.b16 %v232
      %v264 = vunpack.c.l.b16 %v233
      %v265 = vunpack.c.l.b16 %v234
      %v266 = vunpack.c.l.b16 %v235
      %v267 = vunpack.c.l.b16 %v240
      %v268 = vpack.c.b16 %v258, %v257
      %v269 = vpack.c.b16 %v260, %v259
      %v270 = vpack.c.b16 %v262, %v261
      %v271 = vpack.c.b16 %v264, %v263
      %v272 = vpack.c.b16 %v266, %v265
      %v273 = vpack.c.b16 %v267, %v267
      %vm274 = vsmask.f32 7424
      %v276 = vshrl.u32 %v268, 16
      %v278 = vshll.u32 %v268, 16
      %v280 = vrot.slane %v278, 1
      %v281 = vor.u32 %v276, %v280
      %v283 = vshll.u32 %v269, 16
      %v285 = vrot.slane %v283, 1
      %v286 = vsel %vm274, %v281, %v285
      %v287 = vshrl.u32 %v269, 16
      %v289 = vor.u32 %v287, %v285
      %v291 = vshll.u32 %v270, 16
      %v293 = vrot.slane %v291, 1
      %v294 = vsel %vm274, %v289, %v293
      %v295 = vshrl.u32 %v270, 16
      %v297 = vor.u32 %v295, %v293
      %v299 = vshll.u32 %v271, 16
      %v301 = vrot.slane %v299, 1
      %v302 = vsel %vm274, %v297, %v301
      %v303 = vshrl.u32 %v271, 16
      %v305 = vor.u32 %v303, %v301
      %v307 = vshll.u32 %v272, 16
      %v309 = vrot.slane %v307, 1
      %v310 = vsel %vm274, %v305, %v309
      %v311 = vshrl.u32 %v272, 16
      %v313 = vor.u32 %v311, %v309
      %v315 = vshll.u32 %v273, 16
      %v317 = vrot.slane %v315, 1
      %v318 = vsel %vm274, %v313, %v317
      %v323 = vunpack.c.l.b16 %v242
      %v324 = vunpack.c.l.b16 %v243
      %v325 = vunpack.c.l.b16 %v244
      %v326 = vunpack.c.l.b16 %v245
      %v327 = vpack.c.b16 %v324, %v323
      %v328 = vpack.c.b16 %v326, %v325
      %vm331 = vcmask 261120
      %v333 = vsel %vm331, %v286, 0
      %v336 = vsel %vm331, %v294, 0
      %v339 = vsel %vm331, %v302, 0
      %v342 = vsel %vm331, %v310, 0
      %v345 = vsel %vm331, %v318, 0
      %347 = vmatprep.subr.bf16.mxu0 0
      %348 = vmatpush1.bf16.msra.mxu0 0
      %349 = vmatprep.subr.bf16.mxu0 0
      %350 = vmatpush1.bf16.msra.mxu0 0
      %351 = vmatprep.subr.bf16.mxu0 0
      %352 = vmatpush1.bf16.msra.mxu0 0
      %353 = vmatprep.subr.bf16.mxu0 0
      %354 = vmatpush1.bf16.msra.mxu0 0
      %355 = vmatprep.subr.bf16.mxu0 0
      %356 = vmatpush1.bf16.msra.mxu0 0
      %357 = vmatprep.subr.bf16.mxu0 0
      %358 = vmatpush1.bf16.msra.mxu0 0
      %359 = vmatprep.subr.bf16.mxu0 0
      %360 = vmatpush1.bf16.msra.mxu0 %v328
      %361 = vmatprep.subr.bf16.mxu0 0
      %362 = vmatpush1.bf16.msra.mxu0 %v327
      %363 = vmatprep.subr.bf16.mxu0 0
      %364 = vmatpush2.bf16.msra.mxu0 0
      %365 = vmatprep.subr.bf16.mxu0 0
      %366 = vmatpush2.bf16.msra.mxu0 0
      %367 = vmatprep.subr.bf16.mxu0 0
      %368 = vmatpush2.bf16.msra.mxu0 0
      %369 = vmatprep.subr.bf16.mxu0 0
      %370 = vmatpush2.bf16.msra.mxu0 0
      %371 = vmatprep.subr.bf16.mxu0 0
      %372 = vmatpush2.bf16.msra.mxu0 0
      %373 = vmatprep.subr.bf16.mxu0 0
      %374 = vmatpush2.bf16.msra.mxu0 0
      %375 = vmatprep.subr.bf16.mxu0 0
      %376 = vmatpush2.bf16.msra.mxu0 0
      %377 = vmatprep.subr.bf16.mxu0 0
      %378 = vmatpush2.bf16.msra.mxu0 0
      %379 = vmatprep.mubr.bf16.mxu0 0
      %380 = vmatmul.mubr.bf16.gmra.mxu0 %v333
      %v381 = vpop.f32.mrf.mxu0
      %v382 = vadd.f32 0.0, %v381
      %v383 = vpop.f32.mrf.mxu0
      %v384 = vpop.f32.mrf.mxu0
      %v385 = vadd.f32 0.0, %v384
      %v386 = vpop.f32.mrf.mxu0
      %387 = vmatprep.mubr.bf16.mxu0 0
      %388 = vmatmul.mubr.bf16.gmra.mxu0 %v336
      %v389 = vpop.f32.mrf.mxu0
      %v390 = vadd.f32 0.0, %v389
      %v391 = vpop.f32.mrf.mxu0
      %v392 = vpop.f32.mrf.mxu0
      %v393 = vadd.f32 0.0, %v392
      %v394 = vpop.f32.mrf.mxu0
      %395 = vmatprep.mubr.bf16.mxu0 0
      %396 = vmatmul.mubr.bf16.gmra.mxu0 %v339
      %v397 = vpop.f32.mrf.mxu0
      %v398 = vadd.f32 0.0, %v397
      %v399 = vpop.f32.mrf.mxu0
      %v400 = vpop.f32.mrf.mxu0
      %v401 = vadd.f32 0.0, %v400
      %v402 = vpop.f32.mrf.mxu0
      %403 = vmatprep.mubr.bf16.mxu0 0
      %404 = vmatmul.mubr.bf16.gmra.mxu0 %v342
      %v405 = vpop.f32.mrf.mxu0
      %v406 = vadd.f32 0.0, %v405
      %v407 = vpop.f32.mrf.mxu0
      %v408 = vpop.f32.mrf.mxu0
      %v409 = vadd.f32 0.0, %v408
      %v410 = vpop.f32.mrf.mxu0
      %411 = vmatprep.mubr.bf16.mxu0 0
      %412 = vmatmul.mubr.bf16.gmra.mxu0 %v345
      %v413 = vpop.f32.mrf.mxu0
      %v414 = vadd.f32 0.0, %v413
      %v415 = vpop.f32.mrf.mxu0
      %v416 = vpop.f32.mrf.mxu0
      %v417 = vadd.f32 0.0, %v416
      %v418 = vpop.f32.mrf.mxu0
      %419 = vdwg.mxu0
      %v424 = vunpack.c.l.b16 %v236
      %v425 = vunpack.c.l.b16 %v237
      %v426 = vunpack.c.l.b16 %v238
      %v427 = vunpack.c.l.b16 %v239
      %v428 = vpack.c.b16 %v425, %v424
      %v429 = vpack.c.b16 %v427, %v426
      %v432 = vsel %vm331, %v268, 0
      %v434 = vsel %vm331, %v269, 0
      %v436 = vsel %vm331, %v270, 0
      %v438 = vsel %vm331, %v271, 0
      %v440 = vsel %vm331, %v272, 0
      %442 = vmatprep.subr.bf16.mxu0 0
      %443 = vmatpush1.bf16.msra.mxu0 0
      %444 = vmatprep.subr.bf16.mxu0 0
      %445 = vmatpush1.bf16.msra.mxu0 0
      %446 = vmatprep.subr.bf16.mxu0 0
      %447 = vmatpush1.bf16.msra.mxu0 0
      %448 = vmatprep.subr.bf16.mxu0 0
      %449 = vmatpush1.bf16.msra.mxu0 0
      %450 = vmatprep.subr.bf16.mxu0 0
      %451 = vmatpush1.bf16.msra.mxu0 0
      %452 = vmatprep.subr.bf16.mxu0 0
      %453 = vmatpush1.bf16.msra.mxu0 0
      %454 = vmatprep.subr.bf16.mxu0 0
      %455 = vmatpush1.bf16.msra.mxu0 %v429
      %456 = vmatprep.subr.bf16.mxu0 0
      %457 = vmatpush1.bf16.msra.mxu0 %v428
      %458 = vmatprep.subr.bf16.mxu0 0
      %459 = vmatpush2.bf16.msra.mxu0 0
      %460 = vmatprep.subr.bf16.mxu0 0
      %461 = vmatpush2.bf16.msra.mxu0 0
      %462 = vmatprep.subr.bf16.mxu0 0
      %463 = vmatpush2.bf16.msra.mxu0 0
      %464 = vmatprep.subr.bf16.mxu0 0
      %465 = vmatpush2.bf16.msra.mxu0 0
      %466 = vmatprep.subr.bf16.mxu0 0
      %467 = vmatpush2.bf16.msra.mxu0 0
      %468 = vmatprep.subr.bf16.mxu0 0
      %469 = vmatpush2.bf16.msra.mxu0 0
      %470 = vmatprep.subr.bf16.mxu0 0
      %471 = vmatpush2.bf16.msra.mxu0 0
      %472 = vmatprep.subr.bf16.mxu0 0
      %473 = vmatpush2.bf16.msra.mxu0 0
      %474 = vmatprep.mubr.bf16.mxu0 0
      %475 = vmatmul.mubr.bf16.gmra.mxu0 %v432
      %v476 = vpop.f32.mrf.mxu0
      %v477 = vadd.f32 %v382, %v476
      %v478 = vpop.f32.mrf.mxu0
      %v479 = vpop.f32.mrf.mxu0
      %v480 = vadd.f32 %v385, %v479
      %v481 = vpop.f32.mrf.mxu0
      %482 = vmatprep.mubr.bf16.mxu0 0
      %483 = vmatmul.mubr.bf16.gmra.mxu0 %v434
      %v484 = vpop.f32.mrf.mxu0
      %v485 = vadd.f32 %v390, %v484
      %v486 = vpop.f32.mrf.mxu0
      %v487 = vpop.f32.mrf.mxu0
      %v488 = vadd.f32 %v393, %v487
      %v489 = vpop.f32.mrf.mxu0
      %490 = vmatprep.mubr.bf16.mxu0 0
      %491 = vmatmul.mubr.bf16.gmra.mxu0 %v436
      %v492 = vpop.f32.mrf.mxu0
      %v493 = vadd.f32 %v398, %v492
      %v494 = vpop.f32.mrf.mxu0
      %v495 = vpop.f32.mrf.mxu0
      %v496 = vadd.f32 %v401, %v495
      %v497 = vpop.f32.mrf.mxu0
      %498 = vmatprep.mubr.bf16.mxu0 0
      %499 = vmatmul.mubr.bf16.gmra.mxu0 %v438
      %v500 = vpop.f32.mrf.mxu0
      %v501 = vadd.f32 %v406, %v500
      %v502 = vpop.f32.mrf.mxu0
      %v503 = vpop.f32.mrf.mxu0
      %v504 = vadd.f32 %v409, %v503
      %v505 = vpop.f32.mrf.mxu0
      %506 = vmatprep.mubr.bf16.mxu0 0
      %507 = vmatmul.mubr.bf16.gmra.mxu0 %v440
      %v508 = vpop.f32.mrf.mxu0
      %v509 = vadd.f32 %v414, %v508
      %v510 = vpop.f32.mrf.mxu0
      %v511 = vpop.f32.mrf.mxu0
      %v512 = vadd.f32 %v417, %v511
      %v513 = vpop.f32.mrf.mxu0
      %514 = vdwg.mxu0
      %v515 = vld [vmem:[%s219] sm:$0xe]
      %s516 = scalar_lea.vmem %s1, 32
      %v517 = vld [vmem:[%s516] sm:$0xf]
      %v518 = vld [vmem:[%s516 + $0x4] sm:$0xf]
      %v519 = vld [vmem:[%s516 + $0x8] sm:$0xf]
      %v520 = vld [vmem:[%s516 + $0xc] sm:$0xf]
      %v522 = vunpack.c.l.b16 %v515
      %v523 = vpack.c.b16 %v258, %v522
      %vm524 = vcmask 1046528
      %v525 = vrot.slane %v523, 1
      %v526 = vrot.slane %v269, 1
      %v527 = vsel %vm524, %v525, %v526
      %v528 = vrot.slane %v270, 1
      %v529 = vsel %vm524, %v526, %v528
      %v530 = vrot.slane %v271, 1
      %v531 = vsel %vm524, %v528, %v530
      %v532 = vrot.slane %v272, 1
      %v533 = vsel %vm524, %v530, %v532
      %v534 = vrot.slane %v273, 1
      %v535 = vsel %vm524, %v532, %v534
      %v540 = vunpack.c.l.b16 %v517
      %v541 = vunpack.c.l.b16 %v518
      %v542 = vunpack.c.l.b16 %v519
      %v543 = vunpack.c.l.b16 %v520
      %v544 = vpack.c.b16 %v541, %v540
      %v545 = vpack.c.b16 %v543, %v542
      %v549 = vsel %vm331, %v527, 0
      %v552 = vsel %vm331, %v529, 0
      %v555 = vsel %vm331, %v531, 0
      %v558 = vsel %vm331, %v533, 0
      %v561 = vsel %vm331, %v535, 0
      %563 = vmatprep.subr.bf16.mxu0 0
      %564 = vmatpush1.bf16.msra.mxu0 0
      %565 = vmatprep.subr.bf16.mxu0 0
      %566 = vmatpush1.bf16.msra.mxu0 0
      %567 = vmatprep.subr.bf16.mxu0 0
      %568 = vmatpush1.bf16.msra.mxu0 0
      %569 = vmatprep.subr.bf16.mxu0 0
      %570 = vmatpush1.bf16.msra.mxu0 0
      %571 = vmatprep.subr.bf16.mxu0 0
      %572 = vmatpush1.bf16.msra.mxu0 0
      %573 = vmatprep.subr.bf16.mxu0 0
      %574 = vmatpush1.bf16.msra.mxu0 0
      %575 = vmatprep.subr.bf16.mxu0 0
      %576 = vmatpush1.bf16.msra.mxu0 %v545
      %577 = vmatprep.subr.bf16.mxu0 0
      %578 = vmatpush1.bf16.msra.mxu0 %v544
      %579 = vmatprep.subr.bf16.mxu0 0
      %580 = vmatpush2.bf16.msra.mxu0 0
      %581 = vmatprep.subr.bf16.mxu0 0
      %582 = vmatpush2.bf16.msra.mxu0 0
      %583 = vmatprep.subr.bf16.mxu0 0
      %584 = vmatpush2.bf16.msra.mxu0 0
      %585 = vmatprep.subr.bf16.mxu0 0
      %586 = vmatpush2.bf16.msra.mxu0 0
      %587 = vmatprep.subr.bf16.mxu0 0
      %588 = vmatpush2.bf16.msra.mxu0 0
      %589 = vmatprep.subr.bf16.mxu0 0
      %590 = vmatpush2.bf16.msra.mxu0 0
      %591 = vmatprep.subr.bf16.mxu0 0
      %592 = vmatpush2.bf16.msra.mxu0 0
      %593 = vmatprep.subr.bf16.mxu0 0
      %594 = vmatpush2.bf16.msra.mxu0 0
      %595 = vmatprep.mubr.bf16.mxu0 0
      %596 = vmatmul.mubr.bf16.gmra.mxu0 %v549
      %v597 = vpop.f32.mrf.mxu0
      %v598 = vadd.f32 0.0, %v597
      %v599 = vpop.f32.mrf.mxu0
      %v600 = vpop.f32.mrf.mxu0
      %v601 = vadd.f32 0.0, %v600
      %v602 = vpop.f32.mrf.mxu0
      %603 = vmatprep.mubr.bf16.mxu0 0
      %604 = vmatmul.mubr.bf16.gmra.mxu0 %v552
      %v605 = vpop.f32.mrf.mxu0
      %v606 = vadd.f32 0.0, %v605
      %v607 = vpop.f32.mrf.mxu0
      %v608 = vpop.f32.mrf.mxu0
      %v609 = vadd.f32 0.0, %v608
      %v610 = vpop.f32.mrf.mxu0
      %611 = vmatprep.mubr.bf16.mxu0 0
      %612 = vmatmul.mubr.bf16.gmra.mxu0 %v555
      %v613 = vpop.f32.mrf.mxu0
      %v614 = vadd.f32 0.0, %v613
      %v615 = vpop.f32.mrf.mxu0
      %v616 = vpop.f32.mrf.mxu0
      %v617 = vadd.f32 0.0, %v616
      %v618 = vpop.f32.mrf.mxu0
      %619 = vmatprep.mubr.bf16.mxu0 0
      %620 = vmatmul.mubr.bf16.gmra.mxu0 %v558
      %v621 = vpop.f32.mrf.mxu0
      %v622 = vadd.f32 0.0, %v621
      %v623 = vpop.f32.mrf.mxu0
      %v624 = vpop.f32.mrf.mxu0
      %v625 = vadd.f32 0.0, %v624
      %v626 = vpop.f32.mrf.mxu0
      %627 = vmatprep.mubr.bf16.mxu0 0
      %628 = vmatmul.mubr.bf16.gmra.mxu0 %v561
      %v629 = vpop.f32.mrf.mxu0
      %v630 = vadd.f32 0.0, %v629
      %v631 = vpop.f32.mrf.mxu0
      %v632 = vpop.f32.mrf.mxu0
      %v633 = vadd.f32 0.0, %v632
      %v634 = vpop.f32.mrf.mxu0
      %635 = vdwg.mxu0
      %v636 = vadd.f32 %v477, %v598
      %v637 = vadd.f32 %v480, %v601
      %v638 = vadd.f32 %v485, %v606
      %v639 = vadd.f32 %v488, %v609
      %v640 = vadd.f32 %v493, %v614
      %v641 = vadd.f32 %v496, %v617
      %v642 = vadd.f32 %v501, %v622
      %v643 = vadd.f32 %v504, %v625
      %v644 = vadd.f32 %v509, %v630
      %v645 = vadd.f32 %v512, %v633
      %v646 = vld [vmem:[%s219 + $0x4] sm:$0xe]
      %v647 = vld [vmem:[%s219 + $0x8] sm:$0xf]
      %v648 = vld [vmem:[%s219 + $0xc] sm:$0xf]
      %v649 = vld [vmem:[%s219 + $0x10] sm:$0xf]
      %v650 = vld [vmem:[%s219 + $0x14] sm:$0xf]
      %v651 = vld [vmem:[%s219 + $0x18] sm:$0xf]
      %v652 = vld [vmem:[%s219 + $0x1c] sm:$0xf]
      %v653 = vld [vmem:[%s219 + $0x20] sm:$0xf]
      %v654 = vld [vmem:[%s219 + $0x24] sm:$0xf]
      %v655 = vld [vmem:[%s219 + $0x28] sm:$0xf]
      %v656 = vld [vmem:[%s219 + $0x2c] sm:$0x1]
      %s657 = scalar_lea.vmem %s1, 48
      %v658 = vld [vmem:[%s657] sm:$0xf]
      %v659 = vld [vmem:[%s657 + $0x4] sm:$0xf]
      %v660 = vld [vmem:[%s657 + $0x8] sm:$0xf]
      %v661 = vld [vmem:[%s657 + $0xc] sm:$0xf]
      %v673 = vunpack.c.l.b16 %v646
      %v674 = vunpack.c.l.b16 %v647
      %v675 = vunpack.c.l.b16 %v648
      %v676 = vunpack.c.l.b16 %v649
      %v677 = vunpack.c.l.b16 %v650
      %v678 = vunpack.c.l.b16 %v651
      %v679 = vunpack.c.l.b16 %v652
      %v680 = vunpack.c.l.b16 %v653
      %v681 = vunpack.c.l.b16 %v654
      %v682 = vunpack.c.l.b16 %v655
      %v683 = vunpack.c.l.b16 %v656
      %v684 = vpack.c.b16 %v674, %v673
      %v685 = vpack.c.b16 %v676, %v675
      %v686 = vpack.c.b16 %v678, %v677
      %v687 = vpack.c.b16 %v680, %v679
      %v688 = vpack.c.b16 %v682, %v681
      %v689 = vpack.c.b16 %v683, %v683
      %v690 = vrot.slane %v684, 1
      %v691 = vrot.slane %v685, 1
      %v692 = vsel %vm524, %v690, %v691
      %v693 = vrot.slane %v686, 1
      %v694 = vsel %vm524, %v691, %v693
      %v695 = vrot.slane %v687, 1
      %v696 = vsel %vm524, %v693, %v695
      %v697 = vrot.slane %v688, 1
      %v698 = vsel %vm524, %v695, %v697
      %v699 = vrot.slane %v689, 1
      %v700 = vsel %vm524, %v697, %v699
      %v705 = vunpack.c.l.b16 %v658
      %v706 = vunpack.c.l.b16 %v659
      %v707 = vunpack.c.l.b16 %v660
      %v708 = vunpack.c.l.b16 %v661
      %v709 = vpack.c.b16 %v706, %v705
      %v710 = vpack.c.b16 %v708, %v707
      %v714 = vsel %vm331, %v692, 0
      %v717 = vsel %vm331, %v694, 0
      %v720 = vsel %vm331, %v696, 0
      %v723 = vsel %vm331, %v698, 0
      %v726 = vsel %vm331, %v700, 0
      %728 = vmatprep.subr.bf16.mxu0 0
      %729 = vmatpush1.bf16.msra.mxu0 0
      %730 = vmatprep.subr.bf16.mxu0 0
      %731 = vmatpush1.bf16.msra.mxu0 0
      %732 = vmatprep.subr.bf16.mxu0 0
      %733 = vmatpush1.bf16.msra.mxu0 0
      %734 = vmatprep.subr.bf16.mxu0 0
      %735 = vmatpush1.bf16.msra.mxu0 0
      %736 = vmatprep.subr.bf16.mxu0 0
      %737 = vmatpush1.bf16.msra.mxu0 0
      %738 = vmatprep.subr.bf16.mxu0 0
      %739 = vmatpush1.bf16.msra.mxu0 0
      %740 = vmatprep.subr.bf16.mxu0 0
      %741 = vmatpush1.bf16.msra.mxu0 %v710
      %742 = vmatprep.subr.bf16.mxu0 0
      %743 = vmatpush1.bf16.msra.mxu0 %v709
      %744 = vmatprep.subr.bf16.mxu0 0
      %745 = vmatpush2.bf16.msra.mxu0 0
      %746 = vmatprep.subr.bf16.mxu0 0
      %747 = vmatpush2.bf16.msra.mxu0 0
      %748 = vmatprep.subr.bf16.mxu0 0
      %749 = vmatpush2.bf16.msra.mxu0 0
      %750 = vmatprep.subr.bf16.mxu0 0
      %751 = vmatpush2.bf16.msra.mxu0 0
      %752 = vmatprep.subr.bf16.mxu0 0
      %753 = vmatpush2.bf16.msra.mxu0 0
      %754 = vmatprep.subr.bf16.mxu0 0
      %755 = vmatpush2.bf16.msra.mxu0 0
      %756 = vmatprep.subr.bf16.mxu0 0
      %757 = vmatpush2.bf16.msra.mxu0 0
      %758 = vmatprep.subr.bf16.mxu0 0
      %759 = vmatpush2.bf16.msra.mxu0 0
      %760 = vmatprep.mubr.bf16.mxu0 0
      %761 = vmatmul.mubr.bf16.gmra.mxu0 %v714
      %v762 = vpop.f32.mrf.mxu0
      %v763 = vadd.f32 0.0, %v762
      %v764 = vpop.f32.mrf.mxu0
      %v765 = vpop.f32.mrf.mxu0
      %v766 = vadd.f32 0.0, %v765
      %v767 = vpop.f32.mrf.mxu0
      %768 = vmatprep.mubr.bf16.mxu0 0
      %769 = vmatmul.mubr.bf16.gmra.mxu0 %v717
      %v770 = vpop.f32.mrf.mxu0
      %v771 = vadd.f32 0.0, %v770
      %v772 = vpop.f32.mrf.mxu0
      %v773 = vpop.f32.mrf.mxu0
      %v774 = vadd.f32 0.0, %v773
      %v775 = vpop.f32.mrf.mxu0
      %776 = vmatprep.mubr.bf16.mxu0 0
      %777 = vmatmul.mubr.bf16.gmra.mxu0 %v720
      %v778 = vpop.f32.mrf.mxu0
      %v779 = vadd.f32 0.0, %v778
      %v780 = vpop.f32.mrf.mxu0
      %v781 = vpop.f32.mrf.mxu0
      %v782 = vadd.f32 0.0, %v781
      %v783 = vpop.f32.mrf.mxu0
      %784 = vmatprep.mubr.bf16.mxu0 0
      %785 = vmatmul.mubr.bf16.gmra.mxu0 %v723
      %v786 = vpop.f32.mrf.mxu0
      %v787 = vadd.f32 0.0, %v786
      %v788 = vpop.f32.mrf.mxu0
      %v789 = vpop.f32.mrf.mxu0
      %v790 = vadd.f32 0.0, %v789
      %v791 = vpop.f32.mrf.mxu0
      %792 = vmatprep.mubr.bf16.mxu0 0
      %793 = vmatmul.mubr.bf16.gmra.mxu0 %v726
      %v794 = vpop.f32.mrf.mxu0
      %v795 = vadd.f32 0.0, %v794
      %v796 = vpop.f32.mrf.mxu0
      %v797 = vpop.f32.mrf.mxu0
      %v798 = vadd.f32 0.0, %v797
      %v799 = vpop.f32.mrf.mxu0
      %800 = vdwg.mxu0
      %v801 = vadd.f32 %v636, %v763
      %v802 = vadd.f32 %v637, %v766
      %v803 = vadd.f32 %v638, %v771
      %v804 = vadd.f32 %v639, %v774
      %v805 = vadd.f32 %v640, %v779
      %v806 = vadd.f32 %v641, %v782
      %v807 = vadd.f32 %v642, %v787
      %v808 = vadd.f32 %v643, %v790
      %v809 = vadd.f32 %v644, %v795
      %v810 = vadd.f32 %v645, %v798
      %v811 = vld [vmem:[%s219 + $0x2c] sm:$0x3]
      %s812 = scalar_lea.vmem %s1, 64
      %v813 = vld [vmem:[%s812] sm:$0xf]
      %v814 = vld [vmem:[%s812 + $0x4] sm:$0xf]
      %v815 = vld [vmem:[%s812 + $0x8] sm:$0xf]
      %v816 = vld [vmem:[%s812 + $0xc] sm:$0xf]
      %v818 = vunpack.c.l.b16 %v811
      %v819 = vpack.c.b16 %v818, %v818
      %vm820 = vsmask.f32 6400
      %v822 = vshrl.u32 %v684, 16
      %v824 = vrot.slane %v822, 1
      %v825 = vshll.u32 %v684, 16
      %v827 = vrot.slane %v825, 2
      %v828 = vor.u32 %v824, %v827
      %v830 = vshrl.u32 %v685, 16
      %v832 = vrot.slane %v830, 1
      %v833 = vshll.u32 %v685, 16
      %v835 = vrot.slane %v833, 2
      %v836 = vor.u32 %v832, %v835
      %v837 = vsel %vm820, %v828, %v836
      %v839 = vshrl.u32 %v686, 16
      %v841 = vrot.slane %v839, 1
      %v842 = vshll.u32 %v686, 16
      %v844 = vrot.slane %v842, 2
      %v845 = vor.u32 %v841, %v844
      %v846 = vsel %vm820, %v836, %v845
      %v848 = vshrl.u32 %v687, 16
      %v850 = vrot.slane %v848, 1
      %v851 = vshll.u32 %v687, 16
      %v853 = vrot.slane %v851, 2
      %v854 = vor.u32 %v850, %v853
      %v855 = vsel %vm820, %v845, %v854
      %v857 = vshrl.u32 %v688, 16
      %v859 = vrot.slane %v857, 1
      %v860 = vshll.u32 %v688, 16
      %v862 = vrot.slane %v860, 2
      %v863 = vor.u32 %v859, %v862
      %v864 = vsel %vm820, %v854, %v863
      %v866 = vshrl.u32 %v819, 16
      %v868 = vrot.slane %v866, 1
      %v869 = vshll.u32 %v819, 16
      %v871 = vrot.slane %v869, 2
      %v872 = vor.u32 %v868, %v871
      %v873 = vsel %vm820, %v863, %v872
      %v878 = vunpack.c.l.b16 %v813
      %v879 = vunpack.c.l.b16 %v814
      %v880 = vunpack.c.l.b16 %v815
      %v881 = vunpack.c.l.b16 %v816
      %v882 = vpack.c.b16 %v879, %v878
      %v883 = vpack.c.b16 %v881, %v880
      %v887 = vsel %vm331, %v837, 0
      %v890 = vsel %vm331, %v846, 0
      %v893 = vsel %vm331, %v855, 0
      %v896 = vsel %vm331, %v864, 0
      %v899 = vsel %vm331, %v873, 0
      %901 = vmatprep.subr.bf16.mxu0 0
      %902 = vmatpush1.bf16.msra.mxu0 0
      %903 = vmatprep.subr.bf16.mxu0 0
      %904 = vmatpush1.bf16.msra.mxu0 0
      %905 = vmatprep.subr.bf16.mxu0 0
      %906 = vmatpush1.bf16.msra.mxu0 0
      %907 = vmatprep.subr.bf16.mxu0 0
      %908 = vmatpush1.bf16.msra.mxu0 0
      %909 = vmatprep.subr.bf16.mxu0 0
      %910 = vmatpush1.bf16.msra.mxu0 0
      %911 = vmatprep.subr.bf16.mxu0 0
      %912 = vmatpush1.bf16.msra.mxu0 0
      %913 = vmatprep.subr.bf16.mxu0 0
      %914 = vmatpush1.bf16.msra.mxu0 %v883
      %915 = vmatprep.subr.bf16.mxu0 0
      %916 = vmatpush1.bf16.msra.mxu0 %v882
      %917 = vmatprep.subr.bf16.mxu0 0
      %918 = vmatpush2.bf16.msra.mxu0 0
      %919 = vmatprep.subr.bf16.mxu0 0
      %920 = vmatpush2.bf16.msra.mxu0 0
      %921 = vmatprep.subr.bf16.mxu0 0
      %922 = vmatpush2.bf16.msra.mxu0 0
      %923 = vmatprep.subr.bf16.mxu0 0
      %924 = vmatpush2.bf16.msra.mxu0 0
      %925 = vmatprep.subr.bf16.mxu0 0
      %926 = vmatpush2.bf16.msra.mxu0 0
      %927 = vmatprep.subr.bf16.mxu0 0
      %928 = vmatpush2.bf16.msra.mxu0 0
      %929 = vmatprep.subr.bf16.mxu0 0
      %930 = vmatpush2.bf16.msra.mxu0 0
      %931 = vmatprep.subr.bf16.mxu0 0
      %932 = vmatpush2.bf16.msra.mxu0 0
      %933 = vmatprep.mubr.bf16.mxu0 0
      %934 = vmatmul.mubr.bf16.gmra.mxu0 %v887
      %v935 = vpop.f32.mrf.mxu0
      %v936 = vadd.f32 0.0, %v935
      %v937 = vpop.f32.mrf.mxu0
      %v938 = vpop.f32.mrf.mxu0
      %v939 = vadd.f32 0.0, %v938
      %v940 = vpop.f32.mrf.mxu0
      %941 = vmatprep.mubr.bf16.mxu0 0
      %942 = vmatmul.mubr.bf16.gmra.mxu0 %v890
      %v943 = vpop.f32.mrf.mxu0
      %v944 = vadd.f32 0.0, %v943
      %v945 = vpop.f32.mrf.mxu0
      %v946 = vpop.f32.mrf.mxu0
      %v947 = vadd.f32 0.0, %v946
      %v948 = vpop.f32.mrf.mxu0
      %949 = vmatprep.mubr.bf16.mxu0 0
      %950 = vmatmul.mubr.bf16.gmra.mxu0 %v893
      %v951 = vpop.f32.mrf.mxu0
      %v952 = vadd.f32 0.0, %v951
      %v953 = vpop.f32.mrf.mxu0
      %v954 = vpop.f32.mrf.mxu0
      %v955 = vadd.f32 0.0, %v954
      %v956 = vpop.f32.mrf.mxu0
      %957 = vmatprep.mubr.bf16.mxu0 0
      %958 = vmatmul.mubr.bf16.gmra.mxu0 %v896
      %v959 = vpop.f32.mrf.mxu0
      %v960 = vadd.f32 0.0, %v959
      %v961 = vpop.f32.mrf.mxu0
      %v962 = vpop.f32.mrf.mxu0
      %v963 = vadd.f32 0.0, %v962
      %v964 = vpop.f32.mrf.mxu0
      %965 = vmatprep.mubr.bf16.mxu0 0
      %966 = vmatmul.mubr.bf16.gmra.mxu0 %v899
      %v967 = vpop.f32.mrf.mxu0
      %v968 = vadd.f32 0.0, %v967
      %v969 = vpop.f32.mrf.mxu0
      %v970 = vpop.f32.mrf.mxu0
      %v971 = vadd.f32 0.0, %v970
      %v972 = vpop.f32.mrf.mxu0
      %973 = vdwg.mxu0
      %v974 = vadd.f32 %v801, %v936
      %v975 = vadd.f32 %v802, %v939
      %v976 = vadd.f32 %v803, %v944
      %v977 = vadd.f32 %v804, %v947
      %v978 = vadd.f32 %v805, %v952
      %v979 = vadd.f32 %v806, %v955
      %v980 = vadd.f32 %v807, %v960
      %v981 = vadd.f32 %v808, %v963
      %v982 = vadd.f32 %v809, %v968
      %v983 = vadd.f32 %v810, %v971
      %v984 = vld [vmem:[%s219 + $0x4] sm:$0xc]
      %s985 = scalar_lea.vmem %s1, 80
      %v986 = vld [vmem:[%s985] sm:$0xf]
      %v987 = vld [vmem:[%s985 + $0x4] sm:$0xf]
      %v988 = vld [vmem:[%s985 + $0x8] sm:$0xf]
      %v989 = vld [vmem:[%s985 + $0xc] sm:$0xf]
      %v991 = vunpack.c.l.b16 %v984
      %v992 = vpack.c.b16 %v674, %v991
      %vm993 = vcmask 1045504
      %v994 = vrot.slane %v992, 2
      %v995 = vrot.slane %v685, 2
      %v996 = vsel %vm993, %v994, %v995
      %v997 = vrot.slane %v686, 2
      %v998 = vsel %vm993, %v995, %v997
      %v999 = vrot.slane %v687, 2
      %v1000 = vsel %vm993, %v997, %v999
      %v1001 = vrot.slane %v688, 2
      %v1002 = vsel %vm993, %v999, %v1001
      %v1003 = vrot.slane %v819, 2
      %v1004 = vsel %vm993, %v1001, %v1003
      %v1009 = vunpack.c.l.b16 %v986
      %v1010 = vunpack.c.l.b16 %v987
      %v1011 = vunpack.c.l.b16 %v988
      %v1012 = vunpack.c.l.b16 %v989
      %v1013 = vpack.c.b16 %v1010, %v1009
      %v1014 = vpack.c.b16 %v1012, %v1011
      %v1018 = vsel %vm331, %v996, 0
      %v1021 = vsel %vm331, %v998, 0
      %v1024 = vsel %vm331, %v1000, 0
      %v1027 = vsel %vm331, %v1002, 0
      %v1030 = vsel %vm331, %v1004, 0
      %1032 = vmatprep.subr.bf16.mxu0 0
      %1033 = vmatpush1.bf16.msra.mxu0 0
      %1034 = vmatprep.subr.bf16.mxu0 0
      %1035 = vmatpush1.bf16.msra.mxu0 0
      %1036 = vmatprep.subr.bf16.mxu0 0
      %1037 = vmatpush1.bf16.msra.mxu0 0
      %1038 = vmatprep.subr.bf16.mxu0 0
      %1039 = vmatpush1.bf16.msra.mxu0 0
      %1040 = vmatprep.subr.bf16.mxu0 0
      %1041 = vmatpush1.bf16.msra.mxu0 0
      %1042 = vmatprep.subr.bf16.mxu0 0
      %1043 = vmatpush1.bf16.msra.mxu0 0
      %1044 = vmatprep.subr.bf16.mxu0 0
      %1045 = vmatpush1.bf16.msra.mxu0 %v1014
      %1046 = vmatprep.subr.bf16.mxu0 0
      %1047 = vmatpush1.bf16.msra.mxu0 %v1013
      %1048 = vmatprep.subr.bf16.mxu0 0
      %1049 = vmatpush2.bf16.msra.mxu0 0
      %1050 = vmatprep.subr.bf16.mxu0 0
      %1051 = vmatpush2.bf16.msra.mxu0 0
      %1052 = vmatprep.subr.bf16.mxu0 0
      %1053 = vmatpush2.bf16.msra.mxu0 0
      %1054 = vmatprep.subr.bf16.mxu0 0
      %1055 = vmatpush2.bf16.msra.mxu0 0
      %1056 = vmatprep.subr.bf16.mxu0 0
      %1057 = vmatpush2.bf16.msra.mxu0 0
      %1058 = vmatprep.subr.bf16.mxu0 0
      %1059 = vmatpush2.bf16.msra.mxu0 0
      %1060 = vmatprep.subr.bf16.mxu0 0
      %1061 = vmatpush2.bf16.msra.mxu0 0
      %1062 = vmatprep.subr.bf16.mxu0 0
      %1063 = vmatpush2.bf16.msra.mxu0 0
      %1064 = vmatprep.mubr.bf16.mxu0 0
      %1065 = vmatmul.mubr.bf16.gmra.mxu0 %v1018
      %v1066 = vpop.f32.mrf.mxu0
      %v1067 = vadd.f32 0.0, %v1066
      %v1068 = vpop.f32.mrf.mxu0
      %v1069 = vpop.f32.mrf.mxu0
      %v1070 = vadd.f32 0.0, %v1069
      %v1071 = vpop.f32.mrf.mxu0
      %1072 = vmatprep.mubr.bf16.mxu0 0
      %1073 = vmatmul.mubr.bf16.gmra.mxu0 %v1021
      %v1074 = vpop.f32.mrf.mxu0
      %v1075 = vadd.f32 0.0, %v1074
      %v1076 = vpop.f32.mrf.mxu0
      %v1077 = vpop.f32.mrf.mxu0
      %v1078 = vadd.f32 0.0, %v1077
      %v1079 = vpop.f32.mrf.mxu0
      %1080 = vmatprep.mubr.bf16.mxu0 0
      %1081 = vmatmul.mubr.bf16.gmra.mxu0 %v1024
      %v1082 = vpop.f32.mrf.mxu0
      %v1083 = vadd.f32 0.0, %v1082
      %v1084 = vpop.f32.mrf.mxu0
      %v1085 = vpop.f32.mrf.mxu0
      %v1086 = vadd.f32 0.0, %v1085
      %v1087 = vpop.f32.mrf.mxu0
      %1088 = vmatprep.mubr.bf16.mxu0 0
      %1089 = vmatmul.mubr.bf16.gmra.mxu0 %v1027
      %v1090 = vpop.f32.mrf.mxu0
      %v1091 = vadd.f32 0.0, %v1090
      %v1092 = vpop.f32.mrf.mxu0
      %v1093 = vpop.f32.mrf.mxu0
      %v1094 = vadd.f32 0.0, %v1093
      %v1095 = vpop.f32.mrf.mxu0
      %1096 = vmatprep.mubr.bf16.mxu0 0
      %1097 = vmatmul.mubr.bf16.gmra.mxu0 %v1030
      %v1098 = vpop.f32.mrf.mxu0
      %v1099 = vadd.f32 0.0, %v1098
      %v1100 = vpop.f32.mrf.mxu0
      %v1101 = vpop.f32.mrf.mxu0
      %v1102 = vadd.f32 0.0, %v1101
      %v1103 = vpop.f32.mrf.mxu0
      %1104 = vdwg.mxu0
      %v1105 = vadd.f32 %v974, %v1067
      %v1106 = vadd.f32 %v975, %v1070
      %v1107 = vadd.f32 %v976, %v1075
      %v1108 = vadd.f32 %v977, %v1078
      %v1109 = vadd.f32 %v978, %v1083
      %v1110 = vadd.f32 %v979, %v1086
      %v1111 = vadd.f32 %v980, %v1091
      %v1112 = vadd.f32 %v981, %v1094
      %v1113 = vadd.f32 %v982, %v1099
      %v1114 = vadd.f32 %v983, %v1102
      %v1115 = vld [vmem:[%s219 + $0x8] sm:$0xc]
      %v1116 = vld [vmem:[%s219 + $0xc] sm:$0xf]
      %v1117 = vld [vmem:[%s219 + $0x10] sm:$0xf]
      %v1118 = vld [vmem:[%s219 + $0x14] sm:$0xf]
      %v1119 = vld [vmem:[%s219 + $0x18] sm:$0xf]
      %v1120 = vld [vmem:[%s219 + $0x1c] sm:$0xf]
      %v1121 = vld [vmem:[%s219 + $0x20] sm:$0xf]
      %v1122 = vld [vmem:[%s219 + $0x24] sm:$0xf]
      %v1123 = vld [vmem:[%s219 + $0x28] sm:$0xf]
      %v1124 = vld [vmem:[%s219 + $0x2c] sm:$0xf]
      %v1125 = vld [vmem:[%s219 + $0x30] sm:$0x3]
      %s1126 = scalar_lea.vmem %s1, 96
      %v1127 = vld [vmem:[%s1126] sm:$0xf]
      %v1128 = vld [vmem:[%s1126 + $0x4] sm:$0xf]
      %v1129 = vld [vmem:[%s1126 + $0x8] sm:$0xf]
      %v1130 = vld [vmem:[%s1126 + $0xc] sm:$0xf]
      %v1142 = vunpack.c.l.b16 %v1115
      %v1143 = vunpack.c.l.b16 %v1116
      %v1144 = vunpack.c.l.b16 %v1117
      %v1145 = vunpack.c.l.b16 %v1118
      %v1146 = vunpack.c.l.b16 %v1119
      %v1147 = vunpack.c.l.b16 %v1120
      %v1148 = vunpack.c.l.b16 %v1121
      %v1149 = vunpack.c.l.b16 %v1122
      %v1150 = vunpack.c.l.b16 %v1123
      %v1151 = vunpack.c.l.b16 %v1124
      %v1152 = vunpack.c.l.b16 %v1125
      %v1153 = vpack.c.b16 %v1143, %v1142
      %v1154 = vpack.c.b16 %v1145, %v1144
      %v1155 = vpack.c.b16 %v1147, %v1146
      %v1156 = vpack.c.b16 %v1149, %v1148
      %v1157 = vpack.c.b16 %v1151, %v1150
      %v1158 = vpack.c.b16 %v1152, %v1152
      %v1159 = vrot.slane %v1153, 2
      %v1160 = vrot.slane %v1154, 2
      %v1161 = vsel %vm993, %v1159, %v1160
      %v1162 = vrot.slane %v1155, 2
      %v1163 = vsel %vm993, %v1160, %v1162
      %v1164 = vrot.slane %v1156, 2
      %v1165 = vsel %vm993, %v1162, %v1164
      %v1166 = vrot.slane %v1157, 2
      %v1167 = vsel %vm993, %v1164, %v1166
      %v1168 = vrot.slane %v1158, 2
      %v1169 = vsel %vm993, %v1166, %v1168
      %v1174 = vunpack.c.l.b16 %v1127
      %v1175 = vunpack.c.l.b16 %v1128
      %v1176 = vunpack.c.l.b16 %v1129
      %v1177 = vunpack.c.l.b16 %v1130
      %v1178 = vpack.c.b16 %v1175, %v1174
      %v1179 = vpack.c.b16 %v1177, %v1176
      %v1183 = vsel %vm331, %v1161, 0
      %v1186 = vsel %vm331, %v1163, 0
      %v1189 = vsel %vm331, %v1165, 0
      %v1192 = vsel %vm331, %v1167, 0
      %v1195 = vsel %vm331, %v1169, 0
      %1197 = vmatprep.subr.bf16.mxu0 0
      %1198 = vmatpush1.bf16.msra.mxu0 0
      %1199 = vmatprep.subr.bf16.mxu0 0
      %1200 = vmatpush1.bf16.msra.mxu0 0
      %1201 = vmatprep.subr.bf16.mxu0 0
      %1202 = vmatpush1.bf16.msra.mxu0 0
      %1203 = vmatprep.subr.bf16.mxu0 0
      %1204 = vmatpush1.bf16.msra.mxu0 0
      %1205 = vmatprep.subr.bf16.mxu0 0
      %1206 = vmatpush1.bf16.msra.mxu0 0
      %1207 = vmatprep.subr.bf16.mxu0 0
      %1208 = vmatpush1.bf16.msra.mxu0 0
      %1209 = vmatprep.subr.bf16.mxu0 0
      %1210 = vmatpush1.bf16.msra.mxu0 %v1179
      %1211 = vmatprep.subr.bf16.mxu0 0
      %1212 = vmatpush1.bf16.msra.mxu0 %v1178
      %1213 = vmatprep.subr.bf16.mxu0 0
      %1214 = vmatpush2.bf16.msra.mxu0 0
      %1215 = vmatprep.subr.bf16.mxu0 0
      %1216 = vmatpush2.bf16.msra.mxu0 0
      %1217 = vmatprep.subr.bf16.mxu0 0
      %1218 = vmatpush2.bf16.msra.mxu0 0
      %1219 = vmatprep.subr.bf16.mxu0 0
      %1220 = vmatpush2.bf16.msra.mxu0 0
      %1221 = vmatprep.subr.bf16.mxu0 0
      %1222 = vmatpush2.bf16.msra.mxu0 0
      %1223 = vmatprep.subr.bf16.mxu0 0
      %1224 = vmatpush2.bf16.msra.mxu0 0
      %1225 = vmatprep.subr.bf16.mxu0 0
      %1226 = vmatpush2.bf16.msra.mxu0 0
      %1227 = vmatprep.subr.bf16.mxu0 0
      %1228 = vmatpush2.bf16.msra.mxu0 0
      %1229 = vmatprep.mubr.bf16.mxu0 0
      %1230 = vmatmul.mubr.bf16.gmra.mxu0 %v1183
      %v1231 = vpop.f32.mrf.mxu0
      %v1232 = vadd.f32 0.0, %v1231
      %v1233 = vpop.f32.mrf.mxu0
      %v1234 = vpop.f32.mrf.mxu0
      %v1235 = vadd.f32 0.0, %v1234
      %v1236 = vpop.f32.mrf.mxu0
      %1237 = vmatprep.mubr.bf16.mxu0 0
      %1238 = vmatmul.mubr.bf16.gmra.mxu0 %v1186
      %v1239 = vpop.f32.mrf.mxu0
      %v1240 = vadd.f32 0.0, %v1239
      %v1241 = vpop.f32.mrf.mxu0
      %v1242 = vpop.f32.mrf.mxu0
      %v1243 = vadd.f32 0.0, %v1242
      %v1244 = vpop.f32.mrf.mxu0
      %1245 = vmatprep.mubr.bf16.mxu0 0
      %1246 = vmatmul.mubr.bf16.gmra.mxu0 %v1189
      %v1247 = vpop.f32.mrf.mxu0
      %v1248 = vadd.f32 0.0, %v1247
      %v1249 = vpop.f32.mrf.mxu0
      %v1250 = vpop.f32.mrf.mxu0
      %v1251 = vadd.f32 0.0, %v1250
      %v1252 = vpop.f32.mrf.mxu0
      %1253 = vmatprep.mubr.bf16.mxu0 0
      %1254 = vmatmul.mubr.bf16.gmra.mxu0 %v1192
      %v1255 = vpop.f32.mrf.mxu0
      %v1256 = vadd.f32 0.0, %v1255
      %v1257 = vpop.f32.mrf.mxu0
      %v1258 = vpop.f32.mrf.mxu0
      %v1259 = vadd.f32 0.0, %v1258
      %v1260 = vpop.f32.mrf.mxu0
      %1261 = vmatprep.mubr.bf16.mxu0 0
      %1262 = vmatmul.mubr.bf16.gmra.mxu0 %v1195
      %v1263 = vpop.f32.mrf.mxu0
      %v1264 = vadd.f32 0.0, %v1263
      %v1265 = vpop.f32.mrf.mxu0
      %v1266 = vpop.f32.mrf.mxu0
      %v1267 = vadd.f32 0.0, %v1266
      %v1268 = vpop.f32.mrf.mxu0
      %1269 = vdwg.mxu0
      %v1270 = vadd.f32 %v1105, %v1232
      %v1271 = vadd.f32 %v1106, %v1235
      %v1272 = vadd.f32 %v1107, %v1240
      %v1273 = vadd.f32 %v1108, %v1243
      %v1274 = vadd.f32 %v1109, %v1248
      %v1275 = vadd.f32 %v1110, %v1251
      %v1276 = vadd.f32 %v1111, %v1256
      %v1277 = vadd.f32 %v1112, %v1259
      %v1278 = vadd.f32 %v1113, %v1264
      %v1279 = vadd.f32 %v1114, %v1267
      %v1280 = vld [vmem:[%s219 + $0x30] sm:$0x7]
      %s1281 = scalar_lea.vmem %s1, 112
      %v1282 = vld [vmem:[%s1281] sm:$0xf]
      %v1283 = vld [vmem:[%s1281 + $0x4] sm:$0xf]
      %v1284 = vld [vmem:[%s1281 + $0x8] sm:$0xf]
      %v1285 = vld [vmem:[%s1281 + $0xc] sm:$0xf]
      %v1287 = vunpack.c.l.b16 %v1280
      %v1288 = vpack.c.b16 %v1287, %v1287
      %vm1289 = vsmask.f32 5376
      %v1291 = vshrl.u32 %v1153, 16
      %v1293 = vrot.slane %v1291, 2
      %v1294 = vshll.u32 %v1153, 16
      %v1296 = vrot.slane %v1294, 3
      %v1297 = vor.u32 %v1293, %v1296
      %v1299 = vshrl.u32 %v1154, 16
      %v1301 = vrot.slane %v1299, 2
      %v1302 = vshll.u32 %v1154, 16
      %v1304 = vrot.slane %v1302, 3
      %v1305 = vor.u32 %v1301, %v1304
      %v1306 = vsel %vm1289, %v1297, %v1305
      %v1308 = vshrl.u32 %v1155, 16
      %v1310 = vrot.slane %v1308, 2
      %v1311 = vshll.u32 %v1155, 16
      %v1313 = vrot.slane %v1311, 3
      %v1314 = vor.u32 %v1310, %v1313
      %v1315 = vsel %vm1289, %v1305, %v1314
      %v1317 = vshrl.u32 %v1156, 16
      %v1319 = vrot.slane %v1317, 2
      %v1320 = vshll.u32 %v1156, 16
      %v1322 = vrot.slane %v1320, 3
      %v1323 = vor.u32 %v1319, %v1322
      %v1324 = vsel %vm1289, %v1314, %v1323
      %v1326 = vshrl.u32 %v1157, 16
      %v1328 = vrot.slane %v1326, 2
      %v1329 = vshll.u32 %v1157, 16
      %v1331 = vrot.slane %v1329, 3
      %v1332 = vor.u32 %v1328, %v1331
      %v1333 = vsel %vm1289, %v1323, %v1332
      %v1335 = vshrl.u32 %v1288, 16
      %v1337 = vrot.slane %v1335, 2
      %v1338 = vshll.u32 %v1288, 16
      %v1340 = vrot.slane %v1338, 3
      %v1341 = vor.u32 %v1337, %v1340
      %v1342 = vsel %vm1289, %v1332, %v1341
      %v1347 = vunpack.c.l.b16 %v1282
      %v1348 = vunpack.c.l.b16 %v1283
      %v1349 = vunpack.c.l.b16 %v1284
      %v1350 = vunpack.c.l.b16 %v1285
      %v1351 = vpack.c.b16 %v1348, %v1347
      %v1352 = vpack.c.b16 %v1350, %v1349
      %v1356 = vsel %vm331, %v1306, 0
      %v1359 = vsel %vm331, %v1315, 0
      %v1362 = vsel %vm331, %v1324, 0
      %v1365 = vsel %vm331, %v1333, 0
      %v1368 = vsel %vm331, %v1342, 0
      %1370 = vmatprep.subr.bf16.mxu0 0
      %1371 = vmatpush1.bf16.msra.mxu0 0
      %1372 = vmatprep.subr.bf16.mxu0 0
      %1373 = vmatpush1.bf16.msra.mxu0 0
      %1374 = vmatprep.subr.bf16.mxu0 0
      %1375 = vmatpush1.bf16.msra.mxu0 0
      %1376 = vmatprep.subr.bf16.mxu0 0
      %1377 = vmatpush1.bf16.msra.mxu0 0
      %1378 = vmatprep.subr.bf16.mxu0 0
      %1379 = vmatpush1.bf16.msra.mxu0 0
      %1380 = vmatprep.subr.bf16.mxu0 0
      %1381 = vmatpush1.bf16.msra.mxu0 0
      %1382 = vmatprep.subr.bf16.mxu0 0
      %1383 = vmatpush1.bf16.msra.mxu0 %v1352
      %1384 = vmatprep.subr.bf16.mxu0 0
      %1385 = vmatpush1.bf16.msra.mxu0 %v1351
      %1386 = vmatprep.subr.bf16.mxu0 0
      %1387 = vmatpush2.bf16.msra.mxu0 0
      %1388 = vmatprep.subr.bf16.mxu0 0
      %1389 = vmatpush2.bf16.msra.mxu0 0
      %1390 = vmatprep.subr.bf16.mxu0 0
      %1391 = vmatpush2.bf16.msra.mxu0 0
      %1392 = vmatprep.subr.bf16.mxu0 0
      %1393 = vmatpush2.bf16.msra.mxu0 0
      %1394 = vmatprep.subr.bf16.mxu0 0
      %1395 = vmatpush2.bf16.msra.mxu0 0
      %1396 = vmatprep.subr.bf16.mxu0 0
      %1397 = vmatpush2.bf16.msra.mxu0 0
      %1398 = vmatprep.subr.bf16.mxu0 0
      %1399 = vmatpush2.bf16.msra.mxu0 0
      %1400 = vmatprep.subr.bf16.mxu0 0
      %1401 = vmatpush2.bf16.msra.mxu0 0
      %1402 = vmatprep.mubr.bf16.mxu0 0
      %1403 = vmatmul.mubr.bf16.gmra.mxu0 %v1356
      %v1404 = vpop.f32.mrf.mxu0
      %v1405 = vadd.f32 0.0, %v1404
      %v1406 = vpop.f32.mrf.mxu0
      %v1407 = vpop.f32.mrf.mxu0
      %v1408 = vadd.f32 0.0, %v1407
      %v1409 = vpop.f32.mrf.mxu0
      %1410 = vmatprep.mubr.bf16.mxu0 0
      %1411 = vmatmul.mubr.bf16.gmra.mxu0 %v1359
      %v1412 = vpop.f32.mrf.mxu0
      %v1413 = vadd.f32 0.0, %v1412
      %v1414 = vpop.f32.mrf.mxu0
      %v1415 = vpop.f32.mrf.mxu0
      %v1416 = vadd.f32 0.0, %v1415
      %v1417 = vpop.f32.mrf.mxu0
      %1418 = vmatprep.mubr.bf16.mxu0 0
      %1419 = vmatmul.mubr.bf16.gmra.mxu0 %v1362
      %v1420 = vpop.f32.mrf.mxu0
      %v1421 = vadd.f32 0.0, %v1420
      %v1422 = vpop.f32.mrf.mxu0
      %v1423 = vpop.f32.mrf.mxu0
      %v1424 = vadd.f32 0.0, %v1423
      %v1425 = vpop.f32.mrf.mxu0
      %1426 = vmatprep.mubr.bf16.mxu0 0
      %1427 = vmatmul.mubr.bf16.gmra.mxu0 %v1365
      %v1428 = vpop.f32.mrf.mxu0
      %v1429 = vadd.f32 0.0, %v1428
      %v1430 = vpop.f32.mrf.mxu0
      %v1431 = vpop.f32.mrf.mxu0
      %v1432 = vadd.f32 0.0, %v1431
      %v1433 = vpop.f32.mrf.mxu0
      %1434 = vmatprep.mubr.bf16.mxu0 0
      %1435 = vmatmul.mubr.bf16.gmra.mxu0 %v1368
      %v1436 = vpop.f32.mrf.mxu0
      %v1437 = vadd.f32 0.0, %v1436
      %v1438 = vpop.f32.mrf.mxu0
      %v1439 = vpop.f32.mrf.mxu0
      %v1440 = vadd.f32 0.0, %v1439
      %v1441 = vpop.f32.mrf.mxu0
      %1442 = vdwg.mxu0
      %v1443 = vadd.f32 %v1270, %v1405
      %v1444 = vadd.f32 %v1271, %v1408
      %v1445 = vadd.f32 %v1272, %v1413
      %v1446 = vadd.f32 %v1273, %v1416
      %v1447 = vadd.f32 %v1274, %v1421
      %v1448 = vadd.f32 %v1275, %v1424
      %v1449 = vadd.f32 %v1276, %v1429
      %v1450 = vadd.f32 %v1277, %v1432
      %v1451 = vadd.f32 %v1278, %v1437
      %v1452 = vadd.f32 %v1279, %v1440
      %v1453 = vld [vmem:[%s219 + $0x8] sm:$0x8]
      %s1454 = scalar_lea.vmem %s1, 128
      %v1455 = vld [vmem:[%s1454] sm:$0xf]
      %v1456 = vld [vmem:[%s1454 + $0x4] sm:$0xf]
      %v1457 = vld [vmem:[%s1454 + $0x8] sm:$0xf]
      %v1458 = vld [vmem:[%s1454 + $0xc] sm:$0xf]
      %v1460 = vunpack.c.l.b16 %v1453
      %v1461 = vpack.c.b16 %v1143, %v1460
      %vm1462 = vcmask 1044480
      %v1463 = vrot.slane %v1461, 3
      %v1464 = vrot.slane %v1154, 3
      %v1465 = vsel %vm1462, %v1463, %v1464
      %v1466 = vrot.slane %v1155, 3
      %v1467 = vsel %vm1462, %v1464, %v1466
      %v1468 = vrot.slane %v1156, 3
      %v1469 = vsel %vm1462, %v1466, %v1468
      %v1470 = vrot.slane %v1157, 3
      %v1471 = vsel %vm1462, %v1468, %v1470
      %v1472 = vrot.slane %v1288, 3
      %v1473 = vsel %vm1462, %v1470, %v1472
      %v1478 = vunpack.c.l.b16 %v1455
      %v1479 = vunpack.c.l.b16 %v1456
      %v1480 = vunpack.c.l.b16 %v1457
      %v1481 = vunpack.c.l.b16 %v1458
      %v1482 = vpack.c.b16 %v1479, %v1478
      %v1483 = vpack.c.b16 %v1481, %v1480
      %v1487 = vsel %vm331, %v1465, 0
      %v1490 = vsel %vm331, %v1467, 0
      %v1493 = vsel %vm331, %v1469, 0
      %v1496 = vsel %vm331, %v1471, 0
      %v1499 = vsel %vm331, %v1473, 0
      %1501 = vmatprep.subr.bf16.mxu0 0
      %1502 = vmatpush1.bf16.msra.mxu0 0
      %1503 = vmatprep.subr.bf16.mxu0 0
      %1504 = vmatpush1.bf16.msra.mxu0 0
      %1505 = vmatprep.subr.bf16.mxu0 0
      %1506 = vmatpush1.bf16.msra.mxu0 0
      %1507 = vmatprep.subr.bf16.mxu0 0
      %1508 = vmatpush1.bf16.msra.mxu0 0
      %1509 = vmatprep.subr.bf16.mxu0 0
      %1510 = vmatpush1.bf16.msra.mxu0 0
      %1511 = vmatprep.subr.bf16.mxu0 0
      %1512 = vmatpush1.bf16.msra.mxu0 0
      %1513 = vmatprep.subr.bf16.mxu0 0
      %1514 = vmatpush1.bf16.msra.mxu0 %v1483
      %1515 = vmatprep.subr.bf16.mxu0 0
      %1516 = vmatpush1.bf16.msra.mxu0 %v1482
      %1517 = vmatprep.subr.bf16.mxu0 0
      %1518 = vmatpush2.bf16.msra.mxu0 0
      %1519 = vmatprep.subr.bf16.mxu0 0
      %1520 = vmatpush2.bf16.msra.mxu0 0
      %1521 = vmatprep.subr.bf16.mxu0 0
      %1522 = vmatpush2.bf16.msra.mxu0 0
      %1523 = vmatprep.subr.bf16.mxu0 0
      %1524 = vmatpush2.bf16.msra.mxu0 0
      %1525 = vmatprep.subr.bf16.mxu0 0
      %1526 = vmatpush2.bf16.msra.mxu0 0
      %1527 = vmatprep.subr.bf16.mxu0 0
      %1528 = vmatpush2.bf16.msra.mxu0 0
      %1529 = vmatprep.subr.bf16.mxu0 0
      %1530 = vmatpush2.bf16.msra.mxu0 0
      %1531 = vmatprep.subr.bf16.mxu0 0
      %1532 = vmatpush2.bf16.msra.mxu0 0
      %1533 = vmatprep.mubr.bf16.mxu0 0
      %1534 = vmatmul.mubr.bf16.gmra.mxu0 %v1487
      %v1535 = vpop.f32.mrf.mxu0
      %v1536 = vadd.f32 0.0, %v1535
      %v1537 = vpop.f32.mrf.mxu0
      %v1538 = vpop.f32.mrf.mxu0
      %v1539 = vadd.f32 0.0, %v1538
      %v1540 = vpop.f32.mrf.mxu0
      %1541 = vmatprep.mubr.bf16.mxu0 0
      %1542 = vmatmul.mubr.bf16.gmra.mxu0 %v1490
      %v1543 = vpop.f32.mrf.mxu0
      %v1544 = vadd.f32 0.0, %v1543
      %v1545 = vpop.f32.mrf.mxu0
      %v1546 = vpop.f32.mrf.mxu0
      %v1547 = vadd.f32 0.0, %v1546
      %v1548 = vpop.f32.mrf.mxu0
      %1549 = vmatprep.mubr.bf16.mxu0 0
      %1550 = vmatmul.mubr.bf16.gmra.mxu0 %v1493
      %v1551 = vpop.f32.mrf.mxu0
      %v1552 = vadd.f32 0.0, %v1551
      %v1553 = vpop.f32.mrf.mxu0
      %v1554 = vpop.f32.mrf.mxu0
      %v1555 = vadd.f32 0.0, %v1554
      %v1556 = vpop.f32.mrf.mxu0
      %1557 = vmatprep.mubr.bf16.mxu0 0
      %1558 = vmatmul.mubr.bf16.gmra.mxu0 %v1496
      %v1559 = vpop.f32.mrf.mxu0
      %v1560 = vadd.f32 0.0, %v1559
      %v1561 = vpop.f32.mrf.mxu0
      %v1562 = vpop.f32.mrf.mxu0
      %v1563 = vadd.f32 0.0, %v1562
      %v1564 = vpop.f32.mrf.mxu0
      %1565 = vmatprep.mubr.bf16.mxu0 0
      %1566 = vmatmul.mubr.bf16.gmra.mxu0 %v1499
      %v1567 = vpop.f32.mrf.mxu0
      %v1568 = vadd.f32 0.0, %v1567
      %v1569 = vpop.f32.mrf.mxu0
      %v1570 = vpop.f32.mrf.mxu0
      %v1571 = vadd.f32 0.0, %v1570
      %v1572 = vpop.f32.mrf.mxu0
      %1573 = vdwg.mxu0
      %v1574 = vadd.f32 %v1443, %v1536
      %v1575 = vadd.f32 %v1444, %v1539
      %v1576 = vadd.f32 %v1445, %v1544
      %v1577 = vadd.f32 %v1446, %v1547
      %v1578 = vadd.f32 %v1447, %v1552
      %v1579 = vadd.f32 %v1448, %v1555
      %v1580 = vadd.f32 %v1449, %v1560
      %v1581 = vadd.f32 %v1450, %v1563
      %v1582 = vadd.f32 %v1451, %v1568
      %v1583 = vadd.f32 %v1452, %v1571
      %v1584 = vld [vmem:[%s2] sm:$0x1]
      %v1586 = vlaneseq
      %v1587 = vshrl.u32 %v1586, 7
      %v1588 = vsub.s32 0, %v1587
      %v1589 = vrot.slane %v1584, %v1588
      %v1591 = vadd.f32 %v1574, %v1589
      %v1592 = vadd.f32 %v1575, %v1589
      %v1593 = vadd.f32 %v1576, %v1589
      %v1594 = vadd.f32 %v1577, %v1589
      %v1595 = vadd.f32 %v1578, %v1589
      %v1596 = vadd.f32 %v1579, %v1589
      %v1597 = vadd.f32 %v1580, %v1589
      %v1598 = vadd.f32 %v1581, %v1589
      %v1599 = vadd.f32 %v1582, %v1589
      %v1600 = vadd.f32 %v1583, %v1589
      %v1601 = vmax.f32 %v1591, 0.0
      %v1602 = vmax.f32 %v1592, 0.0
      %v1603 = vmax.f32 %v1593, 0.0
      %v1604 = vmax.f32 %v1594, 0.0
      %v1605 = vmax.f32 %v1595, 0.0
      %v1606 = vmax.f32 %v1596, 0.0
      %v1607 = vmax.f32 %v1597, 0.0
      %v1608 = vmax.f32 %v1598, 0.0
      %v1609 = vmax.f32 %v1599, 0.0
      %v1610 = vmax.f32 %v1600, 0.0
      %v1611 = vpack.c.bf16 %v1602, %v1601
      %v1612 = vpack.c.bf16 %v1604, %v1603
      %v1613 = vpack.c.bf16 %v1606, %v1605
      %v1614 = vpack.c.bf16 %v1608, %v1607
      %v1615 = vpack.c.bf16 %v1610, %v1609
      %v1616 = vld [vmem:[%s3] sm:$0xf]
      %v1617 = vld [vmem:[%s3 + $0x4] sm:$0xf]
      %v1618 = vld [vmem:[%s3 + $0x8] sm:$0xf]
      %v1619 = vld [vmem:[%s3 + $0xc] sm:$0xf]
      %v1620 = vld [vmem:[%s4] sm:$0x1]
      %v1622 = vlaneseq
      %v1623 = vshrl.u32 %v1622, 7
      %v1624 = vsub.s32 0, %v1623
      %v1625 = vrot.slane %v1620, %v1624
      %v1631 = vunpack.c.l.b16 %v1616
      %v1632 = vunpack.c.l.b16 %v1617
      %v1633 = vunpack.c.l.b16 %v1618
      %v1634 = vunpack.c.l.b16 %v1619
      %v1635 = vpack.c.b16 %v1632, %v1631
      %v1636 = vpack.c.b16 %v1634, %v1633
      %v1640 = vsel %vm331, %v1611, 0
      %v1643 = vsel %vm331, %v1612, 0
      %v1646 = vsel %vm331, %v1613, 0
      %v1649 = vsel %vm331, %v1614, 0
      %v1652 = vsel %vm331, %v1615, 0
      %1654 = vmatprep.subr.bf16.mxu0 0
      %1655 = vmatpush1.bf16.msra.mxu0 0
      %1656 = vmatprep.subr.bf16.mxu0 0
      %1657 = vmatpush1.bf16.msra.mxu0 0
      %1658 = vmatprep.subr.bf16.mxu0 0
      %1659 = vmatpush1.bf16.msra.mxu0 0
      %1660 = vmatprep.subr.bf16.mxu0 0
      %1661 = vmatpush1.bf16.msra.mxu0 0
      %1662 = vmatprep.subr.bf16.mxu0 0
      %1663 = vmatpush1.bf16.msra.mxu0 0
      %1664 = vmatprep.subr.bf16.mxu0 0
      %1665 = vmatpush1.bf16.msra.mxu0 0
      %1666 = vmatprep.subr.bf16.mxu0 0
      %1667 = vmatpush1.bf16.msra.mxu0 %v1636
      %1668 = vmatprep.subr.bf16.mxu0 0
      %1669 = vmatpush1.bf16.msra.mxu0 %v1635
      %1670 = vmatprep.subr.bf16.mxu0 0
      %1671 = vmatpush2.bf16.msra.mxu0 0
      %1672 = vmatprep.subr.bf16.mxu0 0
      %1673 = vmatpush2.bf16.msra.mxu0 0
      %1674 = vmatprep.subr.bf16.mxu0 0
      %1675 = vmatpush2.bf16.msra.mxu0 0
      %1676 = vmatprep.subr.bf16.mxu0 0
      %1677 = vmatpush2.bf16.msra.mxu0 0
      %1678 = vmatprep.subr.bf16.mxu0 0
      %1679 = vmatpush2.bf16.msra.mxu0 0
      %1680 = vmatprep.subr.bf16.mxu0 0
      %1681 = vmatpush2.bf16.msra.mxu0 0
      %1682 = vmatprep.subr.bf16.mxu0 0
      %1683 = vmatpush2.bf16.msra.mxu0 0
      %1684 = vmatprep.subr.bf16.mxu0 0
      %1685 = vmatpush2.bf16.msra.mxu0 0
      %1686 = vmatprep.mubr.bf16.mxu0 0
      %1687 = vmatmul.mubr.bf16.gmra.mxu0 %v1640
      %v1688 = vpop.f32.mrf.mxu0
      %v1689 = vadd.f32 %v1625, %v1688
      %v1690 = vpop.f32.mrf.mxu0
      %v1691 = vpop.f32.mrf.mxu0
      %v1692 = vadd.f32 %v1625, %v1691
      %v1693 = vpop.f32.mrf.mxu0
      %1694 = vmatprep.mubr.bf16.mxu0 0
      %1695 = vmatmul.mubr.bf16.gmra.mxu0 %v1643
      %v1696 = vpop.f32.mrf.mxu0
      %v1697 = vadd.f32 %v1625, %v1696
      %v1698 = vpop.f32.mrf.mxu0
      %v1699 = vpop.f32.mrf.mxu0
      %v1700 = vadd.f32 %v1625, %v1699
      %v1701 = vpop.f32.mrf.mxu0
      %1702 = vmatprep.mubr.bf16.mxu0 0
      %1703 = vmatmul.mubr.bf16.gmra.mxu0 %v1646
      %v1704 = vpop.f32.mrf.mxu0
      %v1705 = vadd.f32 %v1625, %v1704
      %v1706 = vpop.f32.mrf.mxu0
      %v1707 = vpop.f32.mrf.mxu0
      %v1708 = vadd.f32 %v1625, %v1707
      %v1709 = vpop.f32.mrf.mxu0
      %1710 = vmatprep.mubr.bf16.mxu0 0
      %1711 = vmatmul.mubr.bf16.gmra.mxu0 %v1649
      %v1712 = vpop.f32.mrf.mxu0
      %v1713 = vadd.f32 %v1625, %v1712
      %v1714 = vpop.f32.mrf.mxu0
      %v1715 = vpop.f32.mrf.mxu0
      %v1716 = vadd.f32 %v1625, %v1715
      %v1717 = vpop.f32.mrf.mxu0
      %1718 = vmatprep.mubr.bf16.mxu0 0
      %1719 = vmatmul.mubr.bf16.gmra.mxu0 %v1652
      %v1720 = vpop.f32.mrf.mxu0
      %v1721 = vadd.f32 %v1625, %v1720
      %v1722 = vpop.f32.mrf.mxu0
      %v1723 = vpop.f32.mrf.mxu0
      %v1724 = vadd.f32 %v1625, %v1723
      %v1725 = vpop.f32.mrf.mxu0
      %1726 = vdwg.mxu0
      %vm1727 = vcmask 121856
      %1728 = vst.msk [vmem:[%s224] sm:$0xff] %vm1727, %v1689
      %1729 = vst.msk [vmem:[%s224 + $0x8] sm:$0xff] %vm1727, %v1692
      %1730 = vst.msk [vmem:[%s224 + $0x10] sm:$0xff] %vm1727, %v1697
      %1731 = vst.msk [vmem:[%s224 + $0x18] sm:$0xff] %vm1727, %v1700
      %1732 = vst.msk [vmem:[%s224 + $0x20] sm:$0xff] %vm1727, %v1705
      %1733 = vst.msk [vmem:[%s224 + $0x28] sm:$0xff] %vm1727, %v1708
      %1734 = vst.msk [vmem:[%s224 + $0x30] sm:$0xff] %vm1727, %v1713
      %1735 = vst.msk [vmem:[%s224 + $0x38] sm:$0xff] %vm1727, %v1716
      %1736 = vst.msk [vmem:[%s224 + $0x40] sm:$0xff] %vm1727, %v1721
      %1737 = vst.msk [vmem:[%s224 + $0x48] sm:$0xff] %vm1727, %v1724
      %p1738 = scmp.lt.s32.totalorder %s16, 1
      %s1739 = scalar_select %p1738, %s16, 1
      %s1740 = smul.addr %s1739, 10
      %s1741 = smul.addr %s1740, 8
      %s1742 = scalar_lea.vmem %s5, %s1741
      // Predicated region
      $region41: #{_lambda_.6} parent=39 // pred_check
        %p1743 = pneg %p144
      $region42: #{_lambda_.6} parent=39 // pred_check_branch
        %1745 = sbr.rel (%p1743) target = $region44
      $region43: #{_lambda_.6} parent=39 // pred_region
        _
      $region44: #{_lambda_.6} parent=39 // pred_fallthru
        _
    $region40: #{_lambda_.6} parent=5 // pred_fallthru
      _
    %p1746 = scmp.le.s32.totalorder 2, %s11
    // Predicated region
    $region45: #{_lambda_.6} parent=5 // pred_check
      %p1747 = pneg %p1746
    $region46: #{_lambda_.6} parent=5 // pred_check_branch
      %1749 = sbr.rel (%p1747) target = $region48
    $region47: #{_lambda_.6} parent=5 // pred_region
      %s1750 = ssub.s32 %s11, 2
      // Predicated region
      $region49: #{_lambda_.6} parent=47 // pred_check
        %p1751 = pneg %p150
      $region50: #{_lambda_.6} parent=47 // pred_check_branch
        %1753 = sbr.rel (%p1751) target = $region52
      $region51: #{_lambda_.6} parent=47 // pred_region
        %p1754 = scmp.lt.s32.totalorder %s17, 1
        %s1755 = scalar_select %p1754, %s17, 1
        %s1756 = smul.addr %s1755, 10
        %s1757 = smul.addr %s1756, 8
        %s1758 = scalar_lea.vmem %s5, %s1757
      $region52: #{_lambda_.6} parent=47 // pred_fallthru
        _
    $region48: #{_lambda_.6} parent=5 // pred_fallthru
      _
  $region6: #{_lambda_.6} parent=0 // loop_footer
    %s15 = sadd.s32 1, %s11
  $region7: #{_lambda_.6} parent=0 // loop_footer_branch
    %10 = sbr.rel target = $region3
  $region8: #{_lambda_.6} parent=0 // loop_exit
    _

// kernel: _lambda_.7
$region0: #{_lambda_.7}
  #allocation0 [shape = 'u32[]', space=smem, size = 0x4, offset = 0x4, fixed_abs, tag = 'smem constant byte address 0x4 - core index']
  #allocation1 [shape = 'u32[144,128]{1,0:T(1,128)}', space=vmem, size = 0x12000, scoped, tag = 'internal scratch']
  %s0 = inlined_call_operand.vmem [shape: bf16[16,512], index: 0, kind: input, shape index: {}]
  %s1 = inlined_call_operand.vmem [shape: bf16[512,64], index: 1, kind: input, shape index: {}]
  %s2 = inlined_call_operand.vmem [shape: f32[1,64], index: 2, kind: input, shape index: {}]
  %s3 = inlined_call_operand.vmem [shape: bf16[64,64], index: 3, kind: input, shape index: {}]
  %s4 = inlined_call_operand.vmem [shape: f32[1,64], index: 4, kind: input, shape index: {}]
  %s5 = inlined_call_operand.vmem [shape: bf16[64,37], index: 5, kind: input, shape index: {}]
  %s6 = inlined_call_operand.vmem [shape: f32[1,37], index: 6, kind: input, shape index: {}]
  %s7 = inlined_call_operand.vmem [shape: f32[16,37], index: 7, kind: output, shape index: {}]
  %s8 = sld [smem:[#allocation0]]
  $region61: #{_lambda_.7} parent=0
    _
  %s10 = ssub.s32 1, %s8
  %s11 = scalar_select 0, %s10, %s8
  loop: start=0, step=1, limit=4
  $region2: #{_lambda_.7} parent=0 // loop_pre_header
    _
  $region3: #{_lambda_.7} parent=0 // loop_header
    %s13 = sphi 0, %s17
    %p14 = scmp.ge.s32.totalorder %s13, 4
    %s23 = sphi 0, %s25
    %s26 = sphi 0, %s23
    %s27 = sphi 0, %s26
    %s43 = sphi 0, %s27
    %s47 = sphi 0, %s47
    %s49 = sphi 0, %s47
    %s50 = sphi 0, %s49
    %s64 = sphi 0, %s50
    %s68 = sphi 0, %s68
    %s70 = sphi 0, %s68
    %s71 = sphi 0, %s70
    %s85 = sphi 0, %s71
    %s89 = sphi 0, %s89
    %s91 = sphi 0, %s89
    %s92 = sphi 0, %s91
    %s106 = sphi 0, %s92
    %s110 = sphi 0, %s110
    %s112 = sphi 0, %s110
    %s113 = sphi 0, %s112
    %s127 = sphi 0, %s113
    %s131 = sphi 0, %s131
    %s133 = sphi 0, %s131
    %s134 = sphi 0, %s133
    %s148 = sphi 0, %s134
    %s152 = sphi 0, %s152
    %s154 = sphi 0, %s152
    %s155 = sphi 0, %s154
    %s169 = sphi 0, %s155
    %s175 = sphi 0, %s177
    %s178 = sphi 0, %s175
    %s179 = sphi 0, %s178
    %s195 = sphi 0, %s179
  $region4: #{_lambda_.7} parent=0 // loop_header_branch
    %16 = sbr.rel (%p14) target = $region8
  $region5: #{_lambda_.7} parent=0 // loop_body
    %s18 = ssub.s32 %s13, 1
    %s19 = ssub.s32 %s13, 2
    %s20 = sadd.s32 %s13, 1
    %s21 = ssub.s32 %s13, %s20
    %p22 = scmp.eq.s32.totalorder %s21, 0
    %s24 = sadd.s32 %s23, 1
    %s25 = scalar_select %p22, %s23, %s24
    %p28 = pneg %p22
    %p29 = scmp.eq.s32.totalorder %s13, 1
    %p30 = por %p28, %p29
    %p31 = scmp.ne.s32.totalorder %s23, %s26
    %p32 = scmp.eq.s32.totalorder %s13, 0
    %p33 = por %p31, %p32
    %p34 = scmp.ne.s32.totalorder %s23, %s26
    %p35 = scmp.eq.s32.totalorder %s18, 1
    %p36 = por %p34, %p35
    %p37 = scmp.ne.s32.totalorder %s26, %s27
    %p38 = scmp.eq.s32.totalorder %s18, 0
    %p39 = por %p37, %p38
    %p40 = scmp.ne.s32.totalorder %s26, %s27
    %p41 = scmp.eq.s32.totalorder %s19, 1
    %p42 = por %p40, %p41
    %p44 = scmp.ne.s32.totalorder %s27, %s43
    %p45 = scmp.eq.s32.totalorder %s19, 0
    %p46 = por %p44, %p45
    %s48 = sadd.s32 %s47, 1
    %p51 = scmp.eq.s32.totalorder %s13, 1
    %p52 = scmp.ne.s32.totalorder %s47, %s49
    %p53 = scmp.eq.s32.totalorder %s13, 0
    %p54 = por %p52, %p53
    %p55 = scmp.ne.s32.totalorder %s47, %s49
    %p56 = scmp.eq.s32.totalorder %s18, 1
    %p57 = por %p55, %p56
    %p58 = scmp.ne.s32.totalorder %s49, %s50
    %p59 = scmp.eq.s32.totalorder %s18, 0
    %p60 = por %p58, %p59
    %p61 = scmp.ne.s32.totalorder %s49, %s50
    %p62 = scmp.eq.s32.totalorder %s19, 1
    %p63 = por %p61, %p62
    %p65 = scmp.ne.s32.totalorder %s50, %s64
    %p66 = scmp.eq.s32.totalorder %s19, 0
    %p67 = por %p65, %p66
    %s69 = sadd.s32 %s68, 1
    %p72 = scmp.eq.s32.totalorder %s13, 1
    %p73 = scmp.ne.s32.totalorder %s68, %s70
    %p74 = scmp.eq.s32.totalorder %s13, 0
    %p75 = por %p73, %p74
    %p76 = scmp.ne.s32.totalorder %s68, %s70
    %p77 = scmp.eq.s32.totalorder %s18, 1
    %p78 = por %p76, %p77
    %p79 = scmp.ne.s32.totalorder %s70, %s71
    %p80 = scmp.eq.s32.totalorder %s18, 0
    %p81 = por %p79, %p80
    %p82 = scmp.ne.s32.totalorder %s70, %s71
    %p83 = scmp.eq.s32.totalorder %s19, 1
    %p84 = por %p82, %p83
    %p86 = scmp.ne.s32.totalorder %s71, %s85
    %p87 = scmp.eq.s32.totalorder %s19, 0
    %p88 = por %p86, %p87
    %s90 = sadd.s32 %s89, 1
    %p93 = scmp.eq.s32.totalorder %s13, 1
    %p94 = scmp.ne.s32.totalorder %s89, %s91
    %p95 = scmp.eq.s32.totalorder %s13, 0
    %p96 = por %p94, %p95
    %p97 = scmp.ne.s32.totalorder %s89, %s91
    %p98 = scmp.eq.s32.totalorder %s18, 1
    %p99 = por %p97, %p98
    %p100 = scmp.ne.s32.totalorder %s91, %s92
    %p101 = scmp.eq.s32.totalorder %s18, 0
    %p102 = por %p100, %p101
    %p103 = scmp.ne.s32.totalorder %s91, %s92
    %p104 = scmp.eq.s32.totalorder %s19, 1
    %p105 = por %p103, %p104
    %p107 = scmp.ne.s32.totalorder %s92, %s106
    %p108 = scmp.eq.s32.totalorder %s19, 0
    %p109 = por %p107, %p108
    %s111 = sadd.s32 %s110, 1
    %p114 = scmp.eq.s32.totalorder %s13, 1
    %p115 = scmp.ne.s32.totalorder %s110, %s112
    %p116 = scmp.eq.s32.totalorder %s13, 0
    %p117 = por %p115, %p116
    %p118 = scmp.ne.s32.totalorder %s110, %s112
    %p119 = scmp.eq.s32.totalorder %s18, 1
    %p120 = por %p118, %p119
    %p121 = scmp.ne.s32.totalorder %s112, %s113
    %p122 = scmp.eq.s32.totalorder %s18, 0
    %p123 = por %p121, %p122
    %p124 = scmp.ne.s32.totalorder %s112, %s113
    %p125 = scmp.eq.s32.totalorder %s19, 1
    %p126 = por %p124, %p125
    %p128 = scmp.ne.s32.totalorder %s113, %s127
    %p129 = scmp.eq.s32.totalorder %s19, 0
    %p130 = por %p128, %p129
    %s132 = sadd.s32 %s131, 1
    %p135 = scmp.eq.s32.totalorder %s13, 1
    %p136 = scmp.ne.s32.totalorder %s131, %s133
    %p137 = scmp.eq.s32.totalorder %s13, 0
    %p138 = por %p136, %p137
    %p139 = scmp.ne.s32.totalorder %s131, %s133
    %p140 = scmp.eq.s32.totalorder %s18, 1
    %p141 = por %p139, %p140
    %p142 = scmp.ne.s32.totalorder %s133, %s134
    %p143 = scmp.eq.s32.totalorder %s18, 0
    %p144 = por %p142, %p143
    %p145 = scmp.ne.s32.totalorder %s133, %s134
    %p146 = scmp.eq.s32.totalorder %s19, 1
    %p147 = por %p145, %p146
    %p149 = scmp.ne.s32.totalorder %s134, %s148
    %p150 = scmp.eq.s32.totalorder %s19, 0
    %p151 = por %p149, %p150
    %s153 = sadd.s32 %s152, 1
    %p156 = scmp.eq.s32.totalorder %s13, 1
    %p157 = scmp.ne.s32.totalorder %s152, %s154
    %p158 = scmp.eq.s32.totalorder %s13, 0
    %p159 = por %p157, %p158
    %p160 = scmp.ne.s32.totalorder %s152, %s154
    %p161 = scmp.eq.s32.totalorder %s18, 1
    %p162 = por %p160, %p161
    %p163 = scmp.ne.s32.totalorder %s154, %s155
    %p164 = scmp.eq.s32.totalorder %s18, 0
    %p165 = por %p163, %p164
    %p166 = scmp.ne.s32.totalorder %s154, %s155
    %p167 = scmp.eq.s32.totalorder %s19, 1
    %p168 = por %p166, %p167
    %p170 = scmp.ne.s32.totalorder %s155, %s169
    %p171 = scmp.eq.s32.totalorder %s19, 0
    %p172 = por %p170, %p171
    %s173 = ssub.s32 %s13, %s20
    %p174 = scmp.eq.s32.totalorder %s173, 0
    %s176 = sadd.s32 %s175, 1
    %s177 = scalar_select %p174, %s175, %s176
    %p180 = pneg %p174
    %p181 = scmp.eq.s32.totalorder %s13, 1
    %p182 = por %p180, %p181
    %p183 = scmp.ne.s32.totalorder %s175, %s178
    %p184 = scmp.eq.s32.totalorder %s13, 0
    %p185 = por %p183, %p184
    %p186 = scmp.ne.s32.totalorder %s175, %s178
    %p187 = scmp.eq.s32.totalorder %s18, 1
    %p188 = por %p186, %p187
    %p189 = scmp.ne.s32.totalorder %s178, %s179
    %p190 = scmp.eq.s32.totalorder %s18, 0
    %p191 = por %p189, %p190
    %p192 = scmp.ne.s32.totalorder %s178, %s179
    %p193 = scmp.eq.s32.totalorder %s19, 1
    %p194 = por %p192, %p193
    %p196 = scmp.ne.s32.totalorder %s179, %s195
    %p197 = scmp.eq.s32.totalorder %s19, 0
    %p198 = por %p196, %p197
    %p199 = scmp.le.s32.totalorder 1, %s13
    %p200 = scmp.lt.s32.totalorder %s13, 3
    %p201 = pnand %p199, %p200
    %p202 = pneg %p201
    // Predicated region
    $region9: #{_lambda_.7} parent=5 // pred_check
      _
    $region10: #{_lambda_.7} parent=5 // pred_check_branch
      %204 = sbr.rel (%p201) target = $region12
    $region11: #{_lambda_.7} parent=5 // pred_region
      %s205 = ssub.s32 %s13, 1
      // Predicated region
      $region13: #{_lambda_.7} parent=11 // pred_check
        %p206 = pneg %p60
      $region14: #{_lambda_.7} parent=11 // pred_check_branch
        %208 = sbr.rel (%p206) target = $region16
      $region15: #{_lambda_.7} parent=11 // pred_region
        _
      $region16: #{_lambda_.7} parent=11 // pred_fallthru
        _
      // Predicated region
      $region17: #{_lambda_.7} parent=11 // pred_check
        %p209 = pneg %p81
      $region18: #{_lambda_.7} parent=11 // pred_check_branch
        %211 = sbr.rel (%p209) target = $region20
      $region19: #{_lambda_.7} parent=11 // pred_region
        _
      $region20: #{_lambda_.7} parent=11 // pred_fallthru
        _
      // Predicated region
      $region21: #{_lambda_.7} parent=11 // pred_check
        %p212 = pneg %p102
      $region22: #{_lambda_.7} parent=11 // pred_check_branch
        %214 = sbr.rel (%p212) target = $region24
      $region23: #{_lambda_.7} parent=11 // pred_region
        _
      $region24: #{_lambda_.7} parent=11 // pred_fallthru
        _
      // Predicated region
      $region25: #{_lambda_.7} parent=11 // pred_check
        %p215 = pneg %p123
      $region26: #{_lambda_.7} parent=11 // pred_check_branch
        %217 = sbr.rel (%p215) target = $region28
      $region27: #{_lambda_.7} parent=11 // pred_region
        _
      $region28: #{_lambda_.7} parent=11 // pred_fallthru
        _
      // Predicated region
      $region29: #{_lambda_.7} parent=11 // pred_check
        %p218 = pneg %p144
      $region30: #{_lambda_.7} parent=11 // pred_check_branch
        %220 = sbr.rel (%p218) target = $region32
      $region31: #{_lambda_.7} parent=11 // pred_region
        _
      $region32: #{_lambda_.7} parent=11 // pred_fallthru
        _
      // Predicated region
      $region33: #{_lambda_.7} parent=11 // pred_check
        %p221 = pneg %p165
      $region34: #{_lambda_.7} parent=11 // pred_check_branch
        %223 = sbr.rel (%p221) target = $region36
      $region35: #{_lambda_.7} parent=11 // pred_region
        _
      $region36: #{_lambda_.7} parent=11 // pred_fallthru
        _
    $region12: #{_lambda_.7} parent=5 // pred_fallthru
      _
    %p224 = scmp.lt.s32.totalorder %s13, 2
    // Predicated region
    $region37: #{_lambda_.7} parent=5 // pred_check
      %p225 = pneg %p224
    $region38: #{_lambda_.7} parent=5 // pred_check_branch
      %227 = sbr.rel (%p225) target = $region40
    $region39: #{_lambda_.7} parent=5 // pred_region
      // Predicated region
      $region41: #{_lambda_.7} parent=39 // pred_check
        %p228 = pneg %p33
      $region42: #{_lambda_.7} parent=39 // pred_check_branch
        %230 = sbr.rel (%p228) target = $region44
      $region43: #{_lambda_.7} parent=39 // pred_region
        %p231 = scmp.lt.s32.totalorder %s13, 1
        %s232 = scalar_select %p231, %s13, 1
        %s233 = smul.addr %s232, 4
        %s234 = smul.addr %s233, 4
        %s235 = scalar_lea.vmem %s0, %s234
      $region44: #{_lambda_.7} parent=39 // pred_fallthru
        _
    $region40: #{_lambda_.7} parent=5 // pred_fallthru
      _
    %p236 = scmp.le.s32.totalorder 1, %s13
    %p237 = scmp.lt.s32.totalorder %s13, 3
    %p238 = pnand %p236, %p237
    %p239 = pneg %p238
    // Predicated region
    $region45: #{_lambda_.7} parent=5 // pred_check
      _
    $region46: #{_lambda_.7} parent=5 // pred_check_branch
      %241 = sbr.rel (%p238) target = $region48
    $region47: #{_lambda_.7} parent=5 // pred_region
      %s242 = ssub.s32 %s13, 1
      %p243 = scmp.lt.s32.totalorder %s18, 1
      %s244 = scalar_select %p243, %s18, 1
      %s245 = smul.addr %s244, 4
      %s246 = smul.addr %s245, 4
      %s247 = scalar_lea.vmem %s0, %s246
      %p248 = pneg %p39
      %p249 = pneg %p36
      %p250 = pneg %p60
      %p251 = pneg %p57
      %p252 = pneg %p81
      %p253 = pneg %p78
      %p254 = pneg %p102
      %p255 = pneg %p99
      %p256 = pneg %p123
      %p257 = pneg %p120
      %p258 = pneg %p144
      %p259 = pneg %p141
      %p260 = pneg %p165
      %p261 = pneg %p162
      %p262 = pneg %p191
      %p263 = pneg %p188
      %p264 = scmp.lt.s32.totalorder %s18, 1
      %s265 = scalar_select %p264, %s18, 1
      %s266 = smul.addr %s265, 8
      %s267 = scalar_lea.vmem %s7, %s266
      %p268 = scmp.lt.s32.totalorder %s18, 1
      %s269 = scalar_select %p268, %s18, 1
      %s270 = smul.addr %s269, 4
      %s271 = smul.addr %s270, 4
      %s272 = scalar_lea.vmem %s0, %s271
      %p273 = scmp.lt.s32.totalorder %s18, 1
      %s274 = scalar_select %p273, %s18, 1
      %s275 = smul.addr %s274, 8
      %s276 = scalar_lea.vmem %s7, %s275
      %v278 = vld [vmem:[%s272] sm:$0xff]
      %v279 = vld [vmem:[%s272 + $0x8] sm:$0xff]
      %v280 = vld [vmem:[%s1] sm:$0xf]
      %v281 = vld [vmem:[%s1 + $0x4] sm:$0xf]
      %v282 = vld [vmem:[%s1 + $0x8] sm:$0xf]
      %v283 = vld [vmem:[%s1 + $0xc] sm:$0xf]
      %v284 = vld [vmem:[%s1 + $0x10] sm:$0xf]
      %v285 = vld [vmem:[%s1 + $0x14] sm:$0xf]
      %v286 = vld [vmem:[%s1 + $0x18] sm:$0xf]
      %v287 = vld [vmem:[%s1 + $0x1c] sm:$0xf]
      %v288 = vld [vmem:[%s1 + $0x20] sm:$0xf]
      %v289 = vld [vmem:[%s1 + $0x24] sm:$0xf]
      %v290 = vld [vmem:[%s1 + $0x28] sm:$0xf]
      %v291 = vld [vmem:[%s1 + $0x2c] sm:$0xf]
      %v292 = vld [vmem:[%s1 + $0x30] sm:$0xf]
      %v293 = vld [vmem:[%s1 + $0x34] sm:$0xf]
      %v294 = vld [vmem:[%s1 + $0x38] sm:$0xf]
      %v295 = vld [vmem:[%s1 + $0x3c] sm:$0xf]
      %v296 = vld [vmem:[%s1 + $0x40] sm:$0xf]
      %v297 = vld [vmem:[%s1 + $0x44] sm:$0xf]
      %v298 = vld [vmem:[%s1 + $0x48] sm:$0xf]
      %v299 = vld [vmem:[%s1 + $0x4c] sm:$0xf]
      %v300 = vld [vmem:[%s1 + $0x50] sm:$0xf]
      %v301 = vld [vmem:[%s1 + $0x54] sm:$0xf]
      %v302 = vld [vmem:[%s1 + $0x58] sm:$0xf]
      %v303 = vld [vmem:[%s1 + $0x5c] sm:$0xf]
      %v304 = vld [vmem:[%s1 + $0x60] sm:$0xf]
      %v305 = vld [vmem:[%s1 + $0x64] sm:$0xf]
      %v306 = vld [vmem:[%s1 + $0x68] sm:$0xf]
      %v307 = vld [vmem:[%s1 + $0x6c] sm:$0xf]
      %v308 = vld [vmem:[%s1 + $0x70] sm:$0xf]
      %v309 = vld [vmem:[%s1 + $0x74] sm:$0xf]
      %v310 = vld [vmem:[%s1 + $0x78] sm:$0xf]
      %v311 = vld [vmem:[%s1 + $0x7c] sm:$0xf]
      %v312 = vld [vmem:[%s1 + $0x80] sm:$0xf]
      %v313 = vld [vmem:[%s1 + $0x84] sm:$0xf]
      %v314 = vld [vmem:[%s1 + $0x88] sm:$0xf]
      %v315 = vld [vmem:[%s1 + $0x8c] sm:$0xf]
      %v316 = vld [vmem:[%s1 + $0x90] sm:$0xf]
      %v317 = vld [vmem:[%s1 + $0x94] sm:$0xf]
      %v318 = vld [vmem:[%s1 + $0x98] sm:$0xf]
      %v319 = vld [vmem:[%s1 + $0x9c] sm:$0xf]
      %v320 = vld [vmem:[%s1 + $0xa0] sm:$0xf]
      %v321 = vld [vmem:[%s1 + $0xa4] sm:$0xf]
      %v322 = vld [vmem:[%s1 + $0xa8] sm:$0xf]
      %v323 = vld [vmem:[%s1 + $0xac] sm:$0xf]
      %v324 = vld [vmem:[%s1 + $0xb0] sm:$0xf]
      %v325 = vld [vmem:[%s1 + $0xb4] sm:$0xf]
      %v326 = vld [vmem:[%s1 + $0xb8] sm:$0xf]
      %v327 = vld [vmem:[%s1 + $0xbc] sm:$0xf]
      %v328 = vld [vmem:[%s1 + $0xc0] sm:$0xf]
      %v329 = vld [vmem:[%s1 + $0xc4] sm:$0xf]
      %v330 = vld [vmem:[%s1 + $0xc8] sm:$0xf]
      %v331 = vld [vmem:[%s1 + $0xcc] sm:$0xf]
      %v332 = vld [vmem:[%s1 + $0xd0] sm:$0xf]
      %v333 = vld [vmem:[%s1 + $0xd4] sm:$0xf]
      %v334 = vld [vmem:[%s1 + $0xd8] sm:$0xf]
      %v335 = vld [vmem:[%s1 + $0xdc] sm:$0xf]
      %v336 = vld [vmem:[%s1 + $0xe0] sm:$0xf]
      %v337 = vld [vmem:[%s1 + $0xe4] sm:$0xf]
      %v338 = vld [vmem:[%s1 + $0xe8] sm:$0xf]
      %v339 = vld [vmem:[%s1 + $0xec] sm:$0xf]
      %v340 = vld [vmem:[%s1 + $0xf0] sm:$0xf]
      %v341 = vld [vmem:[%s1 + $0xf4] sm:$0xf]
      %v342 = vld [vmem:[%s1 + $0xf8] sm:$0xf]
      %v343 = vld [vmem:[%s1 + $0xfc] sm:$0xf]
      %v344 = vld [vmem:[%s2] sm:$0x1]
      %v346 = vlaneseq
      %v347 = vshrl.u32 %v346, 7
      %v348 = vsub.s32 0, %v347
      %v349 = vrot.slane %v344, %v348
      %v353 = vunpack.c.l.b16 %v278
      %v354 = vunpack.c.h.b16 %v278
      %v355 = vunpack.c.l.b16 %v279
      %v356 = vunpack.c.h.b16 %v279
      %v357 = vpack.c.b16 %v353, %v353
      %v358 = vpack.c.b16 %v354, %v354
      %v359 = vpack.c.b16 %v355, %v355
      %v360 = vpack.c.b16 %v356, %v356
      %v429 = vunpack.c.l.b16 %v280
      %v430 = vunpack.c.l.b16 %v281
      %v431 = vunpack.c.l.b16 %v282
      %v432 = vunpack.c.l.b16 %v283
      %v433 = vunpack.c.l.b16 %v284
      %v434 = vunpack.c.l.b16 %v285
      %v435 = vunpack.c.l.b16 %v286
      %v436 = vunpack.c.l.b16 %v287
      %v437 = vunpack.c.l.b16 %v288
      %v438 = vunpack.c.l.b16 %v289
      %v439 = vunpack.c.l.b16 %v290
      %v440 = vunpack.c.l.b16 %v291
      %v441 = vunpack.c.l.b16 %v292
      %v442 = vunpack.c.l.b16 %v293
      %v443 = vunpack.c.l.b16 %v294
      %v444 = vunpack.c.l.b16 %v295
      %v445 = vunpack.c.l.b16 %v296
      %v446 = vunpack.c.l.b16 %v297
      %v447 = vunpack.c.l.b16 %v298
      %v448 = vunpack.c.l.b16 %v299
      %v449 = vunpack.c.l.b16 %v300
      %v450 = vunpack.c.l.b16 %v301
      %v451 = vunpack.c.l.b16 %v302
      %v452 = vunpack.c.l.b16 %v303
      %v453 = vunpack.c.l.b16 %v304
      %v454 = vunpack.c.l.b16 %v305
      %v455 = vunpack.c.l.b16 %v306
      %v456 = vunpack.c.l.b16 %v307
      %v457 = vunpack.c.l.b16 %v308
      %v458 = vunpack.c.l.b16 %v309
      %v459 = vunpack.c.l.b16 %v310
      %v460 = vunpack.c.l.b16 %v311
      %v461 = vunpack.c.l.b16 %v312
      %v462 = vunpack.c.l.b16 %v313
      %v463 = vunpack.c.l.b16 %v314
      %v464 = vunpack.c.l.b16 %v315
      %v465 = vunpack.c.l.b16 %v316
      %v466 = vunpack.c.l.b16 %v317
      %v467 = vunpack.c.l.b16 %v318
      %v468 = vunpack.c.l.b16 %v319
      %v469 = vunpack.c.l.b16 %v320
      %v470 = vunpack.c.l.b16 %v321
      %v471 = vunpack.c.l.b16 %v322
      %v472 = vunpack.c.l.b16 %v323
      %v473 = vunpack.c.l.b16 %v324
      %v474 = vunpack.c.l.b16 %v325
      %v475 = vunpack.c.l.b16 %v326
      %v476 = vunpack.c.l.b16 %v327
      %v477 = vunpack.c.l.b16 %v328
      %v478 = vunpack.c.l.b16 %v329
      %v479 = vunpack.c.l.b16 %v330
      %v480 = vunpack.c.l.b16 %v331
      %v481 = vunpack.c.l.b16 %v332
      %v482 = vunpack.c.l.b16 %v333
      %v483 = vunpack.c.l.b16 %v334
      %v484 = vunpack.c.l.b16 %v335
      %v485 = vunpack.c.l.b16 %v336
      %v486 = vunpack.c.l.b16 %v337
      %v487 = vunpack.c.l.b16 %v338
      %v488 = vunpack.c.l.b16 %v339
      %v489 = vunpack.c.l.b16 %v340
      %v490 = vunpack.c.l.b16 %v341
      %v491 = vunpack.c.l.b16 %v342
      %v492 = vunpack.c.l.b16 %v343
      %v493 = vpack.c.b16 %v430, %v429
      %v494 = vpack.c.b16 %v432, %v431
      %v495 = vpack.c.b16 %v434, %v433
      %v496 = vpack.c.b16 %v436, %v435
      %v497 = vpack.c.b16 %v438, %v437
      %v498 = vpack.c.b16 %v440, %v439
      %v499 = vpack.c.b16 %v442, %v441
      %v500 = vpack.c.b16 %v444, %v443
      %v501 = vpack.c.b16 %v446, %v445
      %v502 = vpack.c.b16 %v448, %v447
      %v503 = vpack.c.b16 %v450, %v449
      %v504 = vpack.c.b16 %v452, %v451
      %v505 = vpack.c.b16 %v454, %v453
      %v506 = vpack.c.b16 %v456, %v455
      %v507 = vpack.c.b16 %v458, %v457
      %v508 = vpack.c.b16 %v460, %v459
      %v509 = vpack.c.b16 %v462, %v461
      %v510 = vpack.c.b16 %v464, %v463
      %v511 = vpack.c.b16 %v466, %v465
      %v512 = vpack.c.b16 %v468, %v467
      %v513 = vpack.c.b16 %v470, %v469
      %v514 = vpack.c.b16 %v472, %v471
      %v515 = vpack.c.b16 %v474, %v473
      %v516 = vpack.c.b16 %v476, %v475
      %v517 = vpack.c.b16 %v478, %v477
      %v518 = vpack.c.b16 %v480, %v479
      %v519 = vpack.c.b16 %v482, %v481
      %v520 = vpack.c.b16 %v484, %v483
      %v521 = vpack.c.b16 %v486, %v485
      %v522 = vpack.c.b16 %v488, %v487
      %v523 = vpack.c.b16 %v490, %v489
      %v524 = vpack.c.b16 %v492, %v491
      %557 = vmatprep.subr.bf16.mxu0 0
      %558 = vmatpush1.bf16.msra.mxu0 %v500
      %559 = vmatprep.subr.bf16.mxu0 0
      %560 = vmatpush1.bf16.msra.mxu0 %v499
      %561 = vmatprep.subr.bf16.mxu0 0
      %562 = vmatpush1.bf16.msra.mxu0 %v498
      %563 = vmatprep.subr.bf16.mxu0 0
      %564 = vmatpush1.bf16.msra.mxu0 %v497
      %565 = vmatprep.subr.bf16.mxu0 0
      %566 = vmatpush1.bf16.msra.mxu0 %v496
      %567 = vmatprep.subr.bf16.mxu0 0
      %568 = vmatpush1.bf16.msra.mxu0 %v495
      %569 = vmatprep.subr.bf16.mxu0 0
      %570 = vmatpush1.bf16.msra.mxu0 %v494
      %571 = vmatprep.subr.bf16.mxu0 0
      %572 = vmatpush1.bf16.msra.mxu0 %v493
      %573 = vmatprep.subr.bf16.mxu0 0
      %574 = vmatpush2.bf16.msra.mxu0 %v508
      %575 = vmatprep.subr.bf16.mxu0 0
      %576 = vmatpush2.bf16.msra.mxu0 %v507
      %577 = vmatprep.subr.bf16.mxu0 0
      %578 = vmatpush2.bf16.msra.mxu0 %v506
      %579 = vmatprep.subr.bf16.mxu0 0
      %580 = vmatpush2.bf16.msra.mxu0 %v505
      %581 = vmatprep.subr.bf16.mxu0 0
      %582 = vmatpush2.bf16.msra.mxu0 %v504
      %583 = vmatprep.subr.bf16.mxu0 0
      %584 = vmatpush2.bf16.msra.mxu0 %v503
      %585 = vmatprep.subr.bf16.mxu0 0
      %586 = vmatpush2.bf16.msra.mxu0 %v502
      %587 = vmatprep.subr.bf16.mxu0 0
      %588 = vmatpush2.bf16.msra.mxu0 %v501
      %589 = vmatprep.mubr.bf16.mxu0 %v358
      %590 = vmatmul.mubr.bf16.gmra.mxu0 %v357
      %v591 = vpop.f32.mrf.mxu0
      %v592 = vadd.f32 %v349, %v591
      %v593 = vpop.f32.mrf.mxu0
      %v594 = vpop.f32.mrf.mxu0
      %v595 = vpop.f32.mrf.mxu0
      %596 = vdwg.mxu0
      %597 = vmatprep.subr.bf16.mxu0 0
      %598 = vmatpush1.bf16.msra.mxu0 %v516
      %599 = vmatprep.subr.bf16.mxu0 0
      %600 = vmatpush1.bf16.msra.mxu0 %v515
      %601 = vmatprep.subr.bf16.mxu0 0
      %602 = vmatpush1.bf16.msra.mxu0 %v514
      %603 = vmatprep.subr.bf16.mxu0 0
      %604 = vmatpush1.bf16.msra.mxu0 %v513
      %605 = vmatprep.subr.bf16.mxu0 0
      %606 = vmatpush1.bf16.msra.mxu0 %v512
      %607 = vmatprep.subr.bf16.mxu0 0
      %608 = vmatpush1.bf16.msra.mxu0 %v511
      %609 = vmatprep.subr.bf16.mxu0 0
      %610 = vmatpush1.bf16.msra.mxu0 %v510
      %611 = vmatprep.subr.bf16.mxu0 0
      %612 = vmatpush1.bf16.msra.mxu0 %v509
      %613 = vmatprep.subr.bf16.mxu0 0
      %614 = vmatpush2.bf16.msra.mxu0 %v524
      %615 = vmatprep.subr.bf16.mxu0 0
      %616 = vmatpush2.bf16.msra.mxu0 %v523
      %617 = vmatprep.subr.bf16.mxu0 0
      %618 = vmatpush2.bf16.msra.mxu0 %v522
      %619 = vmatprep.subr.bf16.mxu0 0
      %620 = vmatpush2.bf16.msra.mxu0 %v521
      %621 = vmatprep.subr.bf16.mxu0 0
      %622 = vmatpush2.bf16.msra.mxu0 %v520
      %623 = vmatprep.subr.bf16.mxu0 0
      %624 = vmatpush2.bf16.msra.mxu0 %v519
      %625 = vmatprep.subr.bf16.mxu0 0
      %626 = vmatpush2.bf16.msra.mxu0 %v518
      %627 = vmatprep.subr.bf16.mxu0 0
      %628 = vmatpush2.bf16.msra.mxu0 %v517
      %629 = vmatprep.mubr.bf16.mxu0 %v360
      %630 = vmatmul.mubr.bf16.gmra.mxu0 %v359
      %v631 = vpop.f32.mrf.mxu0
      %v632 = vadd.f32 %v592, %v631
      %v633 = vpop.f32.mrf.mxu0
      %v634 = vpop.f32.mrf.mxu0
      %v635 = vpop.f32.mrf.mxu0
      %636 = vdwg.mxu0
      %v637 = vmax.f32 %v632, 0.0
      %v638 = vpack.c.bf16 %v637, %v637
      %v639 = vld [vmem:[%s3] sm:$0xf]
      %v640 = vld [vmem:[%s3 + $0x4] sm:$0xf]
      %v641 = vld [vmem:[%s3 + $0x8] sm:$0xf]
      %v642 = vld [vmem:[%s3 + $0xc] sm:$0xf]
      %v643 = vld [vmem:[%s3 + $0x10] sm:$0xf]
      %v644 = vld [vmem:[%s3 + $0x14] sm:$0xf]
      %v645 = vld [vmem:[%s3 + $0x18] sm:$0xf]
      %v646 = vld [vmem:[%s3 + $0x1c] sm:$0xf]
      %v647 = vld [vmem:[%s4] sm:$0x1]
      %v649 = vlaneseq
      %v650 = vshrl.u32 %v649, 7
      %v651 = vsub.s32 0, %v650
      %v652 = vrot.slane %v647, %v651
      %v662 = vunpack.c.l.b16 %v639
      %v663 = vunpack.c.l.b16 %v640
      %v664 = vunpack.c.l.b16 %v641
      %v665 = vunpack.c.l.b16 %v642
      %v666 = vunpack.c.l.b16 %v643
      %v667 = vunpack.c.l.b16 %v644
      %v668 = vunpack.c.l.b16 %v645
      %v669 = vunpack.c.l.b16 %v646
      %v670 = vpack.c.b16 %v663, %v662
      %v671 = vpack.c.b16 %v665, %v664
      %v672 = vpack.c.b16 %v667, %v666
      %v673 = vpack.c.b16 %v669, %v668
      %vm678 = vcmask 523264
      %v680 = vsel %vm678, %v638, 0
      %682 = vmatprep.subr.bf16.mxu0 0
      %683 = vmatpush1.bf16.msra.mxu0 0
      %684 = vmatprep.subr.bf16.mxu0 0
      %685 = vmatpush1.bf16.msra.mxu0 0
      %686 = vmatprep.subr.bf16.mxu0 0
      %687 = vmatpush1.bf16.msra.mxu0 0
      %688 = vmatprep.subr.bf16.mxu0 0
      %689 = vmatpush1.bf16.msra.mxu0 0
      %690 = vmatprep.subr.bf16.mxu0 0
      %691 = vmatpush1.bf16.msra.mxu0 %v673
      %692 = vmatprep.subr.bf16.mxu0 0
      %693 = vmatpush1.bf16.msra.mxu0 %v672
      %694 = vmatprep.subr.bf16.mxu0 0
      %695 = vmatpush1.bf16.msra.mxu0 %v671
      %696 = vmatprep.subr.bf16.mxu0 0
      %697 = vmatpush1.bf16.msra.mxu0 %v670
      %698 = vmatprep.subr.bf16.mxu0 0
      %699 = vmatpush2.bf16.msra.mxu0 0
      %700 = vmatprep.subr.bf16.mxu0 0
      %701 = vmatpush2.bf16.msra.mxu0 0
      %702 = vmatprep.subr.bf16.mxu0 0
      %703 = vmatpush2.bf16.msra.mxu0 0
      %704 = vmatprep.subr.bf16.mxu0 0
      %705 = vmatpush2.bf16.msra.mxu0 0
      %706 = vmatprep.subr.bf16.mxu0 0
      %707 = vmatpush2.bf16.msra.mxu0 0
      %708 = vmatprep.subr.bf16.mxu0 0
      %709 = vmatpush2.bf16.msra.mxu0 0
      %710 = vmatprep.subr.bf16.mxu0 0
      %711 = vmatpush2.bf16.msra.mxu0 0
      %712 = vmatprep.subr.bf16.mxu0 0
      %713 = vmatpush2.bf16.msra.mxu0 0
      %714 = vmatprep.mubr.bf16.mxu0 0
      %715 = vmatmul.mubr.bf16.gmra.mxu0 %v680
      %v716 = vpop.f32.mrf.mxu0
      %v717 = vadd.f32 %v652, %v716
      %v718 = vpop.f32.mrf.mxu0
      %v719 = vpop.f32.mrf.mxu0
      %v720 = vpop.f32.mrf.mxu0
      %721 = vdwg.mxu0
      %v722 = vmax.f32 %v717, 0.0
      %v723 = vpack.c.bf16 %v722, %v722
      %v724 = vld [vmem:[%s5] sm:$0xf]
      %v725 = vld [vmem:[%s5 + $0x4] sm:$0xf]
      %v726 = vld [vmem:[%s5 + $0x8] sm:$0xf]
      %v727 = vld [vmem:[%s5 + $0xc] sm:$0xf]
      %v728 = vld [vmem:[%s5 + $0x10] sm:$0xf]
      %v729 = vld [vmem:[%s5 + $0x14] sm:$0xf]
      %v730 = vld [vmem:[%s5 + $0x18] sm:$0xf]
      %v731 = vld [vmem:[%s5 + $0x1c] sm:$0xf]
      %v732 = vld [vmem:[%s6] sm:$0x1]
      %v734 = vlaneseq
      %v735 = vshrl.u32 %v734, 7
      %v736 = vsub.s32 0, %v735
      %v737 = vrot.slane %v732, %v736
      %v747 = vunpack.c.l.b16 %v724
      %v748 = vunpack.c.l.b16 %v725
      %v749 = vunpack.c.l.b16 %v726
      %v750 = vunpack.c.l.b16 %v727
      %v751 = vunpack.c.l.b16 %v728
      %v752 = vunpack.c.l.b16 %v729
      %v753 = vunpack.c.l.b16 %v730
      %v754 = vunpack.c.l.b16 %v731
      %v755 = vpack.c.b16 %v748, %v747
      %v756 = vpack.c.b16 %v750, %v749
      %v757 = vpack.c.b16 %v752, %v751
      %v758 = vpack.c.b16 %v754, %v753
      %v764 = vsel %vm678, %v723, 0
      %766 = vmatprep.subr.bf16.mxu0 0
      %767 = vmatpush1.bf16.msra.mxu0 0
      %768 = vmatprep.subr.bf16.mxu0 0
      %769 = vmatpush1.bf16.msra.mxu0 0
      %770 = vmatprep.subr.bf16.mxu0 0
      %771 = vmatpush1.bf16.msra.mxu0 0
      %772 = vmatprep.subr.bf16.mxu0 0
      %773 = vmatpush1.bf16.msra.mxu0 0
      %774 = vmatprep.subr.bf16.mxu0 0
      %775 = vmatpush1.bf16.msra.mxu0 %v758
      %776 = vmatprep.subr.bf16.mxu0 0
      %777 = vmatpush1.bf16.msra.mxu0 %v757
      %778 = vmatprep.subr.bf16.mxu0 0
      %779 = vmatpush1.bf16.msra.mxu0 %v756
      %780 = vmatprep.subr.bf16.mxu0 0
      %781 = vmatpush1.bf16.msra.mxu0 %v755
      %782 = vmatprep.subr.bf16.mxu0 0
      %783 = vmatpush2.bf16.msra.mxu0 0
      %784 = vmatprep.subr.bf16.mxu0 0
      %785 = vmatpush2.bf16.msra.mxu0 0
      %786 = vmatprep.subr.bf16.mxu0 0
      %787 = vmatpush2.bf16.msra.mxu0 0
      %788 = vmatprep.subr.bf16.mxu0 0
      %789 = vmatpush2.bf16.msra.mxu0 0
      %790 = vmatprep.subr.bf16.mxu0 0
      %791 = vmatpush2.bf16.msra.mxu0 0
      %792 = vmatprep.subr.bf16.mxu0 0
      %793 = vmatpush2.bf16.msra.mxu0 0
      %794 = vmatprep.subr.bf16.mxu0 0
      %795 = vmatpush2.bf16.msra.mxu0 0
      %796 = vmatprep.subr.bf16.mxu0 0
      %797 = vmatpush2.bf16.msra.mxu0 0
      %798 = vmatprep.mubr.bf16.mxu0 0
      %799 = vmatmul.mubr.bf16.gmra.mxu0 %v764
      %v800 = vpop.f32.mrf.mxu0
      %v801 = vadd.f32 %v737, %v800
      %v802 = vpop.f32.mrf.mxu0
      %v803 = vpop.f32.mrf.mxu0
      %v804 = vpop.f32.mrf.mxu0
      %805 = vdwg.mxu0
      %vm806 = vcmask 302080
      %807 = vst.msk [vmem:[%s276] sm:$0xff] %vm806, %v801
      %p808 = scmp.lt.s32.totalorder %s18, 1
      %s809 = scalar_select %p808, %s18, 1
      %s810 = smul.addr %s809, 8
      %s811 = scalar_lea.vmem %s7, %s810
      // Predicated region
      $region49: #{_lambda_.7} parent=47 // pred_check
        %p812 = pneg %p188
      $region50: #{_lambda_.7} parent=47 // pred_check_branch
        %814 = sbr.rel (%p812) target = $region52
      $region51: #{_lambda_.7} parent=47 // pred_region
        _
      $region52: #{_lambda_.7} parent=47 // pred_fallthru
        _
    $region48: #{_lambda_.7} parent=5 // pred_fallthru
      _
    %p815 = scmp.le.s32.totalorder 2, %s13
    // Predicated region
    $region53: #{_lambda_.7} parent=5 // pred_check
      %p816 = pneg %p815
    $region54: #{_lambda_.7} parent=5 // pred_check_branch
      %818 = sbr.rel (%p816) target = $region56
    $region55: #{_lambda_.7} parent=5 // pred_region
      %s819 = ssub.s32 %s13, 2
      // Predicated region
      $region57: #{_lambda_.7} parent=55 // pred_check
        %p820 = pneg %p194
      $region58: #{_lambda_.7} parent=55 // pred_check_branch
        %822 = sbr.rel (%p820) target = $region60
      $region59: #{_lambda_.7} parent=55 // pred_region
        %p823 = scmp.lt.s32.totalorder %s19, 1
        %s824 = scalar_select %p823, %s19, 1
        %s825 = smul.addr %s824, 8
        %s826 = scalar_lea.vmem %s7, %s825
      $region60: #{_lambda_.7} parent=55 // pred_fallthru
        _
    $region56: #{_lambda_.7} parent=5 // pred_fallthru
      _
  $region6: #{_lambda_.7} parent=0 // loop_footer
    %s17 = sadd.s32 1, %s13
  $region7: #{_lambda_.7} parent=0 // loop_footer_branch
    %12 = sbr.rel target = $region3
  $region8: #{_lambda_.7} parent=0 // loop_exit
    _

</llo_original>
